<compile_context>
chip_gen: v6e
topology: v6e:2x2x1
jax: 0.10.0
libtpu: 0.0.40
codegen_flags: <defaults>
</compile_context>

<pallas_src>
import jax
import jax.numpy as jnp
from jax import lax
from jax.experimental import pallas as pl
from jax.experimental.pallas import tpu as pltpu

# Kept for bitwise agreement with the f32 reference; MXU has large slack at these
# sizes so the cost of 'highest' is negligible here.
jax.config.update("jax_default_matmul_precision", "highest")

# ----- problem sizes (small, consistent with the module) ------------------------
B = 2
L = 8                     # seq_len
D_MODEL = 32              # input_dim == d_model -> identity input_projection + residual
D_STATE = 16
D_CONV = 4
EXPAND = 2
D_INNER = EXPAND * D_MODEL           # 64
DT_RANK = max(1, -(-D_MODEL // 16))  # ceil(d_model / 16) = 2
LN_EPS = 1e-5
BL = B * L                           # collapsed batch*seq rows


def _softplus(x):
    # numerically stable softplus (matches F.softplus semantics)
    return jnp.maximum(x, 0.0) + jnp.log(1.0 + jnp.exp(-jnp.abs(x)))


# ----- Pallas kernel: whole problem in one grid step -----------------------------
def _target_mamba_kernel(
    x_ref,        # (BL, D_MODEL)    raw input, batch collapsed into rows
    w_in_ref,     # (D_MODEL, 2*D_INNER)  [w_in_x | w_in_res]
    conv_w_ref,   # (D_CONV, D_INNER)
    w_dbc_ref,    # (D_INNER, D_INNER + 2*D_STATE)  [w_x_dt@w_dt | w_x_b | w_x_c]
    neg_a_ref,    # (D_STATE, D_INNER)  = -exp(A_log).T
    w_out_ref,    # (D_INNER, D_MODEL)  = w_out @ w_oproj
    vdm_ref,      # (3, D_MODEL)  rows: ln_g, ln_b, b_oproj
    vdi_ref,      # (3, D_INNER)  rows: conv_b, b_dt, d_param
    out_ref,      # (BL, D_MODEL)
):
    x = x_ref[...]                                   # (BL, D_MODEL) — also the residual
    ln_g = vdm_ref[0:1, :]
    ln_b = vdm_ref[1:2, :]
    b_oproj = vdm_ref[2:3, :]
    conv_b = vdi_ref[0:1, :]
    b_dt = vdi_ref[1:2, :]
    d_param = vdi_ref[2:3, :]

    # input_projection: Identity (input_dim == d_model)

    # LayerNorm over the feature dim (row-wise, safe across collapsed batch)
    mu = jnp.mean(x, axis=-1, keepdims=True)
    var = jnp.mean((x - mu) ** 2, axis=-1, keepdims=True)
    xn = (x - mu) * lax.rsqrt(var + LN_EPS) * ln_g + ln_b

    # Fused Mamba in_proj: one lane-dense (BL, 128) matmul, split with static slices
    xzres = jnp.dot(xn, w_in_ref[...], preferred_element_type=jnp.float32)
    xz = xzres[:, :D_INNER]                          # x-branch
    res = xzres[:, D_INNER:]                         # gate branch

    # Causal depthwise conv1d (kernel=D_CONV, left zero-pad, crop to L), batch-aware.
    # Implemented with block-diagonal shift matrices on the MXU (which has slack):
    # entries crossing a sequence boundary are masked out, matching zero padding.
    conv_w = conv_w_ref[...]
    row = lax.broadcasted_iota(jnp.int32, (BL, BL), 0)
    col = lax.broadcasted_iota(jnp.int32, (BL, BL), 1)
    row_in_seq = jnp.bitwise_and(row, L - 1)         # row % L (L is a power of two)
    conv = jnp.broadcast_to(conv_b, (BL, D_INNER))
    for k in range(D_CONV):
        shift = D_CONV - 1 - k
        if shift == 0:
            x_shift = xz                             # identity tap: skip the matmul
        else:
            s_mat = jnp.where((row - col == shift) & (row_in_seq >= shift), 1.0, 0.0)
            x_shift = jnp.dot(s_mat, xz, preferred_element_type=jnp.float32)
        conv = conv + x_shift * conv_w[k : k + 1, :]
    xc = conv * jax.nn.sigmoid(conv)                 # SiLU

    # Fused SSM projections: single matmul -> [dt_full(64) | B(16) | C(16)]
    dbc = jnp.dot(xc, w_dbc_ref[...], preferred_element_type=jnp.float32)
    delta = _softplus(dbc[:, :D_INNER] + b_dt)       # (BL, D_INNER)
    bcT = dbc[:, D_INNER:].T                         # (2*D_STATE, BL)
    bT = bcT[:D_STATE, :]                            # (D_STATE, BL)
    cT = bcT[D_STATE:, :]                            # (D_STATE, BL)

    # Selective scan with state kept as (D_STATE, D_INNER); per-step exp; state
    # resets at each sequence boundary of the collapsed batch.
    neg_a = neg_a_ref[...]                           # (D_STATE, D_INNER)
    dxc = delta * xc                                 # (BL, D_INNER)
    row1 = lax.broadcasted_iota(jnp.int32, (BL, 1), 0)
    y = jnp.zeros((BL, D_INNER), jnp.float32)
    for b_i in range(B):
        h = jnp.zeros((D_STATE, D_INNER), jnp.float32)
        for tt in range(L):
            t = b_i * L + tt
            da = jnp.exp(delta[t : t + 1, :] * neg_a)                  # (D_STATE, D_INNER)
            h = da * h + bT[:, t : t + 1] * dxc[t : t + 1, :]          # (D_STATE, D_INNER)
            y_row = jnp.sum(h * cT[:, t : t + 1], axis=0, keepdims=True)  # (1, D_INNER)
            y = y + jnp.where(row1 == t, 1.0, 0.0) * y_row

    # Skip term, gate, fused (out_proj @ output_projection), bias, residual
    y = y + xc * d_param
    y = y * (res * jax.nn.sigmoid(res))
    out = jnp.dot(y, w_out_ref[...], preferred_element_type=jnp.float32)
    out_ref[...] = out + b_oproj + x


def target_mamba_block(x, params):
    b, l, d = x.shape
    assert (b, l, d) == (B, L, D_MODEL)

    # Inference-time weight fusion / packing (exact up to f32 rounding)
    w_in = jnp.concatenate([params["w_in_x"], params["w_in_res"]], axis=1)        # (32, 128)
    w_dbc = jnp.concatenate(
        [params["w_x_dt"] @ params["w_dt"], params["w_x_b"], params["w_x_c"]], axis=1
    )                                                                              # (64, 96)
    neg_a = -jnp.exp(params["a_log"]).T                                            # (16, 64)
    w_out_f = params["w_out"] @ params["w_oproj"]                                  # (64, 32)
    vdm = jnp.concatenate([params["ln_g"], params["ln_b"], params["b_oproj"]], axis=0)   # (3, 32)
    vdi = jnp.concatenate([params["conv_b"], params["b_dt"], params["d_param"]], axis=0)  # (3, 64)

    inputs = [
        x.reshape(BL, D_MODEL),
        w_in, params["conv_w"], w_dbc, neg_a, w_out_f, vdm, vdi,
    ]
    in_specs = [pl.BlockSpec(a.shape, lambda i: (0, 0)) for a in inputs]

    out = pl.pallas_call(
        _target_mamba_kernel,
        out_shape=jax.ShapeDtypeStruct((BL, D_MODEL), jnp.float32),
        grid=(1,),
        in_specs=in_specs,
        out_specs=pl.BlockSpec((BL, D_MODEL), lambda i: (0, 0)),
        compiler_params=pltpu.CompilerParams(dimension_semantics=("arbitrary",)),
    )(*inputs)
    return out.reshape(b, l, d)


# ----- deterministic parameter init (synthetic, mirrors __init__ shapes) ---------
def init_params(key):
    keys = jax.random.split(key, 12)

    def nrm(k, shape, scale):
        return (scale * jax.random.normal(k, shape)).astype(jnp.float32)

    a_log = jnp.log(
        jnp.broadcast_to(
            jnp.arange(1, D_STATE + 1, dtype=jnp.float32)[None, :], (D_INNER, D_STATE)
        )
    )
    return dict(
        ln_g=jnp.ones((1, D_MODEL), jnp.float32),
        ln_b=jnp.zeros((1, D_MODEL), jnp.float32),
        w_in_x=nrm(keys[0], (D_MODEL, D_INNER), D_MODEL ** -0.5),
        w_in_res=nrm(keys[1], (D_MODEL, D_INNER), D_MODEL ** -0.5),
        conv_w=nrm(keys[2], (D_CONV, D_INNER), D_CONV ** -0.5),
        conv_b=nrm(keys[3], (1, D_INNER), 0.02),
        w_x_dt=nrm(keys[4], (D_INNER, DT_RANK), D_INNER ** -0.5),
        w_x_b=nrm(keys[5], (D_INNER, D_STATE), D_INNER ** -0.5),
        w_x_c=nrm(keys[6], (D_INNER, D_STATE), D_INNER ** -0.5),
        w_dt=nrm(keys[7], (DT_RANK, D_INNER), DT_RANK ** -0.5),
        b_dt=nrm(keys[8], (1, D_INNER), 0.02),
        a_log=a_log,
        d_param=jnp.ones((1, D_INNER), jnp.float32),
        w_out=nrm(keys[9], (D_INNER, D_MODEL), D_INNER ** -0.5),
        w_oproj=nrm(keys[10], (D_MODEL, D_MODEL), D_MODEL ** -0.5),
        b_oproj=nrm(keys[11], (1, D_MODEL), 0.02),
    )


# ----- pure-JAX reference (unfused, for correctness check) -----------------------
def reference_forward(x, p):
    def one(xb):                                    # (L, D_MODEL)
        residual = xb
        mu = xb.mean(-1, keepdims=True)
        var = ((xb - mu) ** 2).mean(-1, keepdims=True)
        xn = (xb - mu) / jnp.sqrt(var + LN_EPS) * p["ln_g"][0] + p["ln_b"][0]
        xz = xn @ p["w_in_x"]
        res = xn @ p["w_in_res"]
        xz_pad = jnp.pad(xz, ((D_CONV - 1, 0), (0, 0)))
        conv = p["conv_b"][0] + sum(
            p["conv_w"][k][None, :] * xz_pad[k : k + L, :] for k in range(D_CONV)
        )
        xc = conv * jax.nn.sigmoid(conv)
        a_mat = -jnp.exp(p["a_log"])
        b_mat = xc @ p["w_x_b"]
        c_mat = xc @ p["w_x_c"]
        delta = _softplus(xc @ p["w_x_dt"] @ p["w_dt"] + p["b_dt"][0])
        d_a = jnp.exp(delta[:, :, None] * a_mat[None, :, :])
        d_bu = (delta * xc)[:, :, None] * b_mat[:, None, :]

        def step(h, inp):
            da_t, dbu_t, c_t = inp
            h = da_t * h + dbu_t
            return h, (h * c_t[None, :]).sum(-1)

        _, ys = lax.scan(step, jnp.zeros((D_INNER, D_STATE), jnp.float32), (d_a, d_bu, c_mat))
        y = ys + xc * p["d_param"][0]
        y = y * (res * jax.nn.sigmoid(res))
        out = (y @ p["w_out"]) @ p["w_oproj"] + p["b_oproj"][0]
        return out + residual

    return jax.vmap(one)(x)


if __name__ == "__main__":
    k_x, k_p = jax.random.split(jax.random.PRNGKey(0))
    x = jax.random.normal(k_x, (B, L, D_MODEL), dtype=jnp.float32)
    params = init_params(k_p)

    out = jax.jit(target_mamba_block)(x, params)
    out = jax.block_until_ready(out)

    ref = jax.block_until_ready(reference_forward(x, params))
    assert out.shape == (B, L, D_MODEL)
    assert jnp.allclose(out, ref, rtol=2e-3, atol=2e-3), (
        f"mismatch: max abs err {jnp.max(jnp.abs(out - ref))}"
    )
    print("KERNEL_OK")
</pallas_src>

<mosaic_0001>
module attributes {stable_mosaic.version = 11 : i64} {
  func.func @_target_mamba_kernel(%arg0: i32, %arg1: memref<16x32xf32, #tpu.memory_space<vmem>>, %arg2: memref<32x128xf32, #tpu.memory_space<vmem>>, %arg3: memref<4x64xf32, #tpu.memory_space<vmem>>, %arg4: memref<64x96xf32, #tpu.memory_space<vmem>>, %arg5: memref<16x64xf32, #tpu.memory_space<vmem>>, %arg6: memref<64x32xf32, #tpu.memory_space<vmem>>, %arg7: memref<3x32xf32, #tpu.memory_space<vmem>>, %arg8: memref<3x64xf32, #tpu.memory_space<vmem>>, %arg9: memref<16x32xf32, #tpu.memory_space<vmem>>) attributes {dimension_semantics = [#tpu.dimension_semantics<arbitrary>], iteration_bounds = array<i64: 1>, scalar_prefetch = 0 : i64, scratch_operands = 0 : i64, tpu.core_type = #tpu.core_type<tc>, window_params = [{pipeline_mode = #tpu.pipeline_mode<synchronous>, transform_indices = @transform_0, window_bounds = array<i64: 16, 32>}, {pipeline_mode = #tpu.pipeline_mode<synchronous>, transform_indices = @transform_1, window_bounds = array<i64: 32, 128>}, {pipeline_mode = #tpu.pipeline_mode<synchronous>, transform_indices = @transform_2, window_bounds = array<i64: 4, 64>}, {pipeline_mode = #tpu.pipeline_mode<synchronous>, transform_indices = @transform_3, window_bounds = array<i64: 64, 96>}, {pipeline_mode = #tpu.pipeline_mode<synchronous>, transform_indices = @transform_4, window_bounds = array<i64: 16, 64>}, {pipeline_mode = #tpu.pipeline_mode<synchronous>, transform_indices = @transform_5, window_bounds = array<i64: 64, 32>}, {pipeline_mode = #tpu.pipeline_mode<synchronous>, transform_indices = @transform_6, window_bounds = array<i64: 3, 32>}, {pipeline_mode = #tpu.pipeline_mode<synchronous>, transform_indices = @transform_7, window_bounds = array<i64: 3, 64>}, {pipeline_mode = #tpu.pipeline_mode<synchronous>, transform_indices = @transform_8, window_bounds = array<i64: 16, 32>}]} {
    %c0 = arith.constant 0 : index
    %c0_0 = arith.constant 0 : index
    %0 = vector.load %arg1[%c0, %c0_0] : memref<16x32xf32, #tpu.memory_space<vmem>>, vector<16x32xf32>
    %c0_1 = arith.constant 0 : index
    %c0_2 = arith.constant 0 : index
    %1 = vector.load %arg7[%c0_1, %c0_2] : memref<3x32xf32, #tpu.memory_space<vmem>>, vector<1x32xf32>
    %c1 = arith.constant 1 : index
    %c0_3 = arith.constant 0 : index
    %2 = vector.load %arg7[%c1, %c0_3] : memref<3x32xf32, #tpu.memory_space<vmem>>, vector<1x32xf32>
    %c2 = arith.constant 2 : index
    %c0_4 = arith.constant 0 : index
    %3 = vector.load %arg7[%c2, %c0_4] : memref<3x32xf32, #tpu.memory_space<vmem>>, vector<1x32xf32>
    %c0_5 = arith.constant 0 : index
    %c0_6 = arith.constant 0 : index
    %4 = vector.load %arg8[%c0_5, %c0_6] : memref<3x64xf32, #tpu.memory_space<vmem>>, vector<1x64xf32>
    %c1_7 = arith.constant 1 : index
    %c0_8 = arith.constant 0 : index
    %5 = vector.load %arg8[%c1_7, %c0_8] : memref<3x64xf32, #tpu.memory_space<vmem>>, vector<1x64xf32>
    %c2_9 = arith.constant 2 : index
    %c0_10 = arith.constant 0 : index
    %6 = vector.load %arg8[%c2_9, %c0_10] : memref<3x64xf32, #tpu.memory_space<vmem>>, vector<1x64xf32>
    %cst = arith.constant dense<0.000000e+00> : vector<16xf32>
    %7 = vector.multi_reduction <add>, %0, %cst [1] : vector<16x32xf32> to vector<16xf32>
    %8 = vector.shape_cast %7 : vector<16xf32> to vector<16x1xf32>
    %cst_11 = arith.constant 3.200000e+01 : f32
    %9 = vector.broadcast %cst_11 : f32 to vector<16x1xf32>
    %10 = arith.divf %8, %9 : vector<16x1xf32>
    %11 = vector.broadcast %10 : vector<16x1xf32> to vector<16x32xf32>
    %12 = arith.subf %0, %11 : vector<16x32xf32>
    %13 = arith.mulf %12, %12 : vector<16x32xf32>
    %cst_12 = arith.constant dense<0.000000e+00> : vector<16xf32>
    %14 = vector.multi_reduction <add>, %13, %cst_12 [1] : vector<16x32xf32> to vector<16xf32>
    %15 = vector.shape_cast %14 : vector<16xf32> to vector<16x1xf32>
    %cst_13 = arith.constant 3.200000e+01 : f32
    %16 = vector.broadcast %cst_13 : f32 to vector<16x1xf32>
    %17 = arith.divf %15, %16 : vector<16x1xf32>
    %18 = vector.broadcast %10 : vector<16x1xf32> to vector<16x32xf32>
    %19 = arith.subf %0, %18 : vector<16x32xf32>
    %cst_14 = arith.constant 9.99999974E-6 : f32
    %20 = vector.broadcast %cst_14 : f32 to vector<16x1xf32>
    %21 = arith.addf %17, %20 : vector<16x1xf32>
    %22 = math.rsqrt %21 : vector<16x1xf32>
    %23 = vector.broadcast %22 : vector<16x1xf32> to vector<16x32xf32>
    %24 = arith.mulf %19, %23 : vector<16x32xf32>
    %25 = vector.broadcast %1 : vector<1x32xf32> to vector<16x32xf32>
    %26 = arith.mulf %24, %25 : vector<16x32xf32>
    %27 = vector.broadcast %2 : vector<1x32xf32> to vector<16x32xf32>
    %28 = arith.addf %26, %27 : vector<16x32xf32>
    %c0_15 = arith.constant 0 : index
    %c0_16 = arith.constant 0 : index
    %29 = vector.load %arg2[%c0_15, %c0_16] : memref<32x128xf32, #tpu.memory_space<vmem>>, vector<32x128xf32>
    %cst_17 = arith.constant dense<0.000000e+00> : vector<16x128xf32>
    %30 = tpu.matmul %28, %29, %cst_17 {dimension_numbers = #tpu.dot_dimension_numbers<[1], [0], [0], [1], [0, 0, 1, 1], [], []>, precision = #tpu.contract_precision<fp32>} : vector<16x32xf32>, vector<32x128xf32>, vector<16x128xf32> -> vector<16x128xf32>
    %31 = vector.extract_strided_slice %30 {offsets = [0, 0], sizes = [16, 64], strides = [1, 1]} : vector<16x128xf32> to vector<16x64xf32>
    %32 = vector.extract_strided_slice %30 {offsets = [0, 64], sizes = [16, 64], strides = [1, 1]} : vector<16x128xf32> to vector<16x64xf32>
    %c0_18 = arith.constant 0 : index
    %c0_19 = arith.constant 0 : index
    %33 = vector.load %arg3[%c0_18, %c0_19] : memref<4x64xf32, #tpu.memory_space<vmem>>, vector<4x64xf32>
    %34 = tpu.iota {dimensions = array<i32: 0>} : vector<16x16xi32>
    %35 = tpu.iota {dimensions = array<i32: 1>} : vector<16x16xi32>
    %c7_i32 = arith.constant 7 : i32
    %36 = vector.broadcast %c7_i32 : i32 to vector<16x16xi32>
    %37 = arith.andi %34, %36 : vector<16x16xi32>
    %38 = vector.shape_cast %4 : vector<1x64xf32> to vector<1x64xf32>
    %39 = vector.broadcast %38 : vector<1x64xf32> to vector<16x64xf32>
    %40 = arith.subi %34, %35 : vector<16x16xi32>
    %c3_i32 = arith.constant 3 : i32
    %41 = vector.broadcast %c3_i32 : i32 to vector<16x16xi32>
    %42 = arith.cmpi eq, %40, %41 : vector<16x16xi32>
    %c3_i32_20 = arith.constant 3 : i32
    %43 = vector.broadcast %c3_i32_20 : i32 to vector<16x16xi32>
    %44 = arith.cmpi sge, %37, %43 : vector<16x16xi32>
    %45 = arith.andi %42, %44 : vector<16x16xi1>
    %cst_21 = arith.constant 1.000000e+00 : f32
    %cst_22 = arith.constant 0.000000e+00 : f32
    %46 = vector.broadcast %cst_21 : f32 to vector<16x16xf32>
    %47 = vector.broadcast %cst_22 : f32 to vector<16x16xf32>
    %48 = arith.select %45, %46, %47 : vector<16x16xi1>, vector<16x16xf32>
    %cst_23 = arith.constant dense<0.000000e+00> : vector<16x64xf32>
    %49 = tpu.matmul %48, %31, %cst_23 {dimension_numbers = #tpu.dot_dimension_numbers<[1], [0], [0], [1], [0, 0, 1, 1], [], []>, precision = #tpu.contract_precision<fp32>} : vector<16x16xf32>, vector<16x64xf32>, vector<16x64xf32> -> vector<16x64xf32>
    %50 = vector.extract_strided_slice %33 {offsets = [0, 0], sizes = [1, 64], strides = [1, 1]} : vector<4x64xf32> to vector<1x64xf32>
    %51 = vector.broadcast %50 : vector<1x64xf32> to vector<16x64xf32>
    %52 = arith.mulf %49, %51 : vector<16x64xf32>
    %53 = arith.addf %39, %52 : vector<16x64xf32>
    %54 = arith.subi %34, %35 : vector<16x16xi32>
    %c2_i32 = arith.constant 2 : i32
    %55 = vector.broadcast %c2_i32 : i32 to vector<16x16xi32>
    %56 = arith.cmpi eq, %54, %55 : vector<16x16xi32>
    %c2_i32_24 = arith.constant 2 : i32
    %57 = vector.broadcast %c2_i32_24 : i32 to vector<16x16xi32>
    %58 = arith.cmpi sge, %37, %57 : vector<16x16xi32>
    %59 = arith.andi %56, %58 : vector<16x16xi1>
    %cst_25 = arith.constant 1.000000e+00 : f32
    %cst_26 = arith.constant 0.000000e+00 : f32
    %60 = vector.broadcast %cst_25 : f32 to vector<16x16xf32>
    %61 = vector.broadcast %cst_26 : f32 to vector<16x16xf32>
    %62 = arith.select %59, %60, %61 : vector<16x16xi1>, vector<16x16xf32>
    %cst_27 = arith.constant dense<0.000000e+00> : vector<16x64xf32>
    %63 = tpu.matmul %62, %31, %cst_27 {dimension_numbers = #tpu.dot_dimension_numbers<[1], [0], [0], [1], [0, 0, 1, 1], [], []>, precision = #tpu.contract_precision<fp32>} : vector<16x16xf32>, vector<16x64xf32>, vector<16x64xf32> -> vector<16x64xf32>
    %64 = vector.extract_strided_slice %33 {offsets = [1, 0], sizes = [1, 64], strides = [1, 1]} : vector<4x64xf32> to vector<1x64xf32>
    %65 = vector.broadcast %64 : vector<1x64xf32> to vector<16x64xf32>
    %66 = arith.mulf %63, %65 : vector<16x64xf32>
    %67 = arith.addf %53, %66 : vector<16x64xf32>
    %68 = arith.subi %34, %35 : vector<16x16xi32>
    %c1_i32 = arith.constant 1 : i32
    %69 = vector.broadcast %c1_i32 : i32 to vector<16x16xi32>
    %70 = arith.cmpi eq, %68, %69 : vector<16x16xi32>
    %c1_i32_28 = arith.constant 1 : i32
    %71 = vector.broadcast %c1_i32_28 : i32 to vector<16x16xi32>
    %72 = arith.cmpi sge, %37, %71 : vector<16x16xi32>
    %73 = arith.andi %70, %72 : vector<16x16xi1>
    %cst_29 = arith.constant 1.000000e+00 : f32
    %cst_30 = arith.constant 0.000000e+00 : f32
    %74 = vector.broadcast %cst_29 : f32 to vector<16x16xf32>
    %75 = vector.broadcast %cst_30 : f32 to vector<16x16xf32>
    %76 = arith.select %73, %74, %75 : vector<16x16xi1>, vector<16x16xf32>
    %cst_31 = arith.constant dense<0.000000e+00> : vector<16x64xf32>
    %77 = tpu.matmul %76, %31, %cst_31 {dimension_numbers = #tpu.dot_dimension_numbers<[1], [0], [0], [1], [0, 0, 1, 1], [], []>, precision = #tpu.contract_precision<fp32>} : vector<16x16xf32>, vector<16x64xf32>, vector<16x64xf32> -> vector<16x64xf32>
    %78 = vector.extract_strided_slice %33 {offsets = [2, 0], sizes = [1, 64], strides = [1, 1]} : vector<4x64xf32> to vector<1x64xf32>
    %79 = vector.broadcast %78 : vector<1x64xf32> to vector<16x64xf32>
    %80 = arith.mulf %77, %79 : vector<16x64xf32>
    %81 = arith.addf %67, %80 : vector<16x64xf32>
    %82 = vector.extract_strided_slice %33 {offsets = [3, 0], sizes = [1, 64], strides = [1, 1]} : vector<4x64xf32> to vector<1x64xf32>
    %83 = vector.broadcast %82 : vector<1x64xf32> to vector<16x64xf32>
    %84 = arith.mulf %31, %83 : vector<16x64xf32>
    %85 = arith.addf %81, %84 : vector<16x64xf32>
    %86 = arith.negf %85 : vector<16x64xf32>
    %87 = math.exp %86 : vector<16x64xf32>
    %cst_32 = arith.constant 1.000000e+00 : f32
    %88 = vector.broadcast %cst_32 : f32 to vector<16x64xf32>
    %89 = arith.addf %88, %87 : vector<16x64xf32>
    %90 = arith.divf %88, %89 : vector<16x64xf32>
    %91 = arith.mulf %85, %90 : vector<16x64xf32>
    %c0_33 = arith.constant 0 : index
    %c0_34 = arith.constant 0 : index
    %92 = vector.load %arg4[%c0_33, %c0_34] : memref<64x96xf32, #tpu.memory_space<vmem>>, vector<64x96xf32>
    %cst_35 = arith.constant dense<0.000000e+00> : vector<16x96xf32>
    %93 = tpu.matmul %91, %92, %cst_35 {dimension_numbers = #tpu.dot_dimension_numbers<[1], [0], [0], [1], [0, 0, 1, 1], [], []>, precision = #tpu.contract_precision<fp32>} : vector<16x64xf32>, vector<64x96xf32>, vector<16x96xf32> -> vector<16x96xf32>
    %94 = vector.extract_strided_slice %93 {offsets = [0, 0], sizes = [16, 64], strides = [1, 1]} : vector<16x96xf32> to vector<16x64xf32>
    %95 = vector.broadcast %5 : vector<1x64xf32> to vector<16x64xf32>
    %96 = arith.addf %94, %95 : vector<16x64xf32>
    %cst_36 = arith.constant 0.000000e+00 : f32
    %97 = vector.broadcast %cst_36 : f32 to vector<16x64xf32>
    %98 = arith.maximumf %96, %97 : vector<16x64xf32>
    %99 = math.absf %96 : vector<16x64xf32>
    %cst_37 = arith.constant 0.000000e+00 : f32
    %100 = vector.broadcast %cst_37 : f32 to vector<16x64xf32>
    %101 = arith.subf %100, %99 : vector<16x64xf32>
    %102 = math.exp %101 : vector<16x64xf32>
    %cst_38 = arith.constant 1.000000e+00 : f32
    %103 = vector.broadcast %cst_38 : f32 to vector<16x64xf32>
    %104 = arith.addf %103, %102 : vector<16x64xf32>
    %105 = math.log %104 : vector<16x64xf32>
    %106 = arith.addf %98, %105 : vector<16x64xf32>
    %107 = vector.extract_strided_slice %93 {offsets = [0, 64], sizes = [16, 32], strides = [1, 1]} : vector<16x96xf32> to vector<16x32xf32>
    %108 = tpu.transpose %107, [1, 0] : vector<16x32xf32> -> vector<32x16xf32>
    %109 = vector.extract_strided_slice %108 {offsets = [0, 0], sizes = [16, 16], strides = [1, 1]} : vector<32x16xf32> to vector<16x16xf32>
    %110 = vector.extract_strided_slice %108 {offsets = [16, 0], sizes = [16, 16], strides = [1, 1]} : vector<32x16xf32> to vector<16x16xf32>
    %c0_39 = arith.constant 0 : index
    %c0_40 = arith.constant 0 : index
    %111 = vector.load %arg5[%c0_39, %c0_40] : memref<16x64xf32, #tpu.memory_space<vmem>>, vector<16x64xf32>
    %112 = arith.mulf %106, %91 : vector<16x64xf32>
    %113 = tpu.iota {dimensions = array<i32: 0>} : vector<16x1xi32>
    %cst_41 = arith.constant 0.000000e+00 : f32
    %114 = vector.broadcast %cst_41 : f32 to vector<16x64xf32>
    %cst_42 = arith.constant 0.000000e+00 : f32
    %115 = vector.broadcast %cst_42 : f32 to vector<16x64xf32>
    %116 = vector.extract_strided_slice %106 {offsets = [0, 0], sizes = [1, 64], strides = [1, 1]} : vector<16x64xf32> to vector<1x64xf32>
    %117 = vector.broadcast %116 : vector<1x64xf32> to vector<16x64xf32>
    %118 = arith.mulf %117, %111 : vector<16x64xf32>
    %119 = math.exp %118 : vector<16x64xf32>
    %120 = arith.mulf %119, %115 : vector<16x64xf32>
    %121 = vector.extract_strided_slice %109 {offsets = [0, 0], sizes = [16, 1], strides = [1, 1]} : vector<16x16xf32> to vector<16x1xf32>
    %122 = vector.extract_strided_slice %112 {offsets = [0, 0], sizes = [1, 64], strides = [1, 1]} : vector<16x64xf32> to vector<1x64xf32>
    %123 = vector.broadcast %121 : vector<16x1xf32> to vector<16x64xf32>
    %124 = vector.broadcast %122 : vector<1x64xf32> to vector<16x64xf32>
    %125 = arith.mulf %123, %124 : vector<16x64xf32>
    %126 = arith.addf %120, %125 : vector<16x64xf32>
    %127 = vector.extract_strided_slice %110 {offsets = [0, 0], sizes = [16, 1], strides = [1, 1]} : vector<16x16xf32> to vector<16x1xf32>
    %128 = vector.broadcast %127 : vector<16x1xf32> to vector<16x64xf32>
    %129 = arith.mulf %126, %128 : vector<16x64xf32>
    %cst_43 = arith.constant dense<0.000000e+00> : vector<64xf32>
    %130 = vector.multi_reduction <add>, %129, %cst_43 [0] : vector<16x64xf32> to vector<64xf32>
    %131 = vector.shape_cast %130 : vector<64xf32> to vector<1x64xf32>
    %c0_i32 = arith.constant 0 : i32
    %132 = vector.broadcast %c0_i32 : i32 to vector<16x1xi32>
    %133 = arith.cmpi eq, %113, %132 : vector<16x1xi32>
    %cst_44 = arith.constant 1.000000e+00 : f32
    %cst_45 = arith.constant 0.000000e+00 : f32
    %134 = vector.broadcast %cst_44 : f32 to vector<16x1xf32>
    %135 = vector.broadcast %cst_45 : f32 to vector<16x1xf32>
    %136 = arith.select %133, %134, %135 : vector<16x1xi1>, vector<16x1xf32>
    %137 = vector.broadcast %136 : vector<16x1xf32> to vector<16x64xf32>
    %138 = vector.broadcast %131 : vector<1x64xf32> to vector<16x64xf32>
    %139 = arith.mulf %137, %138 : vector<16x64xf32>
    %140 = arith.addf %114, %139 : vector<16x64xf32>
    %141 = vector.extract_strided_slice %106 {offsets = [1, 0], sizes = [1, 64], strides = [1, 1]} : vector<16x64xf32> to vector<1x64xf32>
    %142 = vector.broadcast %141 : vector<1x64xf32> to vector<16x64xf32>
    %143 = arith.mulf %142, %111 : vector<16x64xf32>
    %144 = math.exp %143 : vector<16x64xf32>
    %145 = arith.mulf %144, %126 : vector<16x64xf32>
    %146 = vector.extract_strided_slice %109 {offsets = [0, 1], sizes = [16, 1], strides = [1, 1]} : vector<16x16xf32> to vector<16x1xf32>
    %147 = vector.extract_strided_slice %112 {offsets = [1, 0], sizes = [1, 64], strides = [1, 1]} : vector<16x64xf32> to vector<1x64xf32>
    %148 = vector.broadcast %146 : vector<16x1xf32> to vector<16x64xf32>
    %149 = vector.broadcast %147 : vector<1x64xf32> to vector<16x64xf32>
    %150 = arith.mulf %148, %149 : vector<16x64xf32>
    %151 = arith.addf %145, %150 : vector<16x64xf32>
    %152 = vector.extract_strided_slice %110 {offsets = [0, 1], sizes = [16, 1], strides = [1, 1]} : vector<16x16xf32> to vector<16x1xf32>
    %153 = vector.broadcast %152 : vector<16x1xf32> to vector<16x64xf32>
    %154 = arith.mulf %151, %153 : vector<16x64xf32>
    %cst_46 = arith.constant dense<0.000000e+00> : vector<64xf32>
    %155 = vector.multi_reduction <add>, %154, %cst_46 [0] : vector<16x64xf32> to vector<64xf32>
    %156 = vector.shape_cast %155 : vector<64xf32> to vector<1x64xf32>
    %c1_i32_47 = arith.constant 1 : i32
    %157 = vector.broadcast %c1_i32_47 : i32 to vector<16x1xi32>
    %158 = arith.cmpi eq, %113, %157 : vector<16x1xi32>
    %cst_48 = arith.constant 1.000000e+00 : f32
    %cst_49 = arith.constant 0.000000e+00 : f32
    %159 = vector.broadcast %cst_48 : f32 to vector<16x1xf32>
    %160 = vector.broadcast %cst_49 : f32 to vector<16x1xf32>
    %161 = arith.select %158, %159, %160 : vector<16x1xi1>, vector<16x1xf32>
    %162 = vector.broadcast %161 : vector<16x1xf32> to vector<16x64xf32>
    %163 = vector.broadcast %156 : vector<1x64xf32> to vector<16x64xf32>
    %164 = arith.mulf %162, %163 : vector<16x64xf32>
    %165 = arith.addf %140, %164 : vector<16x64xf32>
    %166 = vector.extract_strided_slice %106 {offsets = [2, 0], sizes = [1, 64], strides = [1, 1]} : vector<16x64xf32> to vector<1x64xf32>
    %167 = vector.broadcast %166 : vector<1x64xf32> to vector<16x64xf32>
    %168 = arith.mulf %167, %111 : vector<16x64xf32>
    %169 = math.exp %168 : vector<16x64xf32>
    %170 = arith.mulf %169, %151 : vector<16x64xf32>
    %171 = vector.extract_strided_slice %109 {offsets = [0, 2], sizes = [16, 1], strides = [1, 1]} : vector<16x16xf32> to vector<16x1xf32>
    %172 = vector.extract_strided_slice %112 {offsets = [2, 0], sizes = [1, 64], strides = [1, 1]} : vector<16x64xf32> to vector<1x64xf32>
    %173 = vector.broadcast %171 : vector<16x1xf32> to vector<16x64xf32>
    %174 = vector.broadcast %172 : vector<1x64xf32> to vector<16x64xf32>
    %175 = arith.mulf %173, %174 : vector<16x64xf32>
    %176 = arith.addf %170, %175 : vector<16x64xf32>
    %177 = vector.extract_strided_slice %110 {offsets = [0, 2], sizes = [16, 1], strides = [1, 1]} : vector<16x16xf32> to vector<16x1xf32>
    %178 = vector.broadcast %177 : vector<16x1xf32> to vector<16x64xf32>
    %179 = arith.mulf %176, %178 : vector<16x64xf32>
    %cst_50 = arith.constant dense<0.000000e+00> : vector<64xf32>
    %180 = vector.multi_reduction <add>, %179, %cst_50 [0] : vector<16x64xf32> to vector<64xf32>
    %181 = vector.shape_cast %180 : vector<64xf32> to vector<1x64xf32>
    %c2_i32_51 = arith.constant 2 : i32
    %182 = vector.broadcast %c2_i32_51 : i32 to vector<16x1xi32>
    %183 = arith.cmpi eq, %113, %182 : vector<16x1xi32>
    %cst_52 = arith.constant 1.000000e+00 : f32
    %cst_53 = arith.constant 0.000000e+00 : f32
    %184 = vector.broadcast %cst_52 : f32 to vector<16x1xf32>
    %185 = vector.broadcast %cst_53 : f32 to vector<16x1xf32>
    %186 = arith.select %183, %184, %185 : vector<16x1xi1>, vector<16x1xf32>
    %187 = vector.broadcast %186 : vector<16x1xf32> to vector<16x64xf32>
    %188 = vector.broadcast %181 : vector<1x64xf32> to vector<16x64xf32>
    %189 = arith.mulf %187, %188 : vector<16x64xf32>
    %190 = arith.addf %165, %189 : vector<16x64xf32>
    %191 = vector.extract_strided_slice %106 {offsets = [3, 0], sizes = [1, 64], strides = [1, 1]} : vector<16x64xf32> to vector<1x64xf32>
    %192 = vector.broadcast %191 : vector<1x64xf32> to vector<16x64xf32>
    %193 = arith.mulf %192, %111 : vector<16x64xf32>
    %194 = math.exp %193 : vector<16x64xf32>
    %195 = arith.mulf %194, %176 : vector<16x64xf32>
    %196 = vector.extract_strided_slice %109 {offsets = [0, 3], sizes = [16, 1], strides = [1, 1]} : vector<16x16xf32> to vector<16x1xf32>
    %197 = vector.extract_strided_slice %112 {offsets = [3, 0], sizes = [1, 64], strides = [1, 1]} : vector<16x64xf32> to vector<1x64xf32>
    %198 = vector.broadcast %196 : vector<16x1xf32> to vector<16x64xf32>
    %199 = vector.broadcast %197 : vector<1x64xf32> to vector<16x64xf32>
    %200 = arith.mulf %198, %199 : vector<16x64xf32>
    %201 = arith.addf %195, %200 : vector<16x64xf32>
    %202 = vector.extract_strided_slice %110 {offsets = [0, 3], sizes = [16, 1], strides = [1, 1]} : vector<16x16xf32> to vector<16x1xf32>
    %203 = vector.broadcast %202 : vector<16x1xf32> to vector<16x64xf32>
    %204 = arith.mulf %201, %203 : vector<16x64xf32>
    %cst_54 = arith.constant dense<0.000000e+00> : vector<64xf32>
    %205 = vector.multi_reduction <add>, %204, %cst_54 [0] : vector<16x64xf32> to vector<64xf32>
    %206 = vector.shape_cast %205 : vector<64xf32> to vector<1x64xf32>
    %c3_i32_55 = arith.constant 3 : i32
    %207 = vector.broadcast %c3_i32_55 : i32 to vector<16x1xi32>
    %208 = arith.cmpi eq, %113, %207 : vector<16x1xi32>
    %cst_56 = arith.constant 1.000000e+00 : f32
    %cst_57 = arith.constant 0.000000e+00 : f32
    %209 = vector.broadcast %cst_56 : f32 to vector<16x1xf32>
    %210 = vector.broadcast %cst_57 : f32 to vector<16x1xf32>
    %211 = arith.select %208, %209, %210 : vector<16x1xi1>, vector<16x1xf32>
    %212 = vector.broadcast %211 : vector<16x1xf32> to vector<16x64xf32>
    %213 = vector.broadcast %206 : vector<1x64xf32> to vector<16x64xf32>
    %214 = arith.mulf %212, %213 : vector<16x64xf32>
    %215 = arith.addf %190, %214 : vector<16x64xf32>
    %216 = vector.extract_strided_slice %106 {offsets = [4, 0], sizes = [1, 64], strides = [1, 1]} : vector<16x64xf32> to vector<1x64xf32>
    %217 = vector.broadcast %216 : vector<1x64xf32> to vector<16x64xf32>
    %218 = arith.mulf %217, %111 : vector<16x64xf32>
    %219 = math.exp %218 : vector<16x64xf32>
    %220 = arith.mulf %219, %201 : vector<16x64xf32>
    %221 = vector.extract_strided_slice %109 {offsets = [0, 4], sizes = [16, 1], strides = [1, 1]} : vector<16x16xf32> to vector<16x1xf32>
    %222 = vector.extract_strided_slice %112 {offsets = [4, 0], sizes = [1, 64], strides = [1, 1]} : vector<16x64xf32> to vector<1x64xf32>
    %223 = vector.broadcast %221 : vector<16x1xf32> to vector<16x64xf32>
    %224 = vector.broadcast %222 : vector<1x64xf32> to vector<16x64xf32>
    %225 = arith.mulf %223, %224 : vector<16x64xf32>
    %226 = arith.addf %220, %225 : vector<16x64xf32>
    %227 = vector.extract_strided_slice %110 {offsets = [0, 4], sizes = [16, 1], strides = [1, 1]} : vector<16x16xf32> to vector<16x1xf32>
    %228 = vector.broadcast %227 : vector<16x1xf32> to vector<16x64xf32>
    %229 = arith.mulf %226, %228 : vector<16x64xf32>
    %cst_58 = arith.constant dense<0.000000e+00> : vector<64xf32>
    %230 = vector.multi_reduction <add>, %229, %cst_58 [0] : vector<16x64xf32> to vector<64xf32>
    %231 = vector.shape_cast %230 : vector<64xf32> to vector<1x64xf32>
    %c4_i32 = arith.constant 4 : i32
    %232 = vector.broadcast %c4_i32 : i32 to vector<16x1xi32>
    %233 = arith.cmpi eq, %113, %232 : vector<16x1xi32>
    %cst_59 = arith.constant 1.000000e+00 : f32
    %cst_60 = arith.constant 0.000000e+00 : f32
    %234 = vector.broadcast %cst_59 : f32 to vector<16x1xf32>
    %235 = vector.broadcast %cst_60 : f32 to vector<16x1xf32>
    %236 = arith.select %233, %234, %235 : vector<16x1xi1>, vector<16x1xf32>
    %237 = vector.broadcast %236 : vector<16x1xf32> to vector<16x64xf32>
    %238 = vector.broadcast %231 : vector<1x64xf32> to vector<16x64xf32>
    %239 = arith.mulf %237, %238 : vector<16x64xf32>
    %240 = arith.addf %215, %239 : vector<16x64xf32>
    %241 = vector.extract_strided_slice %106 {offsets = [5, 0], sizes = [1, 64], strides = [1, 1]} : vector<16x64xf32> to vector<1x64xf32>
    %242 = vector.broadcast %241 : vector<1x64xf32> to vector<16x64xf32>
    %243 = arith.mulf %242, %111 : vector<16x64xf32>
    %244 = math.exp %243 : vector<16x64xf32>
    %245 = arith.mulf %244, %226 : vector<16x64xf32>
    %246 = vector.extract_strided_slice %109 {offsets = [0, 5], sizes = [16, 1], strides = [1, 1]} : vector<16x16xf32> to vector<16x1xf32>
    %247 = vector.extract_strided_slice %112 {offsets = [5, 0], sizes = [1, 64], strides = [1, 1]} : vector<16x64xf32> to vector<1x64xf32>
    %248 = vector.broadcast %246 : vector<16x1xf32> to vector<16x64xf32>
    %249 = vector.broadcast %247 : vector<1x64xf32> to vector<16x64xf32>
    %250 = arith.mulf %248, %249 : vector<16x64xf32>
    %251 = arith.addf %245, %250 : vector<16x64xf32>
    %252 = vector.extract_strided_slice %110 {offsets = [0, 5], sizes = [16, 1], strides = [1, 1]} : vector<16x16xf32> to vector<16x1xf32>
    %253 = vector.broadcast %252 : vector<16x1xf32> to vector<16x64xf32>
    %254 = arith.mulf %251, %253 : vector<16x64xf32>
    %cst_61 = arith.constant dense<0.000000e+00> : vector<64xf32>
    %255 = vector.multi_reduction <add>, %254, %cst_61 [0] : vector<16x64xf32> to vector<64xf32>
    %256 = vector.shape_cast %255 : vector<64xf32> to vector<1x64xf32>
    %c5_i32 = arith.constant 5 : i32
    %257 = vector.broadcast %c5_i32 : i32 to vector<16x1xi32>
    %258 = arith.cmpi eq, %113, %257 : vector<16x1xi32>
    %cst_62 = arith.constant 1.000000e+00 : f32
    %cst_63 = arith.constant 0.000000e+00 : f32
    %259 = vector.broadcast %cst_62 : f32 to vector<16x1xf32>
    %260 = vector.broadcast %cst_63 : f32 to vector<16x1xf32>
    %261 = arith.select %258, %259, %260 : vector<16x1xi1>, vector<16x1xf32>
    %262 = vector.broadcast %261 : vector<16x1xf32> to vector<16x64xf32>
    %263 = vector.broadcast %256 : vector<1x64xf32> to vector<16x64xf32>
    %264 = arith.mulf %262, %263 : vector<16x64xf32>
    %265 = arith.addf %240, %264 : vector<16x64xf32>
    %266 = vector.extract_strided_slice %106 {offsets = [6, 0], sizes = [1, 64], strides = [1, 1]} : vector<16x64xf32> to vector<1x64xf32>
    %267 = vector.broadcast %266 : vector<1x64xf32> to vector<16x64xf32>
    %268 = arith.mulf %267, %111 : vector<16x64xf32>
    %269 = math.exp %268 : vector<16x64xf32>
    %270 = arith.mulf %269, %251 : vector<16x64xf32>
    %271 = vector.extract_strided_slice %109 {offsets = [0, 6], sizes = [16, 1], strides = [1, 1]} : vector<16x16xf32> to vector<16x1xf32>
    %272 = vector.extract_strided_slice %112 {offsets = [6, 0], sizes = [1, 64], strides = [1, 1]} : vector<16x64xf32> to vector<1x64xf32>
    %273 = vector.broadcast %271 : vector<16x1xf32> to vector<16x64xf32>
    %274 = vector.broadcast %272 : vector<1x64xf32> to vector<16x64xf32>
    %275 = arith.mulf %273, %274 : vector<16x64xf32>
    %276 = arith.addf %270, %275 : vector<16x64xf32>
    %277 = vector.extract_strided_slice %110 {offsets = [0, 6], sizes = [16, 1], strides = [1, 1]} : vector<16x16xf32> to vector<16x1xf32>
    %278 = vector.broadcast %277 : vector<16x1xf32> to vector<16x64xf32>
    %279 = arith.mulf %276, %278 : vector<16x64xf32>
    %cst_64 = arith.constant dense<0.000000e+00> : vector<64xf32>
    %280 = vector.multi_reduction <add>, %279, %cst_64 [0] : vector<16x64xf32> to vector<64xf32>
    %281 = vector.shape_cast %280 : vector<64xf32> to vector<1x64xf32>
    %c6_i32 = arith.constant 6 : i32
    %282 = vector.broadcast %c6_i32 : i32 to vector<16x1xi32>
    %283 = arith.cmpi eq, %113, %282 : vector<16x1xi32>
    %cst_65 = arith.constant 1.000000e+00 : f32
    %cst_66 = arith.constant 0.000000e+00 : f32
    %284 = vector.broadcast %cst_65 : f32 to vector<16x1xf32>
    %285 = vector.broadcast %cst_66 : f32 to vector<16x1xf32>
    %286 = arith.select %283, %284, %285 : vector<16x1xi1>, vector<16x1xf32>
    %287 = vector.broadcast %286 : vector<16x1xf32> to vector<16x64xf32>
    %288 = vector.broadcast %281 : vector<1x64xf32> to vector<16x64xf32>
    %289 = arith.mulf %287, %288 : vector<16x64xf32>
    %290 = arith.addf %265, %289 : vector<16x64xf32>
    %291 = vector.extract_strided_slice %106 {offsets = [7, 0], sizes = [1, 64], strides = [1, 1]} : vector<16x64xf32> to vector<1x64xf32>
    %292 = vector.broadcast %291 : vector<1x64xf32> to vector<16x64xf32>
    %293 = arith.mulf %292, %111 : vector<16x64xf32>
    %294 = math.exp %293 : vector<16x64xf32>
    %295 = arith.mulf %294, %276 : vector<16x64xf32>
    %296 = vector.extract_strided_slice %109 {offsets = [0, 7], sizes = [16, 1], strides = [1, 1]} : vector<16x16xf32> to vector<16x1xf32>
    %297 = vector.extract_strided_slice %112 {offsets = [7, 0], sizes = [1, 64], strides = [1, 1]} : vector<16x64xf32> to vector<1x64xf32>
    %298 = vector.broadcast %296 : vector<16x1xf32> to vector<16x64xf32>
    %299 = vector.broadcast %297 : vector<1x64xf32> to vector<16x64xf32>
    %300 = arith.mulf %298, %299 : vector<16x64xf32>
    %301 = arith.addf %295, %300 : vector<16x64xf32>
    %302 = vector.extract_strided_slice %110 {offsets = [0, 7], sizes = [16, 1], strides = [1, 1]} : vector<16x16xf32> to vector<16x1xf32>
    %303 = vector.broadcast %302 : vector<16x1xf32> to vector<16x64xf32>
    %304 = arith.mulf %301, %303 : vector<16x64xf32>
    %cst_67 = arith.constant dense<0.000000e+00> : vector<64xf32>
    %305 = vector.multi_reduction <add>, %304, %cst_67 [0] : vector<16x64xf32> to vector<64xf32>
    %306 = vector.shape_cast %305 : vector<64xf32> to vector<1x64xf32>
    %c7_i32_68 = arith.constant 7 : i32
    %307 = vector.broadcast %c7_i32_68 : i32 to vector<16x1xi32>
    %308 = arith.cmpi eq, %113, %307 : vector<16x1xi32>
    %cst_69 = arith.constant 1.000000e+00 : f32
    %cst_70 = arith.constant 0.000000e+00 : f32
    %309 = vector.broadcast %cst_69 : f32 to vector<16x1xf32>
    %310 = vector.broadcast %cst_70 : f32 to vector<16x1xf32>
    %311 = arith.select %308, %309, %310 : vector<16x1xi1>, vector<16x1xf32>
    %312 = vector.broadcast %311 : vector<16x1xf32> to vector<16x64xf32>
    %313 = vector.broadcast %306 : vector<1x64xf32> to vector<16x64xf32>
    %314 = arith.mulf %312, %313 : vector<16x64xf32>
    %315 = arith.addf %290, %314 : vector<16x64xf32>
    %cst_71 = arith.constant 0.000000e+00 : f32
    %316 = vector.broadcast %cst_71 : f32 to vector<16x64xf32>
    %317 = vector.extract_strided_slice %106 {offsets = [8, 0], sizes = [1, 64], strides = [1, 1]} : vector<16x64xf32> to vector<1x64xf32>
    %318 = vector.broadcast %317 : vector<1x64xf32> to vector<16x64xf32>
    %319 = arith.mulf %318, %111 : vector<16x64xf32>
    %320 = math.exp %319 : vector<16x64xf32>
    %321 = arith.mulf %320, %316 : vector<16x64xf32>
    %322 = vector.extract_strided_slice %109 {offsets = [0, 8], sizes = [16, 1], strides = [1, 1]} : vector<16x16xf32> to vector<16x1xf32>
    %323 = vector.extract_strided_slice %112 {offsets = [8, 0], sizes = [1, 64], strides = [1, 1]} : vector<16x64xf32> to vector<1x64xf32>
    %324 = vector.broadcast %322 : vector<16x1xf32> to vector<16x64xf32>
    %325 = vector.broadcast %323 : vector<1x64xf32> to vector<16x64xf32>
    %326 = arith.mulf %324, %325 : vector<16x64xf32>
    %327 = arith.addf %321, %326 : vector<16x64xf32>
    %328 = vector.extract_strided_slice %110 {offsets = [0, 8], sizes = [16, 1], strides = [1, 1]} : vector<16x16xf32> to vector<16x1xf32>
    %329 = vector.broadcast %328 : vector<16x1xf32> to vector<16x64xf32>
    %330 = arith.mulf %327, %329 : vector<16x64xf32>
    %cst_72 = arith.constant dense<0.000000e+00> : vector<64xf32>
    %331 = vector.multi_reduction <add>, %330, %cst_72 [0] : vector<16x64xf32> to vector<64xf32>
    %332 = vector.shape_cast %331 : vector<64xf32> to vector<1x64xf32>
    %c8_i32 = arith.constant 8 : i32
    %333 = vector.broadcast %c8_i32 : i32 to vector<16x1xi32>
    %334 = arith.cmpi eq, %113, %333 : vector<16x1xi32>
    %cst_73 = arith.constant 1.000000e+00 : f32
    %cst_74 = arith.constant 0.000000e+00 : f32
    %335 = vector.broadcast %cst_73 : f32 to vector<16x1xf32>
    %336 = vector.broadcast %cst_74 : f32 to vector<16x1xf32>
    %337 = arith.select %334, %335, %336 : vector<16x1xi1>, vector<16x1xf32>
    %338 = vector.broadcast %337 : vector<16x1xf32> to vector<16x64xf32>
    %339 = vector.broadcast %332 : vector<1x64xf32> to vector<16x64xf32>
    %340 = arith.mulf %338, %339 : vector<16x64xf32>
    %341 = arith.addf %315, %340 : vector<16x64xf32>
    %342 = vector.extract_strided_slice %106 {offsets = [9, 0], sizes = [1, 64], strides = [1, 1]} : vector<16x64xf32> to vector<1x64xf32>
    %343 = vector.broadcast %342 : vector<1x64xf32> to vector<16x64xf32>
    %344 = arith.mulf %343, %111 : vector<16x64xf32>
    %345 = math.exp %344 : vector<16x64xf32>
    %346 = arith.mulf %345, %327 : vector<16x64xf32>
    %347 = vector.extract_strided_slice %109 {offsets = [0, 9], sizes = [16, 1], strides = [1, 1]} : vector<16x16xf32> to vector<16x1xf32>
    %348 = vector.extract_strided_slice %112 {offsets = [9, 0], sizes = [1, 64], strides = [1, 1]} : vector<16x64xf32> to vector<1x64xf32>
    %349 = vector.broadcast %347 : vector<16x1xf32> to vector<16x64xf32>
    %350 = vector.broadcast %348 : vector<1x64xf32> to vector<16x64xf32>
    %351 = arith.mulf %349, %350 : vector<16x64xf32>
    %352 = arith.addf %346, %351 : vector<16x64xf32>
    %353 = vector.extract_strided_slice %110 {offsets = [0, 9], sizes = [16, 1], strides = [1, 1]} : vector<16x16xf32> to vector<16x1xf32>
    %354 = vector.broadcast %353 : vector<16x1xf32> to vector<16x64xf32>
    %355 = arith.mulf %352, %354 : vector<16x64xf32>
    %cst_75 = arith.constant dense<0.000000e+00> : vector<64xf32>
    %356 = vector.multi_reduction <add>, %355, %cst_75 [0] : vector<16x64xf32> to vector<64xf32>
    %357 = vector.shape_cast %356 : vector<64xf32> to vector<1x64xf32>
    %c9_i32 = arith.constant 9 : i32
    %358 = vector.broadcast %c9_i32 : i32 to vector<16x1xi32>
    %359 = arith.cmpi eq, %113, %358 : vector<16x1xi32>
    %cst_76 = arith.constant 1.000000e+00 : f32
    %cst_77 = arith.constant 0.000000e+00 : f32
    %360 = vector.broadcast %cst_76 : f32 to vector<16x1xf32>
    %361 = vector.broadcast %cst_77 : f32 to vector<16x1xf32>
    %362 = arith.select %359, %360, %361 : vector<16x1xi1>, vector<16x1xf32>
    %363 = vector.broadcast %362 : vector<16x1xf32> to vector<16x64xf32>
    %364 = vector.broadcast %357 : vector<1x64xf32> to vector<16x64xf32>
    %365 = arith.mulf %363, %364 : vector<16x64xf32>
    %366 = arith.addf %341, %365 : vector<16x64xf32>
    %367 = vector.extract_strided_slice %106 {offsets = [10, 0], sizes = [1, 64], strides = [1, 1]} : vector<16x64xf32> to vector<1x64xf32>
    %368 = vector.broadcast %367 : vector<1x64xf32> to vector<16x64xf32>
    %369 = arith.mulf %368, %111 : vector<16x64xf32>
    %370 = math.exp %369 : vector<16x64xf32>
    %371 = arith.mulf %370, %352 : vector<16x64xf32>
    %372 = vector.extract_strided_slice %109 {offsets = [0, 10], sizes = [16, 1], strides = [1, 1]} : vector<16x16xf32> to vector<16x1xf32>
    %373 = vector.extract_strided_slice %112 {offsets = [10, 0], sizes = [1, 64], strides = [1, 1]} : vector<16x64xf32> to vector<1x64xf32>
    %374 = vector.broadcast %372 : vector<16x1xf32> to vector<16x64xf32>
    %375 = vector.broadcast %373 : vector<1x64xf32> to vector<16x64xf32>
    %376 = arith.mulf %374, %375 : vector<16x64xf32>
    %377 = arith.addf %371, %376 : vector<16x64xf32>
    %378 = vector.extract_strided_slice %110 {offsets = [0, 10], sizes = [16, 1], strides = [1, 1]} : vector<16x16xf32> to vector<16x1xf32>
    %379 = vector.broadcast %378 : vector<16x1xf32> to vector<16x64xf32>
    %380 = arith.mulf %377, %379 : vector<16x64xf32>
    %cst_78 = arith.constant dense<0.000000e+00> : vector<64xf32>
    %381 = vector.multi_reduction <add>, %380, %cst_78 [0] : vector<16x64xf32> to vector<64xf32>
    %382 = vector.shape_cast %381 : vector<64xf32> to vector<1x64xf32>
    %c10_i32 = arith.constant 10 : i32
    %383 = vector.broadcast %c10_i32 : i32 to vector<16x1xi32>
    %384 = arith.cmpi eq, %113, %383 : vector<16x1xi32>
    %cst_79 = arith.constant 1.000000e+00 : f32
    %cst_80 = arith.constant 0.000000e+00 : f32
    %385 = vector.broadcast %cst_79 : f32 to vector<16x1xf32>
    %386 = vector.broadcast %cst_80 : f32 to vector<16x1xf32>
    %387 = arith.select %384, %385, %386 : vector<16x1xi1>, vector<16x1xf32>
    %388 = vector.broadcast %387 : vector<16x1xf32> to vector<16x64xf32>
    %389 = vector.broadcast %382 : vector<1x64xf32> to vector<16x64xf32>
    %390 = arith.mulf %388, %389 : vector<16x64xf32>
    %391 = arith.addf %366, %390 : vector<16x64xf32>
    %392 = vector.extract_strided_slice %106 {offsets = [11, 0], sizes = [1, 64], strides = [1, 1]} : vector<16x64xf32> to vector<1x64xf32>
    %393 = vector.broadcast %392 : vector<1x64xf32> to vector<16x64xf32>
    %394 = arith.mulf %393, %111 : vector<16x64xf32>
    %395 = math.exp %394 : vector<16x64xf32>
    %396 = arith.mulf %395, %377 : vector<16x64xf32>
    %397 = vector.extract_strided_slice %109 {offsets = [0, 11], sizes = [16, 1], strides = [1, 1]} : vector<16x16xf32> to vector<16x1xf32>
    %398 = vector.extract_strided_slice %112 {offsets = [11, 0], sizes = [1, 64], strides = [1, 1]} : vector<16x64xf32> to vector<1x64xf32>
    %399 = vector.broadcast %397 : vector<16x1xf32> to vector<16x64xf32>
    %400 = vector.broadcast %398 : vector<1x64xf32> to vector<16x64xf32>
    %401 = arith.mulf %399, %400 : vector<16x64xf32>
    %402 = arith.addf %396, %401 : vector<16x64xf32>
    %403 = vector.extract_strided_slice %110 {offsets = [0, 11], sizes = [16, 1], strides = [1, 1]} : vector<16x16xf32> to vector<16x1xf32>
    %404 = vector.broadcast %403 : vector<16x1xf32> to vector<16x64xf32>
    %405 = arith.mulf %402, %404 : vector<16x64xf32>
    %cst_81 = arith.constant dense<0.000000e+00> : vector<64xf32>
    %406 = vector.multi_reduction <add>, %405, %cst_81 [0] : vector<16x64xf32> to vector<64xf32>
    %407 = vector.shape_cast %406 : vector<64xf32> to vector<1x64xf32>
    %c11_i32 = arith.constant 11 : i32
    %408 = vector.broadcast %c11_i32 : i32 to vector<16x1xi32>
    %409 = arith.cmpi eq, %113, %408 : vector<16x1xi32>
    %cst_82 = arith.constant 1.000000e+00 : f32
    %cst_83 = arith.constant 0.000000e+00 : f32
    %410 = vector.broadcast %cst_82 : f32 to vector<16x1xf32>
    %411 = vector.broadcast %cst_83 : f32 to vector<16x1xf32>
    %412 = arith.select %409, %410, %411 : vector<16x1xi1>, vector<16x1xf32>
    %413 = vector.broadcast %412 : vector<16x1xf32> to vector<16x64xf32>
    %414 = vector.broadcast %407 : vector<1x64xf32> to vector<16x64xf32>
    %415 = arith.mulf %413, %414 : vector<16x64xf32>
    %416 = arith.addf %391, %415 : vector<16x64xf32>
    %417 = vector.extract_strided_slice %106 {offsets = [12, 0], sizes = [1, 64], strides = [1, 1]} : vector<16x64xf32> to vector<1x64xf32>
    %418 = vector.broadcast %417 : vector<1x64xf32> to vector<16x64xf32>
    %419 = arith.mulf %418, %111 : vector<16x64xf32>
    %420 = math.exp %419 : vector<16x64xf32>
    %421 = arith.mulf %420, %402 : vector<16x64xf32>
    %422 = vector.extract_strided_slice %109 {offsets = [0, 12], sizes = [16, 1], strides = [1, 1]} : vector<16x16xf32> to vector<16x1xf32>
    %423 = vector.extract_strided_slice %112 {offsets = [12, 0], sizes = [1, 64], strides = [1, 1]} : vector<16x64xf32> to vector<1x64xf32>
    %424 = vector.broadcast %422 : vector<16x1xf32> to vector<16x64xf32>
    %425 = vector.broadcast %423 : vector<1x64xf32> to vector<16x64xf32>
    %426 = arith.mulf %424, %425 : vector<16x64xf32>
    %427 = arith.addf %421, %426 : vector<16x64xf32>
    %428 = vector.extract_strided_slice %110 {offsets = [0, 12], sizes = [16, 1], strides = [1, 1]} : vector<16x16xf32> to vector<16x1xf32>
    %429 = vector.broadcast %428 : vector<16x1xf32> to vector<16x64xf32>
    %430 = arith.mulf %427, %429 : vector<16x64xf32>
    %cst_84 = arith.constant dense<0.000000e+00> : vector<64xf32>
    %431 = vector.multi_reduction <add>, %430, %cst_84 [0] : vector<16x64xf32> to vector<64xf32>
    %432 = vector.shape_cast %431 : vector<64xf32> to vector<1x64xf32>
    %c12_i32 = arith.constant 12 : i32
    %433 = vector.broadcast %c12_i32 : i32 to vector<16x1xi32>
    %434 = arith.cmpi eq, %113, %433 : vector<16x1xi32>
    %cst_85 = arith.constant 1.000000e+00 : f32
    %cst_86 = arith.constant 0.000000e+00 : f32
    %435 = vector.broadcast %cst_85 : f32 to vector<16x1xf32>
    %436 = vector.broadcast %cst_86 : f32 to vector<16x1xf32>
    %437 = arith.select %434, %435, %436 : vector<16x1xi1>, vector<16x1xf32>
    %438 = vector.broadcast %437 : vector<16x1xf32> to vector<16x64xf32>
    %439 = vector.broadcast %432 : vector<1x64xf32> to vector<16x64xf32>
    %440 = arith.mulf %438, %439 : vector<16x64xf32>
    %441 = arith.addf %416, %440 : vector<16x64xf32>
    %442 = vector.extract_strided_slice %106 {offsets = [13, 0], sizes = [1, 64], strides = [1, 1]} : vector<16x64xf32> to vector<1x64xf32>
    %443 = vector.broadcast %442 : vector<1x64xf32> to vector<16x64xf32>
    %444 = arith.mulf %443, %111 : vector<16x64xf32>
    %445 = math.exp %444 : vector<16x64xf32>
    %446 = arith.mulf %445, %427 : vector<16x64xf32>
    %447 = vector.extract_strided_slice %109 {offsets = [0, 13], sizes = [16, 1], strides = [1, 1]} : vector<16x16xf32> to vector<16x1xf32>
    %448 = vector.extract_strided_slice %112 {offsets = [13, 0], sizes = [1, 64], strides = [1, 1]} : vector<16x64xf32> to vector<1x64xf32>
    %449 = vector.broadcast %447 : vector<16x1xf32> to vector<16x64xf32>
    %450 = vector.broadcast %448 : vector<1x64xf32> to vector<16x64xf32>
    %451 = arith.mulf %449, %450 : vector<16x64xf32>
    %452 = arith.addf %446, %451 : vector<16x64xf32>
    %453 = vector.extract_strided_slice %110 {offsets = [0, 13], sizes = [16, 1], strides = [1, 1]} : vector<16x16xf32> to vector<16x1xf32>
    %454 = vector.broadcast %453 : vector<16x1xf32> to vector<16x64xf32>
    %455 = arith.mulf %452, %454 : vector<16x64xf32>
    %cst_87 = arith.constant dense<0.000000e+00> : vector<64xf32>
    %456 = vector.multi_reduction <add>, %455, %cst_87 [0] : vector<16x64xf32> to vector<64xf32>
    %457 = vector.shape_cast %456 : vector<64xf32> to vector<1x64xf32>
    %c13_i32 = arith.constant 13 : i32
    %458 = vector.broadcast %c13_i32 : i32 to vector<16x1xi32>
    %459 = arith.cmpi eq, %113, %458 : vector<16x1xi32>
    %cst_88 = arith.constant 1.000000e+00 : f32
    %cst_89 = arith.constant 0.000000e+00 : f32
    %460 = vector.broadcast %cst_88 : f32 to vector<16x1xf32>
    %461 = vector.broadcast %cst_89 : f32 to vector<16x1xf32>
    %462 = arith.select %459, %460, %461 : vector<16x1xi1>, vector<16x1xf32>
    %463 = vector.broadcast %462 : vector<16x1xf32> to vector<16x64xf32>
    %464 = vector.broadcast %457 : vector<1x64xf32> to vector<16x64xf32>
    %465 = arith.mulf %463, %464 : vector<16x64xf32>
    %466 = arith.addf %441, %465 : vector<16x64xf32>
    %467 = vector.extract_strided_slice %106 {offsets = [14, 0], sizes = [1, 64], strides = [1, 1]} : vector<16x64xf32> to vector<1x64xf32>
    %468 = vector.broadcast %467 : vector<1x64xf32> to vector<16x64xf32>
    %469 = arith.mulf %468, %111 : vector<16x64xf32>
    %470 = math.exp %469 : vector<16x64xf32>
    %471 = arith.mulf %470, %452 : vector<16x64xf32>
    %472 = vector.extract_strided_slice %109 {offsets = [0, 14], sizes = [16, 1], strides = [1, 1]} : vector<16x16xf32> to vector<16x1xf32>
    %473 = vector.extract_strided_slice %112 {offsets = [14, 0], sizes = [1, 64], strides = [1, 1]} : vector<16x64xf32> to vector<1x64xf32>
    %474 = vector.broadcast %472 : vector<16x1xf32> to vector<16x64xf32>
    %475 = vector.broadcast %473 : vector<1x64xf32> to vector<16x64xf32>
    %476 = arith.mulf %474, %475 : vector<16x64xf32>
    %477 = arith.addf %471, %476 : vector<16x64xf32>
    %478 = vector.extract_strided_slice %110 {offsets = [0, 14], sizes = [16, 1], strides = [1, 1]} : vector<16x16xf32> to vector<16x1xf32>
    %479 = vector.broadcast %478 : vector<16x1xf32> to vector<16x64xf32>
    %480 = arith.mulf %477, %479 : vector<16x64xf32>
    %cst_90 = arith.constant dense<0.000000e+00> : vector<64xf32>
    %481 = vector.multi_reduction <add>, %480, %cst_90 [0] : vector<16x64xf32> to vector<64xf32>
    %482 = vector.shape_cast %481 : vector<64xf32> to vector<1x64xf32>
    %c14_i32 = arith.constant 14 : i32
    %483 = vector.broadcast %c14_i32 : i32 to vector<16x1xi32>
    %484 = arith.cmpi eq, %113, %483 : vector<16x1xi32>
    %cst_91 = arith.constant 1.000000e+00 : f32
    %cst_92 = arith.constant 0.000000e+00 : f32
    %485 = vector.broadcast %cst_91 : f32 to vector<16x1xf32>
    %486 = vector.broadcast %cst_92 : f32 to vector<16x1xf32>
    %487 = arith.select %484, %485, %486 : vector<16x1xi1>, vector<16x1xf32>
    %488 = vector.broadcast %487 : vector<16x1xf32> to vector<16x64xf32>
    %489 = vector.broadcast %482 : vector<1x64xf32> to vector<16x64xf32>
    %490 = arith.mulf %488, %489 : vector<16x64xf32>
    %491 = arith.addf %466, %490 : vector<16x64xf32>
    %492 = vector.extract_strided_slice %106 {offsets = [15, 0], sizes = [1, 64], strides = [1, 1]} : vector<16x64xf32> to vector<1x64xf32>
    %493 = vector.broadcast %492 : vector<1x64xf32> to vector<16x64xf32>
    %494 = arith.mulf %493, %111 : vector<16x64xf32>
    %495 = math.exp %494 : vector<16x64xf32>
    %496 = arith.mulf %495, %477 : vector<16x64xf32>
    %497 = vector.extract_strided_slice %109 {offsets = [0, 15], sizes = [16, 1], strides = [1, 1]} : vector<16x16xf32> to vector<16x1xf32>
    %498 = vector.extract_strided_slice %112 {offsets = [15, 0], sizes = [1, 64], strides = [1, 1]} : vector<16x64xf32> to vector<1x64xf32>
    %499 = vector.broadcast %497 : vector<16x1xf32> to vector<16x64xf32>
    %500 = vector.broadcast %498 : vector<1x64xf32> to vector<16x64xf32>
    %501 = arith.mulf %499, %500 : vector<16x64xf32>
    %502 = arith.addf %496, %501 : vector<16x64xf32>
    %503 = vector.extract_strided_slice %110 {offsets = [0, 15], sizes = [16, 1], strides = [1, 1]} : vector<16x16xf32> to vector<16x1xf32>
    %504 = vector.broadcast %503 : vector<16x1xf32> to vector<16x64xf32>
    %505 = arith.mulf %502, %504 : vector<16x64xf32>
    %cst_93 = arith.constant dense<0.000000e+00> : vector<64xf32>
    %506 = vector.multi_reduction <add>, %505, %cst_93 [0] : vector<16x64xf32> to vector<64xf32>
    %507 = vector.shape_cast %506 : vector<64xf32> to vector<1x64xf32>
    %c15_i32 = arith.constant 15 : i32
    %508 = vector.broadcast %c15_i32 : i32 to vector<16x1xi32>
    %509 = arith.cmpi eq, %113, %508 : vector<16x1xi32>
    %cst_94 = arith.constant 1.000000e+00 : f32
    %cst_95 = arith.constant 0.000000e+00 : f32
    %510 = vector.broadcast %cst_94 : f32 to vector<16x1xf32>
    %511 = vector.broadcast %cst_95 : f32 to vector<16x1xf32>
    %512 = arith.select %509, %510, %511 : vector<16x1xi1>, vector<16x1xf32>
    %513 = vector.broadcast %512 : vector<16x1xf32> to vector<16x64xf32>
    %514 = vector.broadcast %507 : vector<1x64xf32> to vector<16x64xf32>
    %515 = arith.mulf %513, %514 : vector<16x64xf32>
    %516 = arith.addf %491, %515 : vector<16x64xf32>
    %517 = vector.broadcast %6 : vector<1x64xf32> to vector<16x64xf32>
    %518 = arith.mulf %91, %517 : vector<16x64xf32>
    %519 = arith.addf %516, %518 : vector<16x64xf32>
    %520 = arith.negf %32 : vector<16x64xf32>
    %521 = math.exp %520 : vector<16x64xf32>
    %cst_96 = arith.constant 1.000000e+00 : f32
    %522 = vector.broadcast %cst_96 : f32 to vector<16x64xf32>
    %523 = arith.addf %522, %521 : vector<16x64xf32>
    %524 = arith.divf %522, %523 : vector<16x64xf32>
    %525 = arith.mulf %32, %524 : vector<16x64xf32>
    %526 = arith.mulf %519, %525 : vector<16x64xf32>
    %c0_97 = arith.constant 0 : index
    %c0_98 = arith.constant 0 : index
    %527 = vector.load %arg6[%c0_97, %c0_98] : memref<64x32xf32, #tpu.memory_space<vmem>>, vector<64x32xf32>
    %cst_99 = arith.constant dense<0.000000e+00> : vector<16x32xf32>
    %528 = tpu.matmul %526, %527, %cst_99 {dimension_numbers = #tpu.dot_dimension_numbers<[1], [0], [0], [1], [0, 0, 1, 1], [], []>, precision = #tpu.contract_precision<fp32>} : vector<16x64xf32>, vector<64x32xf32>, vector<16x32xf32> -> vector<16x32xf32>
    %529 = vector.broadcast %3 : vector<1x32xf32> to vector<16x32xf32>
    %530 = arith.addf %528, %529 : vector<16x32xf32>
    %531 = arith.addf %530, %0 : vector<16x32xf32>
    %c0_100 = arith.constant 0 : index
    %c0_101 = arith.constant 0 : index
    %532 = vector.load %arg9[%c0_100, %c0_101] : memref<16x32xf32, #tpu.memory_space<vmem>>, vector<16x32xf32>
    tpu.vector_store %arg9[%c0_100, %c0_101], %531 {strides = array<i32>} : memref<16x32xf32, #tpu.memory_space<vmem>>, vector<16x32xf32>,
    return
  }
  func.func @transform_0(%arg0: i32) -> (i32, i32) {
    %c0_i32 = arith.constant 0 : i32
    %c0_i32_0 = arith.constant 0 : i32
    %c0_i32_1 = arith.constant 0 : i32
    return %c0_i32, %c0_i32_0 : i32, i32
  }
  func.func @transform_1(%arg0: i32) -> (i32, i32) {
    %c0_i32 = arith.constant 0 : i32
    %c0_i32_0 = arith.constant 0 : i32
    %c0_i32_1 = arith.constant 0 : i32
    return %c0_i32, %c0_i32_0 : i32, i32
  }
  func.func @transform_2(%arg0: i32) -> (i32, i32) {
    %c0_i32 = arith.constant 0 : i32
    %c0_i32_0 = arith.constant 0 : i32
    %c0_i32_1 = arith.constant 0 : i32
    return %c0_i32, %c0_i32_0 : i32, i32
  }
  func.func @transform_3(%arg0: i32) -> (i32, i32) {
    %c0_i32 = arith.constant 0 : i32
    %c0_i32_0 = arith.constant 0 : i32
    %c0_i32_1 = arith.constant 0 : i32
    return %c0_i32, %c0_i32_0 : i32, i32
  }
  func.func @transform_4(%arg0: i32) -> (i32, i32) {
    %c0_i32 = arith.constant 0 : i32
    %c0_i32_0 = arith.constant 0 : i32
    %c0_i32_1 = arith.constant 0 : i32
    return %c0_i32, %c0_i32_0 : i32, i32
  }
  func.func @transform_5(%arg0: i32) -> (i32, i32) {
    %c0_i32 = arith.constant 0 : i32
    %c0_i32_0 = arith.constant 0 : i32
    %c0_i32_1 = arith.constant 0 : i32
    return %c0_i32, %c0_i32_0 : i32, i32
  }
  func.func @transform_6(%arg0: i32) -> (i32, i32) {
    %c0_i32 = arith.constant 0 : i32
    %c0_i32_0 = arith.constant 0 : i32
    %c0_i32_1 = arith.constant 0 : i32
    return %c0_i32, %c0_i32_0 : i32, i32
  }
  func.func @transform_7(%arg0: i32) -> (i32, i32) {
    %c0_i32 = arith.constant 0 : i32
    %c0_i32_0 = arith.constant 0 : i32
    %c0_i32_1 = arith.constant 0 : i32
    return %c0_i32, %c0_i32_0 : i32, i32
  }
  func.func @transform_8(%arg0: i32) -> (i32, i32) {
    %c0_i32 = arith.constant 0 : i32
    %c0_i32_0 = arith.constant 0 : i32
    %c0_i32_1 = arith.constant 0 : i32
    return %c0_i32, %c0_i32_0 : i32, i32
  }
}

</mosaic_0001>

<llo_original>
// kernel: target_mamba_block.1
$region0: #{target_mamba_block.1}
  #allocation0 [shape = 'u32[]', space=smem, size = 0x4, offset = 0x4, fixed_abs, tag = 'smem constant byte address 0x4 - core index']
  #allocation1 [shape = 'u32[144,128]{1,0:T(1,128)}', space=vmem, size = 0x12000, scoped, tag = 'internal scratch']
  %s0 = inlined_call_operand.vmem [shape: f32[16,32], index: 0, kind: input, shape index: {}]
  %s1 = inlined_call_operand.vmem [shape: f32[32,128], index: 1, kind: input, shape index: {}]
  %s2 = inlined_call_operand.vmem [shape: f32[4,64], index: 2, kind: input, shape index: {}]
  %s3 = inlined_call_operand.vmem [shape: f32[64,96], index: 3, kind: input, shape index: {}]
  %s4 = inlined_call_operand.vmem [shape: f32[16,64], index: 4, kind: input, shape index: {}]
  %s5 = inlined_call_operand.vmem [shape: f32[64,32], index: 5, kind: input, shape index: {}]
  %s6 = inlined_call_operand.vmem [shape: f32[3,32], index: 6, kind: input, shape index: {}]
  %s7 = inlined_call_operand.vmem [shape: f32[3,64], index: 7, kind: input, shape index: {}]
  %s8 = inlined_call_operand.hbm [shape: f32[16,32], index: 8, kind: output, shape index: {}]
  %s9 = sld [smem:[#allocation0]]
  $region42: #{target_mamba_block.1} parent=0
    _
  %s11 = ssub.s32 1, %s9
  %s12 = scalar_select 0, %s11, %s9
  $region1: #{target_mamba_block.1} parent=0
    #allocation2 [shape = 'u8[8192]{0}', space=vmem, size = 0x2000, scoped, tag = 'output window, operand 0, single buffered']
    #allocation3 [shape = 's32[1]{0}', space=sflag, size = 0x4, scoped, tag = 'scoped memory for target_mamba_block.1']
    %13 = vsyncpa [#allocation3], 0
    // Predicated region
    $region2: #{target_mamba_block.1} parent=1 // pred_check
      _
    $region3: #{target_mamba_block.1} parent=1 // pred_check_branch
      %15 = sbr.rel (0) target = $region5
    $region4: #{target_mamba_block.1} parent=1 // pred_region
      _
    $region5: #{target_mamba_block.1} parent=1 // pred_fallthru
      _
    // Predicated region
    $region6: #{target_mamba_block.1} parent=1 // pred_check
      _
    $region7: #{target_mamba_block.1} parent=1 // pred_check_branch
      %17 = sbr.rel (0) target = $region9
    $region8: #{target_mamba_block.1} parent=1 // pred_region
      _
    $region9: #{target_mamba_block.1} parent=1 // pred_fallthru
      _
    // Predicated region
    $region10: #{target_mamba_block.1} parent=1 // pred_check
      _
    $region11: #{target_mamba_block.1} parent=1 // pred_check_branch
      %19 = sbr.rel (0) target = $region13
    $region12: #{target_mamba_block.1} parent=1 // pred_region
      _
    $region13: #{target_mamba_block.1} parent=1 // pred_fallthru
      _
    // Predicated region
    $region14: #{target_mamba_block.1} parent=1 // pred_check
      _
    $region15: #{target_mamba_block.1} parent=1 // pred_check_branch
      %21 = sbr.rel (0) target = $region17
    $region16: #{target_mamba_block.1} parent=1 // pred_region
      _
    $region17: #{target_mamba_block.1} parent=1 // pred_fallthru
      _
    // Predicated region
    $region18: #{target_mamba_block.1} parent=1 // pred_check
      _
    $region19: #{target_mamba_block.1} parent=1 // pred_check_branch
      %23 = sbr.rel (0) target = $region21
    $region20: #{target_mamba_block.1} parent=1 // pred_region
      _
    $region21: #{target_mamba_block.1} parent=1 // pred_fallthru
      _
    // Predicated region
    $region22: #{target_mamba_block.1} parent=1 // pred_check
      _
    $region23: #{target_mamba_block.1} parent=1 // pred_check_branch
      %25 = sbr.rel (0) target = $region25
    $region24: #{target_mamba_block.1} parent=1 // pred_region
      _
    $region25: #{target_mamba_block.1} parent=1 // pred_fallthru
      _
    // Predicated region
    $region26: #{target_mamba_block.1} parent=1 // pred_check
      _
    $region27: #{target_mamba_block.1} parent=1 // pred_check_branch
      %27 = sbr.rel (0) target = $region29
    $region28: #{target_mamba_block.1} parent=1 // pred_region
      _
    $region29: #{target_mamba_block.1} parent=1 // pred_fallthru
      _
    // Predicated region
    $region30: #{target_mamba_block.1} parent=1 // pred_check
      _
    $region31: #{target_mamba_block.1} parent=1 // pred_check_branch
      %29 = sbr.rel (0) target = $region33
    $region32: #{target_mamba_block.1} parent=1 // pred_region
      _
    $region33: #{target_mamba_block.1} parent=1 // pred_fallthru
      _
    %v30 = vld [vmem:[%s0] sm:$0xff]
    %v31 = vld [vmem:[%s0 + $0x8] sm:$0xff]
    %v32 = vld [vmem:[%s6] sm:$0x1]
    %v33 = vld [vmem:[%s6 + $0x1] sm:$0x1]
    %v34 = vld [vmem:[%s6 + $0x2] sm:$0x1]
    %v35 = vld [vmem:[%s7] sm:$0x1]
    %v36 = vld [vmem:[%s7 + $0x1] sm:$0x1]
    %v37 = vld [vmem:[%s7 + $0x2] sm:$0x1]
    %vm38 = vcmask 261120
    %v39 = vsel %vm38, %v30, 0.0
    %40 = vadd.xlane.f32.xlu0 %v39
    %v41 = vpop.xlane.xlu0 %40
    %v42 = vsel %vm38, %v31, 0.0
    %43 = vadd.xlane.f32.xlu0 %v42
    %v44 = vpop.xlane.xlu0 %43
    %v45 = vrcp.pop 32.0
    %v46 = vmul.f32 %v41, %v45
    %v47 = vmul.f32 %v44, %v45
    %v48 = vsub.f32 %v30, %v46
    %v49 = vsub.f32 %v31, %v47
    %v50 = vmul.f32 %v48, %v48
    %v51 = vmul.f32 %v49, %v49
    %v52 = vsel %vm38, %v50, 0.0
    %53 = vadd.xlane.f32.xlu0 %v52
    %v54 = vpop.xlane.xlu0 %53
    %v55 = vsel %vm38, %v51, 0.0
    %56 = vadd.xlane.f32.xlu0 %v55
    %v57 = vpop.xlane.xlu0 %56
    %v58 = vmul.f32 %v54, %v45
    %v59 = vmul.f32 %v57, %v45
    %v60 = vadd.f32 %v58, 1e-05
    %v61 = vadd.f32 %v59, 1e-05
    %v62 = vrsqrt.pop %v60
    %v63 = vrsqrt.pop %v61
    %v64 = vmul.f32 %v48, %v62
    %v65 = vmul.f32 %v49, %v63
    %v66 = vlaneseq
    %v67 = vshrl.u32 %v66, 7
    %v68 = vsub.s32 0, %v67
    %v69 = vrot.slane %v32, %v68
    %v70 = vmul.f32 %v64, %v69
    %v71 = vmul.f32 %v65, %v69
    %v72 = vlaneseq
    %v73 = vshrl.u32 %v72, 7
    %v74 = vsub.s32 0, %v73
    %v75 = vrot.slane %v33, %v74
    %v76 = vadd.f32 %v70, %v75
    %v77 = vadd.f32 %v71, %v75
    %v78 = vld [vmem:[%s1] sm:$0xff]
    %v79 = vld [vmem:[%s1 + $0x8] sm:$0xff]
    %v80 = vld [vmem:[%s1 + $0x10] sm:$0xff]
    %v81 = vld [vmem:[%s1 + $0x18] sm:$0xff]
    %v83 = vsel %vm38, %v76, 0
    %v86 = vsel %vm38, %v77, 0
    %88 = vmatprep.subr.mxu0 0.0
    %89 = vmatpush1.msra.mxu0 0.0
    %90 = vmatprep.subr.mxu0 0.0
    %91 = vmatpush1.msra.mxu0 0.0
    %92 = vmatprep.subr.mxu0 0.0
    %93 = vmatpush1.msra.mxu0 0.0
    %94 = vmatprep.subr.mxu0 0.0
    %95 = vmatpush1.msra.mxu0 0.0
    %96 = vmatprep.subr.mxu0 0.0
    %97 = vmatpush1.msra.mxu0 0.0
    %98 = vmatprep.subr.mxu0 0.0
    %99 = vmatpush1.msra.mxu0 0.0
    %100 = vmatprep.subr.mxu0 0.0
    %101 = vmatpush1.msra.mxu0 0.0
    %102 = vmatprep.subr.mxu0 0.0
    %103 = vmatpush1.msra.mxu0 0.0
    %104 = vmatprep.subr.mxu0 0.0
    %105 = vmatpush1.msra.mxu0 0.0
    %106 = vmatprep.subr.mxu0 0.0
    %107 = vmatpush1.msra.mxu0 0.0
    %108 = vmatprep.subr.mxu0 0.0
    %109 = vmatpush1.msra.mxu0 0.0
    %110 = vmatprep.subr.mxu0 0.0
    %111 = vmatpush1.msra.mxu0 0.0
    %112 = vmatprep.subr.mxu0 0.0
    %v113 = vand.u32 %v81, 4294901760
    %114 = vmatpush1.msra.mxu0 %v113
    %115 = vmatprep.subr.mxu0 0.0
    %v116 = vand.u32 %v80, 4294901760
    %117 = vmatpush1.msra.mxu0 %v116
    %118 = vmatprep.subr.mxu0 0.0
    %v119 = vand.u32 %v79, 4294901760
    %120 = vmatpush1.msra.mxu0 %v119
    %121 = vmatprep.subr.mxu0 0.0
    %v122 = vand.u32 %v78, 4294901760
    %123 = vmatpush1.msra.mxu0 %v122
    %124 = vmatprep.subr.mxu0 0.0
    %125 = vmatpush2.msra.mxu0 0.0
    %126 = vmatprep.subr.mxu0 0.0
    %127 = vmatpush2.msra.mxu0 0.0
    %128 = vmatprep.subr.mxu0 0.0
    %129 = vmatpush2.msra.mxu0 0.0
    %130 = vmatprep.subr.mxu0 0.0
    %131 = vmatpush2.msra.mxu0 0.0
    %132 = vmatprep.subr.mxu0 0.0
    %133 = vmatpush2.msra.mxu0 0.0
    %134 = vmatprep.subr.mxu0 0.0
    %135 = vmatpush2.msra.mxu0 0.0
    %136 = vmatprep.subr.mxu0 0.0
    %137 = vmatpush2.msra.mxu0 0.0
    %138 = vmatprep.subr.mxu0 0.0
    %139 = vmatpush2.msra.mxu0 0.0
    %140 = vmatprep.subr.mxu0 0.0
    %141 = vmatpush2.msra.mxu0 0.0
    %142 = vmatprep.subr.mxu0 0.0
    %143 = vmatpush2.msra.mxu0 0.0
    %144 = vmatprep.subr.mxu0 0.0
    %145 = vmatpush2.msra.mxu0 0.0
    %146 = vmatprep.subr.mxu0 0.0
    %147 = vmatpush2.msra.mxu0 0.0
    %148 = vmatprep.subr.mxu0 0.0
    %149 = vmatpush2.msra.mxu0 0.0
    %150 = vmatprep.subr.mxu0 0.0
    %151 = vmatpush2.msra.mxu0 0.0
    %152 = vmatprep.subr.mxu0 0.0
    %153 = vmatpush2.msra.mxu0 0.0
    %154 = vmatprep.subr.mxu0 0.0
    %155 = vmatpush2.msra.mxu0 0.0
    %156 = vmatprep.mubr.f32.mxu0 0.0
    %v157 = vand.u32 %v83, 4294901760
    %v158 = vsub.f32 %v83, %v157
    %v159 = vand.u32 %v158, 4294901760
    %v160 = vsub.f32 %v158, %v159
    %v161 = vand.u32 %v160, 4294901760
    %162 = vmatmul.mubr.f32.gmra.mxu0 %v161
    %v163 = vpop.f32.mrf.mxu0
    %v164 = vadd.f32 0.0, %v163
    %v165 = vpop.f32.mrf.mxu0
    %166 = vmatprep.mubr.f32.mxu0 0.0
    %v167 = vand.u32 %v86, 4294901760
    %v168 = vsub.f32 %v86, %v167
    %v169 = vand.u32 %v168, 4294901760
    %v170 = vsub.f32 %v168, %v169
    %v171 = vand.u32 %v170, 4294901760
    %172 = vmatmul.mubr.f32.gmra.mxu0 %v171
    %v173 = vpop.f32.mrf.mxu0
    %v174 = vadd.f32 0.0, %v173
    %v175 = vpop.f32.mrf.mxu0
    %176 = vdwg.mxu0
    %177 = vmatprep.subr.mxu0 0.0
    %178 = vmatpush1.msra.mxu0 0.0
    %179 = vmatprep.subr.mxu0 0.0
    %180 = vmatpush1.msra.mxu0 0.0
    %181 = vmatprep.subr.mxu0 0.0
    %182 = vmatpush1.msra.mxu0 0.0
    %183 = vmatprep.subr.mxu0 0.0
    %184 = vmatpush1.msra.mxu0 0.0
    %185 = vmatprep.subr.mxu0 0.0
    %186 = vmatpush1.msra.mxu0 0.0
    %187 = vmatprep.subr.mxu0 0.0
    %188 = vmatpush1.msra.mxu0 0.0
    %189 = vmatprep.subr.mxu0 0.0
    %190 = vmatpush1.msra.mxu0 0.0
    %191 = vmatprep.subr.mxu0 0.0
    %192 = vmatpush1.msra.mxu0 0.0
    %193 = vmatprep.subr.mxu0 0.0
    %194 = vmatpush1.msra.mxu0 0.0
    %195 = vmatprep.subr.mxu0 0.0
    %196 = vmatpush1.msra.mxu0 0.0
    %197 = vmatprep.subr.mxu0 0.0
    %198 = vmatpush1.msra.mxu0 0.0
    %199 = vmatprep.subr.mxu0 0.0
    %200 = vmatpush1.msra.mxu0 0.0
    %201 = vmatprep.subr.mxu0 0.0
    %v202 = vand.u32 %v81, 4294901760
    %v203 = vsub.f32 %v81, %v202
    %v204 = vand.u32 %v203, 4294901760
    %v205 = vsub.f32 %v203, %v204
    %v206 = vand.u32 %v205, 4294901760
    %207 = vmatpush1.msra.mxu0 %v206
    %208 = vmatprep.subr.mxu0 0.0
    %v209 = vand.u32 %v80, 4294901760
    %v210 = vsub.f32 %v80, %v209
    %v211 = vand.u32 %v210, 4294901760
    %v212 = vsub.f32 %v210, %v211
    %v213 = vand.u32 %v212, 4294901760
    %214 = vmatpush1.msra.mxu0 %v213
    %215 = vmatprep.subr.mxu0 0.0
    %v216 = vand.u32 %v79, 4294901760
    %v217 = vsub.f32 %v79, %v216
    %v218 = vand.u32 %v217, 4294901760
    %v219 = vsub.f32 %v217, %v218
    %v220 = vand.u32 %v219, 4294901760
    %221 = vmatpush1.msra.mxu0 %v220
    %222 = vmatprep.subr.mxu0 0.0
    %v223 = vand.u32 %v78, 4294901760
    %v224 = vsub.f32 %v78, %v223
    %v225 = vand.u32 %v224, 4294901760
    %v226 = vsub.f32 %v224, %v225
    %v227 = vand.u32 %v226, 4294901760
    %228 = vmatpush1.msra.mxu0 %v227
    %229 = vmatprep.subr.mxu0 0.0
    %230 = vmatpush2.msra.mxu0 0.0
    %231 = vmatprep.subr.mxu0 0.0
    %232 = vmatpush2.msra.mxu0 0.0
    %233 = vmatprep.subr.mxu0 0.0
    %234 = vmatpush2.msra.mxu0 0.0
    %235 = vmatprep.subr.mxu0 0.0
    %236 = vmatpush2.msra.mxu0 0.0
    %237 = vmatprep.subr.mxu0 0.0
    %238 = vmatpush2.msra.mxu0 0.0
    %239 = vmatprep.subr.mxu0 0.0
    %240 = vmatpush2.msra.mxu0 0.0
    %241 = vmatprep.subr.mxu0 0.0
    %242 = vmatpush2.msra.mxu0 0.0
    %243 = vmatprep.subr.mxu0 0.0
    %244 = vmatpush2.msra.mxu0 0.0
    %245 = vmatprep.subr.mxu0 0.0
    %246 = vmatpush2.msra.mxu0 0.0
    %247 = vmatprep.subr.mxu0 0.0
    %248 = vmatpush2.msra.mxu0 0.0
    %249 = vmatprep.subr.mxu0 0.0
    %250 = vmatpush2.msra.mxu0 0.0
    %251 = vmatprep.subr.mxu0 0.0
    %252 = vmatpush2.msra.mxu0 0.0
    %253 = vmatprep.subr.mxu0 0.0
    %254 = vmatpush2.msra.mxu0 0.0
    %255 = vmatprep.subr.mxu0 0.0
    %256 = vmatpush2.msra.mxu0 0.0
    %257 = vmatprep.subr.mxu0 0.0
    %258 = vmatpush2.msra.mxu0 0.0
    %259 = vmatprep.subr.mxu0 0.0
    %260 = vmatpush2.msra.mxu0 0.0
    %261 = vmatprep.mubr.f32.mxu0 0.0
    %v262 = vand.u32 %v83, 4294901760
    %263 = vmatmul.mubr.f32.gmra.mxu0 %v262
    %v264 = vpop.f32.mrf.mxu0
    %v265 = vadd.f32 %v164, %v264
    %v266 = vpop.f32.mrf.mxu0
    %267 = vmatprep.mubr.f32.mxu0 0.0
    %v268 = vand.u32 %v86, 4294901760
    %269 = vmatmul.mubr.f32.gmra.mxu0 %v268
    %v270 = vpop.f32.mrf.mxu0
    %v271 = vadd.f32 %v174, %v270
    %v272 = vpop.f32.mrf.mxu0
    %273 = vdwg.mxu0
    %274 = vmatprep.subr.mxu0 0.0
    %275 = vmatpush1.msra.mxu0 0.0
    %276 = vmatprep.subr.mxu0 0.0
    %277 = vmatpush1.msra.mxu0 0.0
    %278 = vmatprep.subr.mxu0 0.0
    %279 = vmatpush1.msra.mxu0 0.0
    %280 = vmatprep.subr.mxu0 0.0
    %281 = vmatpush1.msra.mxu0 0.0
    %282 = vmatprep.subr.mxu0 0.0
    %283 = vmatpush1.msra.mxu0 0.0
    %284 = vmatprep.subr.mxu0 0.0
    %285 = vmatpush1.msra.mxu0 0.0
    %286 = vmatprep.subr.mxu0 0.0
    %287 = vmatpush1.msra.mxu0 0.0
    %288 = vmatprep.subr.mxu0 0.0
    %289 = vmatpush1.msra.mxu0 0.0
    %290 = vmatprep.subr.mxu0 0.0
    %291 = vmatpush1.msra.mxu0 0.0
    %292 = vmatprep.subr.mxu0 0.0
    %293 = vmatpush1.msra.mxu0 0.0
    %294 = vmatprep.subr.mxu0 0.0
    %295 = vmatpush1.msra.mxu0 0.0
    %296 = vmatprep.subr.mxu0 0.0
    %297 = vmatpush1.msra.mxu0 0.0
    %298 = vmatprep.subr.mxu0 0.0
    %v299 = vand.u32 %v81, 4294901760
    %v300 = vsub.f32 %v81, %v299
    %301 = vmatpush1.msra.mxu0 %v300
    %302 = vmatprep.subr.mxu0 0.0
    %v303 = vand.u32 %v80, 4294901760
    %v304 = vsub.f32 %v80, %v303
    %305 = vmatpush1.msra.mxu0 %v304
    %306 = vmatprep.subr.mxu0 0.0
    %v307 = vand.u32 %v79, 4294901760
    %v308 = vsub.f32 %v79, %v307
    %309 = vmatpush1.msra.mxu0 %v308
    %310 = vmatprep.subr.mxu0 0.0
    %v311 = vand.u32 %v78, 4294901760
    %v312 = vsub.f32 %v78, %v311
    %313 = vmatpush1.msra.mxu0 %v312
    %314 = vmatprep.subr.mxu0 0.0
    %315 = vmatpush2.msra.mxu0 0.0
    %316 = vmatprep.subr.mxu0 0.0
    %317 = vmatpush2.msra.mxu0 0.0
    %318 = vmatprep.subr.mxu0 0.0
    %319 = vmatpush2.msra.mxu0 0.0
    %320 = vmatprep.subr.mxu0 0.0
    %321 = vmatpush2.msra.mxu0 0.0
    %322 = vmatprep.subr.mxu0 0.0
    %323 = vmatpush2.msra.mxu0 0.0
    %324 = vmatprep.subr.mxu0 0.0
    %325 = vmatpush2.msra.mxu0 0.0
    %326 = vmatprep.subr.mxu0 0.0
    %327 = vmatpush2.msra.mxu0 0.0
    %328 = vmatprep.subr.mxu0 0.0
    %329 = vmatpush2.msra.mxu0 0.0
    %330 = vmatprep.subr.mxu0 0.0
    %331 = vmatpush2.msra.mxu0 0.0
    %332 = vmatprep.subr.mxu0 0.0
    %333 = vmatpush2.msra.mxu0 0.0
    %334 = vmatprep.subr.mxu0 0.0
    %335 = vmatpush2.msra.mxu0 0.0
    %336 = vmatprep.subr.mxu0 0.0
    %337 = vmatpush2.msra.mxu0 0.0
    %338 = vmatprep.subr.mxu0 0.0
    %339 = vmatpush2.msra.mxu0 0.0
    %340 = vmatprep.subr.mxu0 0.0
    %341 = vmatpush2.msra.mxu0 0.0
    %342 = vmatprep.subr.mxu0 0.0
    %343 = vmatpush2.msra.mxu0 0.0
    %344 = vmatprep.subr.mxu0 0.0
    %345 = vmatpush2.msra.mxu0 0.0
    %346 = vmatprep.mubr.f32.mxu0 0.0
    %v347 = vand.u32 %v83, 4294901760
    %v348 = vsub.f32 %v83, %v347
    %349 = vmatmul.mubr.f32.gmra.mxu0 %v348
    %v350 = vpop.f32.mrf.mxu0
    %v351 = vadd.f32 %v265, %v350
    %v352 = vpop.f32.mrf.mxu0
    %353 = vmatprep.mubr.f32.mxu0 0.0
    %v354 = vand.u32 %v86, 4294901760
    %v355 = vsub.f32 %v86, %v354
    %356 = vmatmul.mubr.f32.gmra.mxu0 %v355
    %v357 = vpop.f32.mrf.mxu0
    %v358 = vadd.f32 %v271, %v357
    %v359 = vpop.f32.mrf.mxu0
    %360 = vdwg.mxu0
    %361 = vmatprep.subr.mxu0 0.0
    %362 = vmatpush1.msra.mxu0 0.0
    %363 = vmatprep.subr.mxu0 0.0
    %364 = vmatpush1.msra.mxu0 0.0
    %365 = vmatprep.subr.mxu0 0.0
    %366 = vmatpush1.msra.mxu0 0.0
    %367 = vmatprep.subr.mxu0 0.0
    %368 = vmatpush1.msra.mxu0 0.0
    %369 = vmatprep.subr.mxu0 0.0
    %370 = vmatpush1.msra.mxu0 0.0
    %371 = vmatprep.subr.mxu0 0.0
    %372 = vmatpush1.msra.mxu0 0.0
    %373 = vmatprep.subr.mxu0 0.0
    %374 = vmatpush1.msra.mxu0 0.0
    %375 = vmatprep.subr.mxu0 0.0
    %376 = vmatpush1.msra.mxu0 0.0
    %377 = vmatprep.subr.mxu0 0.0
    %378 = vmatpush1.msra.mxu0 0.0
    %379 = vmatprep.subr.mxu0 0.0
    %380 = vmatpush1.msra.mxu0 0.0
    %381 = vmatprep.subr.mxu0 0.0
    %382 = vmatpush1.msra.mxu0 0.0
    %383 = vmatprep.subr.mxu0 0.0
    %384 = vmatpush1.msra.mxu0 0.0
    %385 = vmatprep.subr.mxu0 0.0
    %v386 = vand.u32 %v81, 4294901760
    %387 = vmatpush1.msra.mxu0 %v386
    %388 = vmatprep.subr.mxu0 0.0
    %v389 = vand.u32 %v80, 4294901760
    %390 = vmatpush1.msra.mxu0 %v389
    %391 = vmatprep.subr.mxu0 0.0
    %v392 = vand.u32 %v79, 4294901760
    %393 = vmatpush1.msra.mxu0 %v392
    %394 = vmatprep.subr.mxu0 0.0
    %v395 = vand.u32 %v78, 4294901760
    %396 = vmatpush1.msra.mxu0 %v395
    %397 = vmatprep.subr.mxu0 0.0
    %398 = vmatpush2.msra.mxu0 0.0
    %399 = vmatprep.subr.mxu0 0.0
    %400 = vmatpush2.msra.mxu0 0.0
    %401 = vmatprep.subr.mxu0 0.0
    %402 = vmatpush2.msra.mxu0 0.0
    %403 = vmatprep.subr.mxu0 0.0
    %404 = vmatpush2.msra.mxu0 0.0
    %405 = vmatprep.subr.mxu0 0.0
    %406 = vmatpush2.msra.mxu0 0.0
    %407 = vmatprep.subr.mxu0 0.0
    %408 = vmatpush2.msra.mxu0 0.0
    %409 = vmatprep.subr.mxu0 0.0
    %410 = vmatpush2.msra.mxu0 0.0
    %411 = vmatprep.subr.mxu0 0.0
    %412 = vmatpush2.msra.mxu0 0.0
    %413 = vmatprep.subr.mxu0 0.0
    %414 = vmatpush2.msra.mxu0 0.0
    %415 = vmatprep.subr.mxu0 0.0
    %416 = vmatpush2.msra.mxu0 0.0
    %417 = vmatprep.subr.mxu0 0.0
    %418 = vmatpush2.msra.mxu0 0.0
    %419 = vmatprep.subr.mxu0 0.0
    %420 = vmatpush2.msra.mxu0 0.0
    %421 = vmatprep.subr.mxu0 0.0
    %422 = vmatpush2.msra.mxu0 0.0
    %423 = vmatprep.subr.mxu0 0.0
    %424 = vmatpush2.msra.mxu0 0.0
    %425 = vmatprep.subr.mxu0 0.0
    %426 = vmatpush2.msra.mxu0 0.0
    %427 = vmatprep.subr.mxu0 0.0
    %428 = vmatpush2.msra.mxu0 0.0
    %429 = vmatprep.mubr.f32.mxu0 0.0
    %v430 = vand.u32 %v83, 4294901760
    %v431 = vsub.f32 %v83, %v430
    %v432 = vand.u32 %v431, 4294901760
    %433 = vmatmul.mubr.f32.gmra.mxu0 %v432
    %v434 = vpop.f32.mrf.mxu0
    %v435 = vadd.f32 %v351, %v434
    %v436 = vpop.f32.mrf.mxu0
    %437 = vmatprep.mubr.f32.mxu0 0.0
    %v438 = vand.u32 %v86, 4294901760
    %v439 = vsub.f32 %v86, %v438
    %v440 = vand.u32 %v439, 4294901760
    %441 = vmatmul.mubr.f32.gmra.mxu0 %v440
    %v442 = vpop.f32.mrf.mxu0
    %v443 = vadd.f32 %v358, %v442
    %v444 = vpop.f32.mrf.mxu0
    %445 = vdwg.mxu0
    %446 = vmatprep.subr.mxu0 0.0
    %447 = vmatpush1.msra.mxu0 0.0
    %448 = vmatprep.subr.mxu0 0.0
    %449 = vmatpush1.msra.mxu0 0.0
    %450 = vmatprep.subr.mxu0 0.0
    %451 = vmatpush1.msra.mxu0 0.0
    %452 = vmatprep.subr.mxu0 0.0
    %453 = vmatpush1.msra.mxu0 0.0
    %454 = vmatprep.subr.mxu0 0.0
    %455 = vmatpush1.msra.mxu0 0.0
    %456 = vmatprep.subr.mxu0 0.0
    %457 = vmatpush1.msra.mxu0 0.0
    %458 = vmatprep.subr.mxu0 0.0
    %459 = vmatpush1.msra.mxu0 0.0
    %460 = vmatprep.subr.mxu0 0.0
    %461 = vmatpush1.msra.mxu0 0.0
    %462 = vmatprep.subr.mxu0 0.0
    %463 = vmatpush1.msra.mxu0 0.0
    %464 = vmatprep.subr.mxu0 0.0
    %465 = vmatpush1.msra.mxu0 0.0
    %466 = vmatprep.subr.mxu0 0.0
    %467 = vmatpush1.msra.mxu0 0.0
    %468 = vmatprep.subr.mxu0 0.0
    %469 = vmatpush1.msra.mxu0 0.0
    %470 = vmatprep.subr.mxu0 0.0
    %v471 = vand.u32 %v81, 4294901760
    %v472 = vsub.f32 %v81, %v471
    %v473 = vand.u32 %v472, 4294901760
    %474 = vmatpush1.msra.mxu0 %v473
    %475 = vmatprep.subr.mxu0 0.0
    %v476 = vand.u32 %v80, 4294901760
    %v477 = vsub.f32 %v80, %v476
    %v478 = vand.u32 %v477, 4294901760
    %479 = vmatpush1.msra.mxu0 %v478
    %480 = vmatprep.subr.mxu0 0.0
    %v481 = vand.u32 %v79, 4294901760
    %v482 = vsub.f32 %v79, %v481
    %v483 = vand.u32 %v482, 4294901760
    %484 = vmatpush1.msra.mxu0 %v483
    %485 = vmatprep.subr.mxu0 0.0
    %v486 = vand.u32 %v78, 4294901760
    %v487 = vsub.f32 %v78, %v486
    %v488 = vand.u32 %v487, 4294901760
    %489 = vmatpush1.msra.mxu0 %v488
    %490 = vmatprep.subr.mxu0 0.0
    %491 = vmatpush2.msra.mxu0 0.0
    %492 = vmatprep.subr.mxu0 0.0
    %493 = vmatpush2.msra.mxu0 0.0
    %494 = vmatprep.subr.mxu0 0.0
    %495 = vmatpush2.msra.mxu0 0.0
    %496 = vmatprep.subr.mxu0 0.0
    %497 = vmatpush2.msra.mxu0 0.0
    %498 = vmatprep.subr.mxu0 0.0
    %499 = vmatpush2.msra.mxu0 0.0
    %500 = vmatprep.subr.mxu0 0.0
    %501 = vmatpush2.msra.mxu0 0.0
    %502 = vmatprep.subr.mxu0 0.0
    %503 = vmatpush2.msra.mxu0 0.0
    %504 = vmatprep.subr.mxu0 0.0
    %505 = vmatpush2.msra.mxu0 0.0
    %506 = vmatprep.subr.mxu0 0.0
    %507 = vmatpush2.msra.mxu0 0.0
    %508 = vmatprep.subr.mxu0 0.0
    %509 = vmatpush2.msra.mxu0 0.0
    %510 = vmatprep.subr.mxu0 0.0
    %511 = vmatpush2.msra.mxu0 0.0
    %512 = vmatprep.subr.mxu0 0.0
    %513 = vmatpush2.msra.mxu0 0.0
    %514 = vmatprep.subr.mxu0 0.0
    %515 = vmatpush2.msra.mxu0 0.0
    %516 = vmatprep.subr.mxu0 0.0
    %517 = vmatpush2.msra.mxu0 0.0
    %518 = vmatprep.subr.mxu0 0.0
    %519 = vmatpush2.msra.mxu0 0.0
    %520 = vmatprep.subr.mxu0 0.0
    %521 = vmatpush2.msra.mxu0 0.0
    %522 = vmatprep.mubr.f32.mxu0 0.0
    %v523 = vand.u32 %v83, 4294901760
    %524 = vmatmul.mubr.f32.gmra.mxu0 %v523
    %v525 = vpop.f32.mrf.mxu0
    %v526 = vadd.f32 %v435, %v525
    %v527 = vpop.f32.mrf.mxu0
    %528 = vmatprep.mubr.f32.mxu0 0.0
    %v529 = vand.u32 %v86, 4294901760
    %530 = vmatmul.mubr.f32.gmra.mxu0 %v529
    %v531 = vpop.f32.mrf.mxu0
    %v532 = vadd.f32 %v443, %v531
    %v533 = vpop.f32.mrf.mxu0
    %534 = vdwg.mxu0
    %535 = vmatprep.subr.mxu0 0.0
    %536 = vmatpush1.msra.mxu0 0.0
    %537 = vmatprep.subr.mxu0 0.0
    %538 = vmatpush1.msra.mxu0 0.0
    %539 = vmatprep.subr.mxu0 0.0
    %540 = vmatpush1.msra.mxu0 0.0
    %541 = vmatprep.subr.mxu0 0.0
    %542 = vmatpush1.msra.mxu0 0.0
    %543 = vmatprep.subr.mxu0 0.0
    %544 = vmatpush1.msra.mxu0 0.0
    %545 = vmatprep.subr.mxu0 0.0
    %546 = vmatpush1.msra.mxu0 0.0
    %547 = vmatprep.subr.mxu0 0.0
    %548 = vmatpush1.msra.mxu0 0.0
    %549 = vmatprep.subr.mxu0 0.0
    %550 = vmatpush1.msra.mxu0 0.0
    %551 = vmatprep.subr.mxu0 0.0
    %552 = vmatpush1.msra.mxu0 0.0
    %553 = vmatprep.subr.mxu0 0.0
    %554 = vmatpush1.msra.mxu0 0.0
    %555 = vmatprep.subr.mxu0 0.0
    %556 = vmatpush1.msra.mxu0 0.0
    %557 = vmatprep.subr.mxu0 0.0
    %558 = vmatpush1.msra.mxu0 0.0
    %559 = vmatprep.subr.mxu0 0.0
    %v560 = vand.u32 %v81, 4294901760
    %561 = vmatpush1.msra.mxu0 %v560
    %562 = vmatprep.subr.mxu0 0.0
    %v563 = vand.u32 %v80, 4294901760
    %564 = vmatpush1.msra.mxu0 %v563
    %565 = vmatprep.subr.mxu0 0.0
    %v566 = vand.u32 %v79, 4294901760
    %567 = vmatpush1.msra.mxu0 %v566
    %568 = vmatprep.subr.mxu0 0.0
    %v569 = vand.u32 %v78, 4294901760
    %570 = vmatpush1.msra.mxu0 %v569
    %571 = vmatprep.subr.mxu0 0.0
    %572 = vmatpush2.msra.mxu0 0.0
    %573 = vmatprep.subr.mxu0 0.0
    %574 = vmatpush2.msra.mxu0 0.0
    %575 = vmatprep.subr.mxu0 0.0
    %576 = vmatpush2.msra.mxu0 0.0
    %577 = vmatprep.subr.mxu0 0.0
    %578 = vmatpush2.msra.mxu0 0.0
    %579 = vmatprep.subr.mxu0 0.0
    %580 = vmatpush2.msra.mxu0 0.0
    %581 = vmatprep.subr.mxu0 0.0
    %582 = vmatpush2.msra.mxu0 0.0
    %583 = vmatprep.subr.mxu0 0.0
    %584 = vmatpush2.msra.mxu0 0.0
    %585 = vmatprep.subr.mxu0 0.0
    %586 = vmatpush2.msra.mxu0 0.0
    %587 = vmatprep.subr.mxu0 0.0
    %588 = vmatpush2.msra.mxu0 0.0
    %589 = vmatprep.subr.mxu0 0.0
    %590 = vmatpush2.msra.mxu0 0.0
    %591 = vmatprep.subr.mxu0 0.0
    %592 = vmatpush2.msra.mxu0 0.0
    %593 = vmatprep.subr.mxu0 0.0
    %594 = vmatpush2.msra.mxu0 0.0
    %595 = vmatprep.subr.mxu0 0.0
    %596 = vmatpush2.msra.mxu0 0.0
    %597 = vmatprep.subr.mxu0 0.0
    %598 = vmatpush2.msra.mxu0 0.0
    %599 = vmatprep.subr.mxu0 0.0
    %600 = vmatpush2.msra.mxu0 0.0
    %601 = vmatprep.subr.mxu0 0.0
    %602 = vmatpush2.msra.mxu0 0.0
    %603 = vmatprep.mubr.f32.mxu0 0.0
    %v604 = vand.u32 %v83, 4294901760
    %605 = vmatmul.mubr.f32.gmra.mxu0 %v604
    %v606 = vpop.f32.mrf.mxu0
    %v607 = vadd.f32 %v526, %v606
    %v608 = vpop.f32.mrf.mxu0
    %609 = vmatprep.mubr.f32.mxu0 0.0
    %v610 = vand.u32 %v86, 4294901760
    %611 = vmatmul.mubr.f32.gmra.mxu0 %v610
    %v612 = vpop.f32.mrf.mxu0
    %v613 = vadd.f32 %v532, %v612
    %v614 = vpop.f32.mrf.mxu0
    %615 = vdwg.mxu0
    %v616 = vld [vmem:[%s2] sm:$0xf]
    %v617 = vlaneseq
    %v618 = vshrl.u32 %v617, 7
    %v619 = vadd.s32 %v618, 8
    %v620 = vlaneseq
    %v621 = vand.u32 %v620, 127
    %v622 = vand.u32 %v618, 7
    %v623 = vand.u32 %v619, 7
    %v624 = vlaneseq
    %v625 = vshrl.u32 %v624, 7
    %v626 = vsub.s32 0, %v625
    %v627 = vrot.slane %v35, %v626
    %v628 = vsub.s32 %v618, %v621
    %v629 = vsub.s32 %v619, %v621
    %vm630 = vcmp.eq.s32.totalorder %v628, 3
    %vm631 = vcmp.eq.s32.totalorder %v629, 3
    %vm632 = vcmp.ge.s32.totalorder %v622, 3
    %vm633 = vcmp.ge.s32.totalorder %v623, 3
    %vm634 = vmand %vm630, %vm632
    %vm635 = vmand %vm631, %vm633
    %v636 = vsel %vm634, 1.0, 0.0
    %v637 = vsel %vm635, 1.0, 0.0
    %vm638 = vcmask 130048
    %v640 = vsel %vm638, %v636, 0
    %v643 = vsel %vm638, %v637, 0
    %645 = vmatprep.subr.mxu0 0.0
    %646 = vmatpush1.msra.mxu0 0.0
    %647 = vmatprep.subr.mxu0 0.0
    %648 = vmatpush1.msra.mxu0 0.0
    %649 = vmatprep.subr.mxu0 0.0
    %650 = vmatpush1.msra.mxu0 0.0
    %651 = vmatprep.subr.mxu0 0.0
    %652 = vmatpush1.msra.mxu0 0.0
    %653 = vmatprep.subr.mxu0 0.0
    %654 = vmatpush1.msra.mxu0 0.0
    %655 = vmatprep.subr.mxu0 0.0
    %656 = vmatpush1.msra.mxu0 0.0
    %657 = vmatprep.subr.mxu0 0.0
    %658 = vmatpush1.msra.mxu0 0.0
    %659 = vmatprep.subr.mxu0 0.0
    %660 = vmatpush1.msra.mxu0 0.0
    %661 = vmatprep.subr.mxu0 0.0
    %662 = vmatpush1.msra.mxu0 0.0
    %663 = vmatprep.subr.mxu0 0.0
    %664 = vmatpush1.msra.mxu0 0.0
    %665 = vmatprep.subr.mxu0 0.0
    %666 = vmatpush1.msra.mxu0 0.0
    %667 = vmatprep.subr.mxu0 0.0
    %668 = vmatpush1.msra.mxu0 0.0
    %669 = vmatprep.subr.mxu0 0.0
    %670 = vmatpush1.msra.mxu0 0.0
    %671 = vmatprep.subr.mxu0 0.0
    %672 = vmatpush1.msra.mxu0 0.0
    %673 = vmatprep.subr.mxu0 0.0
    %v674 = vand.u32 %v613, 4294901760
    %675 = vmatpush1.msra.mxu0 %v674
    %676 = vmatprep.subr.mxu0 0.0
    %v677 = vand.u32 %v607, 4294901760
    %678 = vmatpush1.msra.mxu0 %v677
    %679 = vmatprep.subr.mxu0 0.0
    %680 = vmatpush2.msra.mxu0 0.0
    %681 = vmatprep.subr.mxu0 0.0
    %682 = vmatpush2.msra.mxu0 0.0
    %683 = vmatprep.subr.mxu0 0.0
    %684 = vmatpush2.msra.mxu0 0.0
    %685 = vmatprep.subr.mxu0 0.0
    %686 = vmatpush2.msra.mxu0 0.0
    %687 = vmatprep.subr.mxu0 0.0
    %688 = vmatpush2.msra.mxu0 0.0
    %689 = vmatprep.subr.mxu0 0.0
    %690 = vmatpush2.msra.mxu0 0.0
    %691 = vmatprep.subr.mxu0 0.0
    %692 = vmatpush2.msra.mxu0 0.0
    %693 = vmatprep.subr.mxu0 0.0
    %694 = vmatpush2.msra.mxu0 0.0
    %695 = vmatprep.subr.mxu0 0.0
    %696 = vmatpush2.msra.mxu0 0.0
    %697 = vmatprep.subr.mxu0 0.0
    %698 = vmatpush2.msra.mxu0 0.0
    %699 = vmatprep.subr.mxu0 0.0
    %700 = vmatpush2.msra.mxu0 0.0
    %701 = vmatprep.subr.mxu0 0.0
    %702 = vmatpush2.msra.mxu0 0.0
    %703 = vmatprep.subr.mxu0 0.0
    %704 = vmatpush2.msra.mxu0 0.0
    %705 = vmatprep.subr.mxu0 0.0
    %706 = vmatpush2.msra.mxu0 0.0
    %707 = vmatprep.subr.mxu0 0.0
    %708 = vmatpush2.msra.mxu0 0.0
    %709 = vmatprep.subr.mxu0 0.0
    %710 = vmatpush2.msra.mxu0 0.0
    %711 = vmatprep.mubr.f32.mxu0 0.0
    %v712 = vand.u32 %v640, 4294901760
    %v713 = vsub.f32 %v640, %v712
    %v714 = vand.u32 %v713, 4294901760
    %v715 = vsub.f32 %v713, %v714
    %v716 = vand.u32 %v715, 4294901760
    %717 = vmatmul.mubr.f32.gmra.mxu0 %v716
    %v718 = vpop.f32.mrf.mxu0
    %v719 = vadd.f32 0.0, %v718
    %v720 = vpop.f32.mrf.mxu0
    %721 = vmatprep.mubr.f32.mxu0 0.0
    %v722 = vand.u32 %v643, 4294901760
    %v723 = vsub.f32 %v643, %v722
    %v724 = vand.u32 %v723, 4294901760
    %v725 = vsub.f32 %v723, %v724
    %v726 = vand.u32 %v725, 4294901760
    %727 = vmatmul.mubr.f32.gmra.mxu0 %v726
    %v728 = vpop.f32.mrf.mxu0
    %v729 = vadd.f32 0.0, %v728
    %v730 = vpop.f32.mrf.mxu0
    %731 = vdwg.mxu0
    %732 = vmatprep.subr.mxu0 0.0
    %733 = vmatpush1.msra.mxu0 0.0
    %734 = vmatprep.subr.mxu0 0.0
    %735 = vmatpush1.msra.mxu0 0.0
    %736 = vmatprep.subr.mxu0 0.0
    %737 = vmatpush1.msra.mxu0 0.0
    %738 = vmatprep.subr.mxu0 0.0
    %739 = vmatpush1.msra.mxu0 0.0
    %740 = vmatprep.subr.mxu0 0.0
    %741 = vmatpush1.msra.mxu0 0.0
    %742 = vmatprep.subr.mxu0 0.0
    %743 = vmatpush1.msra.mxu0 0.0
    %744 = vmatprep.subr.mxu0 0.0
    %745 = vmatpush1.msra.mxu0 0.0
    %746 = vmatprep.subr.mxu0 0.0
    %747 = vmatpush1.msra.mxu0 0.0
    %748 = vmatprep.subr.mxu0 0.0
    %749 = vmatpush1.msra.mxu0 0.0
    %750 = vmatprep.subr.mxu0 0.0
    %751 = vmatpush1.msra.mxu0 0.0
    %752 = vmatprep.subr.mxu0 0.0
    %753 = vmatpush1.msra.mxu0 0.0
    %754 = vmatprep.subr.mxu0 0.0
    %755 = vmatpush1.msra.mxu0 0.0
    %756 = vmatprep.subr.mxu0 0.0
    %757 = vmatpush1.msra.mxu0 0.0
    %758 = vmatprep.subr.mxu0 0.0
    %759 = vmatpush1.msra.mxu0 0.0
    %760 = vmatprep.subr.mxu0 0.0
    %v761 = vand.u32 %v613, 4294901760
    %v762 = vsub.f32 %v613, %v761
    %v763 = vand.u32 %v762, 4294901760
    %v764 = vsub.f32 %v762, %v763
    %v765 = vand.u32 %v764, 4294901760
    %766 = vmatpush1.msra.mxu0 %v765
    %767 = vmatprep.subr.mxu0 0.0
    %v768 = vand.u32 %v607, 4294901760
    %v769 = vsub.f32 %v607, %v768
    %v770 = vand.u32 %v769, 4294901760
    %v771 = vsub.f32 %v769, %v770
    %v772 = vand.u32 %v771, 4294901760
    %773 = vmatpush1.msra.mxu0 %v772
    %774 = vmatprep.subr.mxu0 0.0
    %775 = vmatpush2.msra.mxu0 0.0
    %776 = vmatprep.subr.mxu0 0.0
    %777 = vmatpush2.msra.mxu0 0.0
    %778 = vmatprep.subr.mxu0 0.0
    %779 = vmatpush2.msra.mxu0 0.0
    %780 = vmatprep.subr.mxu0 0.0
    %781 = vmatpush2.msra.mxu0 0.0
    %782 = vmatprep.subr.mxu0 0.0
    %783 = vmatpush2.msra.mxu0 0.0
    %784 = vmatprep.subr.mxu0 0.0
    %785 = vmatpush2.msra.mxu0 0.0
    %786 = vmatprep.subr.mxu0 0.0
    %787 = vmatpush2.msra.mxu0 0.0
    %788 = vmatprep.subr.mxu0 0.0
    %789 = vmatpush2.msra.mxu0 0.0
    %790 = vmatprep.subr.mxu0 0.0
    %791 = vmatpush2.msra.mxu0 0.0
    %792 = vmatprep.subr.mxu0 0.0
    %793 = vmatpush2.msra.mxu0 0.0
    %794 = vmatprep.subr.mxu0 0.0
    %795 = vmatpush2.msra.mxu0 0.0
    %796 = vmatprep.subr.mxu0 0.0
    %797 = vmatpush2.msra.mxu0 0.0
    %798 = vmatprep.subr.mxu0 0.0
    %799 = vmatpush2.msra.mxu0 0.0
    %800 = vmatprep.subr.mxu0 0.0
    %801 = vmatpush2.msra.mxu0 0.0
    %802 = vmatprep.subr.mxu0 0.0
    %803 = vmatpush2.msra.mxu0 0.0
    %804 = vmatprep.subr.mxu0 0.0
    %805 = vmatpush2.msra.mxu0 0.0
    %806 = vmatprep.mubr.f32.mxu0 0.0
    %v807 = vand.u32 %v640, 4294901760
    %808 = vmatmul.mubr.f32.gmra.mxu0 %v807
    %v809 = vpop.f32.mrf.mxu0
    %v810 = vadd.f32 %v719, %v809
    %v811 = vpop.f32.mrf.mxu0
    %812 = vmatprep.mubr.f32.mxu0 0.0
    %v813 = vand.u32 %v643, 4294901760
    %814 = vmatmul.mubr.f32.gmra.mxu0 %v813
    %v815 = vpop.f32.mrf.mxu0
    %v816 = vadd.f32 %v729, %v815
    %v817 = vpop.f32.mrf.mxu0
    %818 = vdwg.mxu0
    %819 = vmatprep.subr.mxu0 0.0
    %820 = vmatpush1.msra.mxu0 0.0
    %821 = vmatprep.subr.mxu0 0.0
    %822 = vmatpush1.msra.mxu0 0.0
    %823 = vmatprep.subr.mxu0 0.0
    %824 = vmatpush1.msra.mxu0 0.0
    %825 = vmatprep.subr.mxu0 0.0
    %826 = vmatpush1.msra.mxu0 0.0
    %827 = vmatprep.subr.mxu0 0.0
    %828 = vmatpush1.msra.mxu0 0.0
    %829 = vmatprep.subr.mxu0 0.0
    %830 = vmatpush1.msra.mxu0 0.0
    %831 = vmatprep.subr.mxu0 0.0
    %832 = vmatpush1.msra.mxu0 0.0
    %833 = vmatprep.subr.mxu0 0.0
    %834 = vmatpush1.msra.mxu0 0.0
    %835 = vmatprep.subr.mxu0 0.0
    %836 = vmatpush1.msra.mxu0 0.0
    %837 = vmatprep.subr.mxu0 0.0
    %838 = vmatpush1.msra.mxu0 0.0
    %839 = vmatprep.subr.mxu0 0.0
    %840 = vmatpush1.msra.mxu0 0.0
    %841 = vmatprep.subr.mxu0 0.0
    %842 = vmatpush1.msra.mxu0 0.0
    %843 = vmatprep.subr.mxu0 0.0
    %844 = vmatpush1.msra.mxu0 0.0
    %845 = vmatprep.subr.mxu0 0.0
    %846 = vmatpush1.msra.mxu0 0.0
    %847 = vmatprep.subr.mxu0 0.0
    %v848 = vand.u32 %v613, 4294901760
    %v849 = vsub.f32 %v613, %v848
    %850 = vmatpush1.msra.mxu0 %v849
    %851 = vmatprep.subr.mxu0 0.0
    %v852 = vand.u32 %v607, 4294901760
    %v853 = vsub.f32 %v607, %v852
    %854 = vmatpush1.msra.mxu0 %v853
    %855 = vmatprep.subr.mxu0 0.0
    %856 = vmatpush2.msra.mxu0 0.0
    %857 = vmatprep.subr.mxu0 0.0
    %858 = vmatpush2.msra.mxu0 0.0
    %859 = vmatprep.subr.mxu0 0.0
    %860 = vmatpush2.msra.mxu0 0.0
    %861 = vmatprep.subr.mxu0 0.0
    %862 = vmatpush2.msra.mxu0 0.0
    %863 = vmatprep.subr.mxu0 0.0
    %864 = vmatpush2.msra.mxu0 0.0
    %865 = vmatprep.subr.mxu0 0.0
    %866 = vmatpush2.msra.mxu0 0.0
    %867 = vmatprep.subr.mxu0 0.0
    %868 = vmatpush2.msra.mxu0 0.0
    %869 = vmatprep.subr.mxu0 0.0
    %870 = vmatpush2.msra.mxu0 0.0
    %871 = vmatprep.subr.mxu0 0.0
    %872 = vmatpush2.msra.mxu0 0.0
    %873 = vmatprep.subr.mxu0 0.0
    %874 = vmatpush2.msra.mxu0 0.0
    %875 = vmatprep.subr.mxu0 0.0
    %876 = vmatpush2.msra.mxu0 0.0
    %877 = vmatprep.subr.mxu0 0.0
    %878 = vmatpush2.msra.mxu0 0.0
    %879 = vmatprep.subr.mxu0 0.0
    %880 = vmatpush2.msra.mxu0 0.0
    %881 = vmatprep.subr.mxu0 0.0
    %882 = vmatpush2.msra.mxu0 0.0
    %883 = vmatprep.subr.mxu0 0.0
    %884 = vmatpush2.msra.mxu0 0.0
    %885 = vmatprep.subr.mxu0 0.0
    %886 = vmatpush2.msra.mxu0 0.0
    %887 = vmatprep.mubr.f32.mxu0 0.0
    %v888 = vand.u32 %v640, 4294901760
    %v889 = vsub.f32 %v640, %v888
    %890 = vmatmul.mubr.f32.gmra.mxu0 %v889
    %v891 = vpop.f32.mrf.mxu0
    %v892 = vadd.f32 %v810, %v891
    %v893 = vpop.f32.mrf.mxu0
    %894 = vmatprep.mubr.f32.mxu0 0.0
    %v895 = vand.u32 %v643, 4294901760
    %v896 = vsub.f32 %v643, %v895
    %897 = vmatmul.mubr.f32.gmra.mxu0 %v896
    %v898 = vpop.f32.mrf.mxu0
    %v899 = vadd.f32 %v816, %v898
    %v900 = vpop.f32.mrf.mxu0
    %901 = vdwg.mxu0
    %902 = vmatprep.subr.mxu0 0.0
    %903 = vmatpush1.msra.mxu0 0.0
    %904 = vmatprep.subr.mxu0 0.0
    %905 = vmatpush1.msra.mxu0 0.0
    %906 = vmatprep.subr.mxu0 0.0
    %907 = vmatpush1.msra.mxu0 0.0
    %908 = vmatprep.subr.mxu0 0.0
    %909 = vmatpush1.msra.mxu0 0.0
    %910 = vmatprep.subr.mxu0 0.0
    %911 = vmatpush1.msra.mxu0 0.0
    %912 = vmatprep.subr.mxu0 0.0
    %913 = vmatpush1.msra.mxu0 0.0
    %914 = vmatprep.subr.mxu0 0.0
    %915 = vmatpush1.msra.mxu0 0.0
    %916 = vmatprep.subr.mxu0 0.0
    %917 = vmatpush1.msra.mxu0 0.0
    %918 = vmatprep.subr.mxu0 0.0
    %919 = vmatpush1.msra.mxu0 0.0
    %920 = vmatprep.subr.mxu0 0.0
    %921 = vmatpush1.msra.mxu0 0.0
    %922 = vmatprep.subr.mxu0 0.0
    %923 = vmatpush1.msra.mxu0 0.0
    %924 = vmatprep.subr.mxu0 0.0
    %925 = vmatpush1.msra.mxu0 0.0
    %926 = vmatprep.subr.mxu0 0.0
    %927 = vmatpush1.msra.mxu0 0.0
    %928 = vmatprep.subr.mxu0 0.0
    %929 = vmatpush1.msra.mxu0 0.0
    %930 = vmatprep.subr.mxu0 0.0
    %v931 = vand.u32 %v613, 4294901760
    %932 = vmatpush1.msra.mxu0 %v931
    %933 = vmatprep.subr.mxu0 0.0
    %v934 = vand.u32 %v607, 4294901760
    %935 = vmatpush1.msra.mxu0 %v934
    %936 = vmatprep.subr.mxu0 0.0
    %937 = vmatpush2.msra.mxu0 0.0
    %938 = vmatprep.subr.mxu0 0.0
    %939 = vmatpush2.msra.mxu0 0.0
    %940 = vmatprep.subr.mxu0 0.0
    %941 = vmatpush2.msra.mxu0 0.0
    %942 = vmatprep.subr.mxu0 0.0
    %943 = vmatpush2.msra.mxu0 0.0
    %944 = vmatprep.subr.mxu0 0.0
    %945 = vmatpush2.msra.mxu0 0.0
    %946 = vmatprep.subr.mxu0 0.0
    %947 = vmatpush2.msra.mxu0 0.0
    %948 = vmatprep.subr.mxu0 0.0
    %949 = vmatpush2.msra.mxu0 0.0
    %950 = vmatprep.subr.mxu0 0.0
    %951 = vmatpush2.msra.mxu0 0.0
    %952 = vmatprep.subr.mxu0 0.0
    %953 = vmatpush2.msra.mxu0 0.0
    %954 = vmatprep.subr.mxu0 0.0
    %955 = vmatpush2.msra.mxu0 0.0
    %956 = vmatprep.subr.mxu0 0.0
    %957 = vmatpush2.msra.mxu0 0.0
    %958 = vmatprep.subr.mxu0 0.0
    %959 = vmatpush2.msra.mxu0 0.0
    %960 = vmatprep.subr.mxu0 0.0
    %961 = vmatpush2.msra.mxu0 0.0
    %962 = vmatprep.subr.mxu0 0.0
    %963 = vmatpush2.msra.mxu0 0.0
    %964 = vmatprep.subr.mxu0 0.0
    %965 = vmatpush2.msra.mxu0 0.0
    %966 = vmatprep.subr.mxu0 0.0
    %967 = vmatpush2.msra.mxu0 0.0
    %968 = vmatprep.mubr.f32.mxu0 0.0
    %v969 = vand.u32 %v640, 4294901760
    %v970 = vsub.f32 %v640, %v969
    %v971 = vand.u32 %v970, 4294901760
    %972 = vmatmul.mubr.f32.gmra.mxu0 %v971
    %v973 = vpop.f32.mrf.mxu0
    %v974 = vadd.f32 %v892, %v973
    %v975 = vpop.f32.mrf.mxu0
    %976 = vmatprep.mubr.f32.mxu0 0.0
    %v977 = vand.u32 %v643, 4294901760
    %v978 = vsub.f32 %v643, %v977
    %v979 = vand.u32 %v978, 4294901760
    %980 = vmatmul.mubr.f32.gmra.mxu0 %v979
    %v981 = vpop.f32.mrf.mxu0
    %v982 = vadd.f32 %v899, %v981
    %v983 = vpop.f32.mrf.mxu0
    %984 = vdwg.mxu0
    %985 = vmatprep.subr.mxu0 0.0
    %986 = vmatpush1.msra.mxu0 0.0
    %987 = vmatprep.subr.mxu0 0.0
    %988 = vmatpush1.msra.mxu0 0.0
    %989 = vmatprep.subr.mxu0 0.0
    %990 = vmatpush1.msra.mxu0 0.0
    %991 = vmatprep.subr.mxu0 0.0
    %992 = vmatpush1.msra.mxu0 0.0
    %993 = vmatprep.subr.mxu0 0.0
    %994 = vmatpush1.msra.mxu0 0.0
    %995 = vmatprep.subr.mxu0 0.0
    %996 = vmatpush1.msra.mxu0 0.0
    %997 = vmatprep.subr.mxu0 0.0
    %998 = vmatpush1.msra.mxu0 0.0
    %999 = vmatprep.subr.mxu0 0.0
    %1000 = vmatpush1.msra.mxu0 0.0
    %1001 = vmatprep.subr.mxu0 0.0
    %1002 = vmatpush1.msra.mxu0 0.0
    %1003 = vmatprep.subr.mxu0 0.0
    %1004 = vmatpush1.msra.mxu0 0.0
    %1005 = vmatprep.subr.mxu0 0.0
    %1006 = vmatpush1.msra.mxu0 0.0
    %1007 = vmatprep.subr.mxu0 0.0
    %1008 = vmatpush1.msra.mxu0 0.0
    %1009 = vmatprep.subr.mxu0 0.0
    %1010 = vmatpush1.msra.mxu0 0.0
    %1011 = vmatprep.subr.mxu0 0.0
    %1012 = vmatpush1.msra.mxu0 0.0
    %1013 = vmatprep.subr.mxu0 0.0
    %v1014 = vand.u32 %v613, 4294901760
    %v1015 = vsub.f32 %v613, %v1014
    %v1016 = vand.u32 %v1015, 4294901760
    %1017 = vmatpush1.msra.mxu0 %v1016
    %1018 = vmatprep.subr.mxu0 0.0
    %v1019 = vand.u32 %v607, 4294901760
    %v1020 = vsub.f32 %v607, %v1019
    %v1021 = vand.u32 %v1020, 4294901760
    %1022 = vmatpush1.msra.mxu0 %v1021
    %1023 = vmatprep.subr.mxu0 0.0
    %1024 = vmatpush2.msra.mxu0 0.0
    %1025 = vmatprep.subr.mxu0 0.0
    %1026 = vmatpush2.msra.mxu0 0.0
    %1027 = vmatprep.subr.mxu0 0.0
    %1028 = vmatpush2.msra.mxu0 0.0
    %1029 = vmatprep.subr.mxu0 0.0
    %1030 = vmatpush2.msra.mxu0 0.0
    %1031 = vmatprep.subr.mxu0 0.0
    %1032 = vmatpush2.msra.mxu0 0.0
    %1033 = vmatprep.subr.mxu0 0.0
    %1034 = vmatpush2.msra.mxu0 0.0
    %1035 = vmatprep.subr.mxu0 0.0
    %1036 = vmatpush2.msra.mxu0 0.0
    %1037 = vmatprep.subr.mxu0 0.0
    %1038 = vmatpush2.msra.mxu0 0.0
    %1039 = vmatprep.subr.mxu0 0.0
    %1040 = vmatpush2.msra.mxu0 0.0
    %1041 = vmatprep.subr.mxu0 0.0
    %1042 = vmatpush2.msra.mxu0 0.0
    %1043 = vmatprep.subr.mxu0 0.0
    %1044 = vmatpush2.msra.mxu0 0.0
    %1045 = vmatprep.subr.mxu0 0.0
    %1046 = vmatpush2.msra.mxu0 0.0
    %1047 = vmatprep.subr.mxu0 0.0
    %1048 = vmatpush2.msra.mxu0 0.0
    %1049 = vmatprep.subr.mxu0 0.0
    %1050 = vmatpush2.msra.mxu0 0.0
    %1051 = vmatprep.subr.mxu0 0.0
    %1052 = vmatpush2.msra.mxu0 0.0
    %1053 = vmatprep.subr.mxu0 0.0
    %1054 = vmatpush2.msra.mxu0 0.0
    %1055 = vmatprep.mubr.f32.mxu0 0.0
    %v1056 = vand.u32 %v640, 4294901760
    %1057 = vmatmul.mubr.f32.gmra.mxu0 %v1056
    %v1058 = vpop.f32.mrf.mxu0
    %v1059 = vadd.f32 %v974, %v1058
    %v1060 = vpop.f32.mrf.mxu0
    %1061 = vmatprep.mubr.f32.mxu0 0.0
    %v1062 = vand.u32 %v643, 4294901760
    %1063 = vmatmul.mubr.f32.gmra.mxu0 %v1062
    %v1064 = vpop.f32.mrf.mxu0
    %v1065 = vadd.f32 %v982, %v1064
    %v1066 = vpop.f32.mrf.mxu0
    %1067 = vdwg.mxu0
    %1068 = vmatprep.subr.mxu0 0.0
    %1069 = vmatpush1.msra.mxu0 0.0
    %1070 = vmatprep.subr.mxu0 0.0
    %1071 = vmatpush1.msra.mxu0 0.0
    %1072 = vmatprep.subr.mxu0 0.0
    %1073 = vmatpush1.msra.mxu0 0.0
    %1074 = vmatprep.subr.mxu0 0.0
    %1075 = vmatpush1.msra.mxu0 0.0
    %1076 = vmatprep.subr.mxu0 0.0
    %1077 = vmatpush1.msra.mxu0 0.0
    %1078 = vmatprep.subr.mxu0 0.0
    %1079 = vmatpush1.msra.mxu0 0.0
    %1080 = vmatprep.subr.mxu0 0.0
    %1081 = vmatpush1.msra.mxu0 0.0
    %1082 = vmatprep.subr.mxu0 0.0
    %1083 = vmatpush1.msra.mxu0 0.0
    %1084 = vmatprep.subr.mxu0 0.0
    %1085 = vmatpush1.msra.mxu0 0.0
    %1086 = vmatprep.subr.mxu0 0.0
    %1087 = vmatpush1.msra.mxu0 0.0
    %1088 = vmatprep.subr.mxu0 0.0
    %1089 = vmatpush1.msra.mxu0 0.0
    %1090 = vmatprep.subr.mxu0 0.0
    %1091 = vmatpush1.msra.mxu0 0.0
    %1092 = vmatprep.subr.mxu0 0.0
    %1093 = vmatpush1.msra.mxu0 0.0
    %1094 = vmatprep.subr.mxu0 0.0
    %1095 = vmatpush1.msra.mxu0 0.0
    %1096 = vmatprep.subr.mxu0 0.0
    %v1097 = vand.u32 %v613, 4294901760
    %1098 = vmatpush1.msra.mxu0 %v1097
    %1099 = vmatprep.subr.mxu0 0.0
    %v1100 = vand.u32 %v607, 4294901760
    %1101 = vmatpush1.msra.mxu0 %v1100
    %1102 = vmatprep.subr.mxu0 0.0
    %1103 = vmatpush2.msra.mxu0 0.0
    %1104 = vmatprep.subr.mxu0 0.0
    %1105 = vmatpush2.msra.mxu0 0.0
    %1106 = vmatprep.subr.mxu0 0.0
    %1107 = vmatpush2.msra.mxu0 0.0
    %1108 = vmatprep.subr.mxu0 0.0
    %1109 = vmatpush2.msra.mxu0 0.0
    %1110 = vmatprep.subr.mxu0 0.0
    %1111 = vmatpush2.msra.mxu0 0.0
    %1112 = vmatprep.subr.mxu0 0.0
    %1113 = vmatpush2.msra.mxu0 0.0
    %1114 = vmatprep.subr.mxu0 0.0
    %1115 = vmatpush2.msra.mxu0 0.0
    %1116 = vmatprep.subr.mxu0 0.0
    %1117 = vmatpush2.msra.mxu0 0.0
    %1118 = vmatprep.subr.mxu0 0.0
    %1119 = vmatpush2.msra.mxu0 0.0
    %1120 = vmatprep.subr.mxu0 0.0
    %1121 = vmatpush2.msra.mxu0 0.0
    %1122 = vmatprep.subr.mxu0 0.0
    %1123 = vmatpush2.msra.mxu0 0.0
    %1124 = vmatprep.subr.mxu0 0.0
    %1125 = vmatpush2.msra.mxu0 0.0
    %1126 = vmatprep.subr.mxu0 0.0
    %1127 = vmatpush2.msra.mxu0 0.0
    %1128 = vmatprep.subr.mxu0 0.0
    %1129 = vmatpush2.msra.mxu0 0.0
    %1130 = vmatprep.subr.mxu0 0.0
    %1131 = vmatpush2.msra.mxu0 0.0
    %1132 = vmatprep.subr.mxu0 0.0
    %1133 = vmatpush2.msra.mxu0 0.0
    %1134 = vmatprep.mubr.f32.mxu0 0.0
    %v1135 = vand.u32 %v640, 4294901760
    %1136 = vmatmul.mubr.f32.gmra.mxu0 %v1135
    %v1137 = vpop.f32.mrf.mxu0
    %v1138 = vadd.f32 %v1059, %v1137
    %v1139 = vpop.f32.mrf.mxu0
    %1140 = vmatprep.mubr.f32.mxu0 0.0
    %v1141 = vand.u32 %v643, 4294901760
    %1142 = vmatmul.mubr.f32.gmra.mxu0 %v1141
    %v1143 = vpop.f32.mrf.mxu0
    %v1144 = vadd.f32 %v1065, %v1143
    %v1145 = vpop.f32.mrf.mxu0
    %1146 = vdwg.mxu0
    %v1147 = vlaneseq
    %v1148 = vshrl.u32 %v1147, 7
    %v1149 = vsub.s32 0, %v1148
    %v1150 = vrot.slane %v616, %v1149
    %v1151 = vmul.f32 %v1138, %v1150
    %v1152 = vmul.f32 %v1144, %v1150
    %v1153 = vadd.f32 %v627, %v1151
    %v1154 = vadd.f32 %v627, %v1152
    %vm1155 = vcmp.eq.s32.totalorder %v628, 2
    %vm1156 = vcmp.eq.s32.totalorder %v629, 2
    %vm1157 = vcmp.ge.s32.totalorder %v622, 2
    %vm1158 = vcmp.ge.s32.totalorder %v623, 2
    %vm1159 = vmand %vm1155, %vm1157
    %vm1160 = vmand %vm1156, %vm1158
    %v1161 = vsel %vm1159, 1.0, 0.0
    %v1162 = vsel %vm1160, 1.0, 0.0
    %v1164 = vsel %vm638, %v1161, 0
    %v1167 = vsel %vm638, %v1162, 0
    %1169 = vmatprep.subr.mxu0 0.0
    %1170 = vmatpush1.msra.mxu0 0.0
    %1171 = vmatprep.subr.mxu0 0.0
    %1172 = vmatpush1.msra.mxu0 0.0
    %1173 = vmatprep.subr.mxu0 0.0
    %1174 = vmatpush1.msra.mxu0 0.0
    %1175 = vmatprep.subr.mxu0 0.0
    %1176 = vmatpush1.msra.mxu0 0.0
    %1177 = vmatprep.subr.mxu0 0.0
    %1178 = vmatpush1.msra.mxu0 0.0
    %1179 = vmatprep.subr.mxu0 0.0
    %1180 = vmatpush1.msra.mxu0 0.0
    %1181 = vmatprep.subr.mxu0 0.0
    %1182 = vmatpush1.msra.mxu0 0.0
    %1183 = vmatprep.subr.mxu0 0.0
    %1184 = vmatpush1.msra.mxu0 0.0
    %1185 = vmatprep.subr.mxu0 0.0
    %1186 = vmatpush1.msra.mxu0 0.0
    %1187 = vmatprep.subr.mxu0 0.0
    %1188 = vmatpush1.msra.mxu0 0.0
    %1189 = vmatprep.subr.mxu0 0.0
    %1190 = vmatpush1.msra.mxu0 0.0
    %1191 = vmatprep.subr.mxu0 0.0
    %1192 = vmatpush1.msra.mxu0 0.0
    %1193 = vmatprep.subr.mxu0 0.0
    %1194 = vmatpush1.msra.mxu0 0.0
    %1195 = vmatprep.subr.mxu0 0.0
    %1196 = vmatpush1.msra.mxu0 0.0
    %1197 = vmatprep.subr.mxu0 0.0
    %v1198 = vand.u32 %v613, 4294901760
    %1199 = vmatpush1.msra.mxu0 %v1198
    %1200 = vmatprep.subr.mxu0 0.0
    %v1201 = vand.u32 %v607, 4294901760
    %1202 = vmatpush1.msra.mxu0 %v1201
    %1203 = vmatprep.subr.mxu0 0.0
    %1204 = vmatpush2.msra.mxu0 0.0
    %1205 = vmatprep.subr.mxu0 0.0
    %1206 = vmatpush2.msra.mxu0 0.0
    %1207 = vmatprep.subr.mxu0 0.0
    %1208 = vmatpush2.msra.mxu0 0.0
    %1209 = vmatprep.subr.mxu0 0.0
    %1210 = vmatpush2.msra.mxu0 0.0
    %1211 = vmatprep.subr.mxu0 0.0
    %1212 = vmatpush2.msra.mxu0 0.0
    %1213 = vmatprep.subr.mxu0 0.0
    %1214 = vmatpush2.msra.mxu0 0.0
    %1215 = vmatprep.subr.mxu0 0.0
    %1216 = vmatpush2.msra.mxu0 0.0
    %1217 = vmatprep.subr.mxu0 0.0
    %1218 = vmatpush2.msra.mxu0 0.0
    %1219 = vmatprep.subr.mxu0 0.0
    %1220 = vmatpush2.msra.mxu0 0.0
    %1221 = vmatprep.subr.mxu0 0.0
    %1222 = vmatpush2.msra.mxu0 0.0
    %1223 = vmatprep.subr.mxu0 0.0
    %1224 = vmatpush2.msra.mxu0 0.0
    %1225 = vmatprep.subr.mxu0 0.0
    %1226 = vmatpush2.msra.mxu0 0.0
    %1227 = vmatprep.subr.mxu0 0.0
    %1228 = vmatpush2.msra.mxu0 0.0
    %1229 = vmatprep.subr.mxu0 0.0
    %1230 = vmatpush2.msra.mxu0 0.0
    %1231 = vmatprep.subr.mxu0 0.0
    %1232 = vmatpush2.msra.mxu0 0.0
    %1233 = vmatprep.subr.mxu0 0.0
    %1234 = vmatpush2.msra.mxu0 0.0
    %1235 = vmatprep.mubr.f32.mxu0 0.0
    %v1236 = vand.u32 %v1164, 4294901760
    %v1237 = vsub.f32 %v1164, %v1236
    %v1238 = vand.u32 %v1237, 4294901760
    %v1239 = vsub.f32 %v1237, %v1238
    %v1240 = vand.u32 %v1239, 4294901760
    %1241 = vmatmul.mubr.f32.gmra.mxu0 %v1240
    %v1242 = vpop.f32.mrf.mxu0
    %v1243 = vadd.f32 0.0, %v1242
    %v1244 = vpop.f32.mrf.mxu0
    %1245 = vmatprep.mubr.f32.mxu0 0.0
    %v1246 = vand.u32 %v1167, 4294901760
    %v1247 = vsub.f32 %v1167, %v1246
    %v1248 = vand.u32 %v1247, 4294901760
    %v1249 = vsub.f32 %v1247, %v1248
    %v1250 = vand.u32 %v1249, 4294901760
    %1251 = vmatmul.mubr.f32.gmra.mxu0 %v1250
    %v1252 = vpop.f32.mrf.mxu0
    %v1253 = vadd.f32 0.0, %v1252
    %v1254 = vpop.f32.mrf.mxu0
    %1255 = vdwg.mxu0
    %1256 = vmatprep.subr.mxu0 0.0
    %1257 = vmatpush1.msra.mxu0 0.0
    %1258 = vmatprep.subr.mxu0 0.0
    %1259 = vmatpush1.msra.mxu0 0.0
    %1260 = vmatprep.subr.mxu0 0.0
    %1261 = vmatpush1.msra.mxu0 0.0
    %1262 = vmatprep.subr.mxu0 0.0
    %1263 = vmatpush1.msra.mxu0 0.0
    %1264 = vmatprep.subr.mxu0 0.0
    %1265 = vmatpush1.msra.mxu0 0.0
    %1266 = vmatprep.subr.mxu0 0.0
    %1267 = vmatpush1.msra.mxu0 0.0
    %1268 = vmatprep.subr.mxu0 0.0
    %1269 = vmatpush1.msra.mxu0 0.0
    %1270 = vmatprep.subr.mxu0 0.0
    %1271 = vmatpush1.msra.mxu0 0.0
    %1272 = vmatprep.subr.mxu0 0.0
    %1273 = vmatpush1.msra.mxu0 0.0
    %1274 = vmatprep.subr.mxu0 0.0
    %1275 = vmatpush1.msra.mxu0 0.0
    %1276 = vmatprep.subr.mxu0 0.0
    %1277 = vmatpush1.msra.mxu0 0.0
    %1278 = vmatprep.subr.mxu0 0.0
    %1279 = vmatpush1.msra.mxu0 0.0
    %1280 = vmatprep.subr.mxu0 0.0
    %1281 = vmatpush1.msra.mxu0 0.0
    %1282 = vmatprep.subr.mxu0 0.0
    %1283 = vmatpush1.msra.mxu0 0.0
    %1284 = vmatprep.subr.mxu0 0.0
    %v1285 = vand.u32 %v613, 4294901760
    %v1286 = vsub.f32 %v613, %v1285
    %v1287 = vand.u32 %v1286, 4294901760
    %v1288 = vsub.f32 %v1286, %v1287
    %v1289 = vand.u32 %v1288, 4294901760
    %1290 = vmatpush1.msra.mxu0 %v1289
    %1291 = vmatprep.subr.mxu0 0.0
    %v1292 = vand.u32 %v607, 4294901760
    %v1293 = vsub.f32 %v607, %v1292
    %v1294 = vand.u32 %v1293, 4294901760
    %v1295 = vsub.f32 %v1293, %v1294
    %v1296 = vand.u32 %v1295, 4294901760
    %1297 = vmatpush1.msra.mxu0 %v1296
    %1298 = vmatprep.subr.mxu0 0.0
    %1299 = vmatpush2.msra.mxu0 0.0
    %1300 = vmatprep.subr.mxu0 0.0
    %1301 = vmatpush2.msra.mxu0 0.0
    %1302 = vmatprep.subr.mxu0 0.0
    %1303 = vmatpush2.msra.mxu0 0.0
    %1304 = vmatprep.subr.mxu0 0.0
    %1305 = vmatpush2.msra.mxu0 0.0
    %1306 = vmatprep.subr.mxu0 0.0
    %1307 = vmatpush2.msra.mxu0 0.0
    %1308 = vmatprep.subr.mxu0 0.0
    %1309 = vmatpush2.msra.mxu0 0.0
    %1310 = vmatprep.subr.mxu0 0.0
    %1311 = vmatpush2.msra.mxu0 0.0
    %1312 = vmatprep.subr.mxu0 0.0
    %1313 = vmatpush2.msra.mxu0 0.0
    %1314 = vmatprep.subr.mxu0 0.0
    %1315 = vmatpush2.msra.mxu0 0.0
    %1316 = vmatprep.subr.mxu0 0.0
    %1317 = vmatpush2.msra.mxu0 0.0
    %1318 = vmatprep.subr.mxu0 0.0
    %1319 = vmatpush2.msra.mxu0 0.0
    %1320 = vmatprep.subr.mxu0 0.0
    %1321 = vmatpush2.msra.mxu0 0.0
    %1322 = vmatprep.subr.mxu0 0.0
    %1323 = vmatpush2.msra.mxu0 0.0
    %1324 = vmatprep.subr.mxu0 0.0
    %1325 = vmatpush2.msra.mxu0 0.0
    %1326 = vmatprep.subr.mxu0 0.0
    %1327 = vmatpush2.msra.mxu0 0.0
    %1328 = vmatprep.subr.mxu0 0.0
    %1329 = vmatpush2.msra.mxu0 0.0
    %1330 = vmatprep.mubr.f32.mxu0 0.0
    %v1331 = vand.u32 %v1164, 4294901760
    %1332 = vmatmul.mubr.f32.gmra.mxu0 %v1331
    %v1333 = vpop.f32.mrf.mxu0
    %v1334 = vadd.f32 %v1243, %v1333
    %v1335 = vpop.f32.mrf.mxu0
    %1336 = vmatprep.mubr.f32.mxu0 0.0
    %v1337 = vand.u32 %v1167, 4294901760
    %1338 = vmatmul.mubr.f32.gmra.mxu0 %v1337
    %v1339 = vpop.f32.mrf.mxu0
    %v1340 = vadd.f32 %v1253, %v1339
    %v1341 = vpop.f32.mrf.mxu0
    %1342 = vdwg.mxu0
    %1343 = vmatprep.subr.mxu0 0.0
    %1344 = vmatpush1.msra.mxu0 0.0
    %1345 = vmatprep.subr.mxu0 0.0
    %1346 = vmatpush1.msra.mxu0 0.0
    %1347 = vmatprep.subr.mxu0 0.0
    %1348 = vmatpush1.msra.mxu0 0.0
    %1349 = vmatprep.subr.mxu0 0.0
    %1350 = vmatpush1.msra.mxu0 0.0
    %1351 = vmatprep.subr.mxu0 0.0
    %1352 = vmatpush1.msra.mxu0 0.0
    %1353 = vmatprep.subr.mxu0 0.0
    %1354 = vmatpush1.msra.mxu0 0.0
    %1355 = vmatprep.subr.mxu0 0.0
    %1356 = vmatpush1.msra.mxu0 0.0
    %1357 = vmatprep.subr.mxu0 0.0
    %1358 = vmatpush1.msra.mxu0 0.0
    %1359 = vmatprep.subr.mxu0 0.0
    %1360 = vmatpush1.msra.mxu0 0.0
    %1361 = vmatprep.subr.mxu0 0.0
    %1362 = vmatpush1.msra.mxu0 0.0
    %1363 = vmatprep.subr.mxu0 0.0
    %1364 = vmatpush1.msra.mxu0 0.0
    %1365 = vmatprep.subr.mxu0 0.0
    %1366 = vmatpush1.msra.mxu0 0.0
    %1367 = vmatprep.subr.mxu0 0.0
    %1368 = vmatpush1.msra.mxu0 0.0
    %1369 = vmatprep.subr.mxu0 0.0
    %1370 = vmatpush1.msra.mxu0 0.0
    %1371 = vmatprep.subr.mxu0 0.0
    %v1372 = vand.u32 %v613, 4294901760
    %v1373 = vsub.f32 %v613, %v1372
    %1374 = vmatpush1.msra.mxu0 %v1373
    %1375 = vmatprep.subr.mxu0 0.0
    %v1376 = vand.u32 %v607, 4294901760
    %v1377 = vsub.f32 %v607, %v1376
    %1378 = vmatpush1.msra.mxu0 %v1377
    %1379 = vmatprep.subr.mxu0 0.0
    %1380 = vmatpush2.msra.mxu0 0.0
    %1381 = vmatprep.subr.mxu0 0.0
    %1382 = vmatpush2.msra.mxu0 0.0
    %1383 = vmatprep.subr.mxu0 0.0
    %1384 = vmatpush2.msra.mxu0 0.0
    %1385 = vmatprep.subr.mxu0 0.0
    %1386 = vmatpush2.msra.mxu0 0.0
    %1387 = vmatprep.subr.mxu0 0.0
    %1388 = vmatpush2.msra.mxu0 0.0
    %1389 = vmatprep.subr.mxu0 0.0
    %1390 = vmatpush2.msra.mxu0 0.0
    %1391 = vmatprep.subr.mxu0 0.0
    %1392 = vmatpush2.msra.mxu0 0.0
    %1393 = vmatprep.subr.mxu0 0.0
    %1394 = vmatpush2.msra.mxu0 0.0
    %1395 = vmatprep.subr.mxu0 0.0
    %1396 = vmatpush2.msra.mxu0 0.0
    %1397 = vmatprep.subr.mxu0 0.0
    %1398 = vmatpush2.msra.mxu0 0.0
    %1399 = vmatprep.subr.mxu0 0.0
    %1400 = vmatpush2.msra.mxu0 0.0
    %1401 = vmatprep.subr.mxu0 0.0
    %1402 = vmatpush2.msra.mxu0 0.0
    %1403 = vmatprep.subr.mxu0 0.0
    %1404 = vmatpush2.msra.mxu0 0.0
    %1405 = vmatprep.subr.mxu0 0.0
    %1406 = vmatpush2.msra.mxu0 0.0
    %1407 = vmatprep.subr.mxu0 0.0
    %1408 = vmatpush2.msra.mxu0 0.0
    %1409 = vmatprep.subr.mxu0 0.0
    %1410 = vmatpush2.msra.mxu0 0.0
    %1411 = vmatprep.mubr.f32.mxu0 0.0
    %v1412 = vand.u32 %v1164, 4294901760
    %v1413 = vsub.f32 %v1164, %v1412
    %1414 = vmatmul.mubr.f32.gmra.mxu0 %v1413
    %v1415 = vpop.f32.mrf.mxu0
    %v1416 = vadd.f32 %v1334, %v1415
    %v1417 = vpop.f32.mrf.mxu0
    %1418 = vmatprep.mubr.f32.mxu0 0.0
    %v1419 = vand.u32 %v1167, 4294901760
    %v1420 = vsub.f32 %v1167, %v1419
    %1421 = vmatmul.mubr.f32.gmra.mxu0 %v1420
    %v1422 = vpop.f32.mrf.mxu0
    %v1423 = vadd.f32 %v1340, %v1422
    %v1424 = vpop.f32.mrf.mxu0
    %1425 = vdwg.mxu0
    %1426 = vmatprep.subr.mxu0 0.0
    %1427 = vmatpush1.msra.mxu0 0.0
    %1428 = vmatprep.subr.mxu0 0.0
    %1429 = vmatpush1.msra.mxu0 0.0
    %1430 = vmatprep.subr.mxu0 0.0
    %1431 = vmatpush1.msra.mxu0 0.0
    %1432 = vmatprep.subr.mxu0 0.0
    %1433 = vmatpush1.msra.mxu0 0.0
    %1434 = vmatprep.subr.mxu0 0.0
    %1435 = vmatpush1.msra.mxu0 0.0
    %1436 = vmatprep.subr.mxu0 0.0
    %1437 = vmatpush1.msra.mxu0 0.0
    %1438 = vmatprep.subr.mxu0 0.0
    %1439 = vmatpush1.msra.mxu0 0.0
    %1440 = vmatprep.subr.mxu0 0.0
    %1441 = vmatpush1.msra.mxu0 0.0
    %1442 = vmatprep.subr.mxu0 0.0
    %1443 = vmatpush1.msra.mxu0 0.0
    %1444 = vmatprep.subr.mxu0 0.0
    %1445 = vmatpush1.msra.mxu0 0.0
    %1446 = vmatprep.subr.mxu0 0.0
    %1447 = vmatpush1.msra.mxu0 0.0
    %1448 = vmatprep.subr.mxu0 0.0
    %1449 = vmatpush1.msra.mxu0 0.0
    %1450 = vmatprep.subr.mxu0 0.0
    %1451 = vmatpush1.msra.mxu0 0.0
    %1452 = vmatprep.subr.mxu0 0.0
    %1453 = vmatpush1.msra.mxu0 0.0
    %1454 = vmatprep.subr.mxu0 0.0
    %v1455 = vand.u32 %v613, 4294901760
    %1456 = vmatpush1.msra.mxu0 %v1455
    %1457 = vmatprep.subr.mxu0 0.0
    %v1458 = vand.u32 %v607, 4294901760
    %1459 = vmatpush1.msra.mxu0 %v1458
    %1460 = vmatprep.subr.mxu0 0.0
    %1461 = vmatpush2.msra.mxu0 0.0
    %1462 = vmatprep.subr.mxu0 0.0
    %1463 = vmatpush2.msra.mxu0 0.0
    %1464 = vmatprep.subr.mxu0 0.0
    %1465 = vmatpush2.msra.mxu0 0.0
    %1466 = vmatprep.subr.mxu0 0.0
    %1467 = vmatpush2.msra.mxu0 0.0
    %1468 = vmatprep.subr.mxu0 0.0
    %1469 = vmatpush2.msra.mxu0 0.0
    %1470 = vmatprep.subr.mxu0 0.0
    %1471 = vmatpush2.msra.mxu0 0.0
    %1472 = vmatprep.subr.mxu0 0.0
    %1473 = vmatpush2.msra.mxu0 0.0
    %1474 = vmatprep.subr.mxu0 0.0
    %1475 = vmatpush2.msra.mxu0 0.0
    %1476 = vmatprep.subr.mxu0 0.0
    %1477 = vmatpush2.msra.mxu0 0.0
    %1478 = vmatprep.subr.mxu0 0.0
    %1479 = vmatpush2.msra.mxu0 0.0
    %1480 = vmatprep.subr.mxu0 0.0
    %1481 = vmatpush2.msra.mxu0 0.0
    %1482 = vmatprep.subr.mxu0 0.0
    %1483 = vmatpush2.msra.mxu0 0.0
    %1484 = vmatprep.subr.mxu0 0.0
    %1485 = vmatpush2.msra.mxu0 0.0
    %1486 = vmatprep.subr.mxu0 0.0
    %1487 = vmatpush2.msra.mxu0 0.0
    %1488 = vmatprep.subr.mxu0 0.0
    %1489 = vmatpush2.msra.mxu0 0.0
    %1490 = vmatprep.subr.mxu0 0.0
    %1491 = vmatpush2.msra.mxu0 0.0
    %1492 = vmatprep.mubr.f32.mxu0 0.0
    %v1493 = vand.u32 %v1164, 4294901760
    %v1494 = vsub.f32 %v1164, %v1493
    %v1495 = vand.u32 %v1494, 4294901760
    %1496 = vmatmul.mubr.f32.gmra.mxu0 %v1495
    %v1497 = vpop.f32.mrf.mxu0
    %v1498 = vadd.f32 %v1416, %v1497
    %v1499 = vpop.f32.mrf.mxu0
    %1500 = vmatprep.mubr.f32.mxu0 0.0
    %v1501 = vand.u32 %v1167, 4294901760
    %v1502 = vsub.f32 %v1167, %v1501
    %v1503 = vand.u32 %v1502, 4294901760
    %1504 = vmatmul.mubr.f32.gmra.mxu0 %v1503
    %v1505 = vpop.f32.mrf.mxu0
    %v1506 = vadd.f32 %v1423, %v1505
    %v1507 = vpop.f32.mrf.mxu0
    %1508 = vdwg.mxu0
    %1509 = vmatprep.subr.mxu0 0.0
    %1510 = vmatpush1.msra.mxu0 0.0
    %1511 = vmatprep.subr.mxu0 0.0
    %1512 = vmatpush1.msra.mxu0 0.0
    %1513 = vmatprep.subr.mxu0 0.0
    %1514 = vmatpush1.msra.mxu0 0.0
    %1515 = vmatprep.subr.mxu0 0.0
    %1516 = vmatpush1.msra.mxu0 0.0
    %1517 = vmatprep.subr.mxu0 0.0
    %1518 = vmatpush1.msra.mxu0 0.0
    %1519 = vmatprep.subr.mxu0 0.0
    %1520 = vmatpush1.msra.mxu0 0.0
    %1521 = vmatprep.subr.mxu0 0.0
    %1522 = vmatpush1.msra.mxu0 0.0
    %1523 = vmatprep.subr.mxu0 0.0
    %1524 = vmatpush1.msra.mxu0 0.0
    %1525 = vmatprep.subr.mxu0 0.0
    %1526 = vmatpush1.msra.mxu0 0.0
    %1527 = vmatprep.subr.mxu0 0.0
    %1528 = vmatpush1.msra.mxu0 0.0
    %1529 = vmatprep.subr.mxu0 0.0
    %1530 = vmatpush1.msra.mxu0 0.0
    %1531 = vmatprep.subr.mxu0 0.0
    %1532 = vmatpush1.msra.mxu0 0.0
    %1533 = vmatprep.subr.mxu0 0.0
    %1534 = vmatpush1.msra.mxu0 0.0
    %1535 = vmatprep.subr.mxu0 0.0
    %1536 = vmatpush1.msra.mxu0 0.0
    %1537 = vmatprep.subr.mxu0 0.0
    %v1538 = vand.u32 %v613, 4294901760
    %v1539 = vsub.f32 %v613, %v1538
    %v1540 = vand.u32 %v1539, 4294901760
    %1541 = vmatpush1.msra.mxu0 %v1540
    %1542 = vmatprep.subr.mxu0 0.0
    %v1543 = vand.u32 %v607, 4294901760
    %v1544 = vsub.f32 %v607, %v1543
    %v1545 = vand.u32 %v1544, 4294901760
    %1546 = vmatpush1.msra.mxu0 %v1545
    %1547 = vmatprep.subr.mxu0 0.0
    %1548 = vmatpush2.msra.mxu0 0.0
    %1549 = vmatprep.subr.mxu0 0.0
    %1550 = vmatpush2.msra.mxu0 0.0
    %1551 = vmatprep.subr.mxu0 0.0
    %1552 = vmatpush2.msra.mxu0 0.0
    %1553 = vmatprep.subr.mxu0 0.0
    %1554 = vmatpush2.msra.mxu0 0.0
    %1555 = vmatprep.subr.mxu0 0.0
    %1556 = vmatpush2.msra.mxu0 0.0
    %1557 = vmatprep.subr.mxu0 0.0
    %1558 = vmatpush2.msra.mxu0 0.0
    %1559 = vmatprep.subr.mxu0 0.0
    %1560 = vmatpush2.msra.mxu0 0.0
    %1561 = vmatprep.subr.mxu0 0.0
    %1562 = vmatpush2.msra.mxu0 0.0
    %1563 = vmatprep.subr.mxu0 0.0
    %1564 = vmatpush2.msra.mxu0 0.0
    %1565 = vmatprep.subr.mxu0 0.0
    %1566 = vmatpush2.msra.mxu0 0.0
    %1567 = vmatprep.subr.mxu0 0.0
    %1568 = vmatpush2.msra.mxu0 0.0
    %1569 = vmatprep.subr.mxu0 0.0
    %1570 = vmatpush2.msra.mxu0 0.0
    %1571 = vmatprep.subr.mxu0 0.0
    %1572 = vmatpush2.msra.mxu0 0.0
    %1573 = vmatprep.subr.mxu0 0.0
    %1574 = vmatpush2.msra.mxu0 0.0
    %1575 = vmatprep.subr.mxu0 0.0
    %1576 = vmatpush2.msra.mxu0 0.0
    %1577 = vmatprep.subr.mxu0 0.0
    %1578 = vmatpush2.msra.mxu0 0.0
    %1579 = vmatprep.mubr.f32.mxu0 0.0
    %v1580 = vand.u32 %v1164, 4294901760
    %1581 = vmatmul.mubr.f32.gmra.mxu0 %v1580
    %v1582 = vpop.f32.mrf.mxu0
    %v1583 = vadd.f32 %v1498, %v1582
    %v1584 = vpop.f32.mrf.mxu0
    %1585 = vmatprep.mubr.f32.mxu0 0.0
    %v1586 = vand.u32 %v1167, 4294901760
    %1587 = vmatmul.mubr.f32.gmra.mxu0 %v1586
    %v1588 = vpop.f32.mrf.mxu0
    %v1589 = vadd.f32 %v1506, %v1588
    %v1590 = vpop.f32.mrf.mxu0
    %1591 = vdwg.mxu0
    %1592 = vmatprep.subr.mxu0 0.0
    %1593 = vmatpush1.msra.mxu0 0.0
    %1594 = vmatprep.subr.mxu0 0.0
    %1595 = vmatpush1.msra.mxu0 0.0
    %1596 = vmatprep.subr.mxu0 0.0
    %1597 = vmatpush1.msra.mxu0 0.0
    %1598 = vmatprep.subr.mxu0 0.0
    %1599 = vmatpush1.msra.mxu0 0.0
    %1600 = vmatprep.subr.mxu0 0.0
    %1601 = vmatpush1.msra.mxu0 0.0
    %1602 = vmatprep.subr.mxu0 0.0
    %1603 = vmatpush1.msra.mxu0 0.0
    %1604 = vmatprep.subr.mxu0 0.0
    %1605 = vmatpush1.msra.mxu0 0.0
    %1606 = vmatprep.subr.mxu0 0.0
    %1607 = vmatpush1.msra.mxu0 0.0
    %1608 = vmatprep.subr.mxu0 0.0
    %1609 = vmatpush1.msra.mxu0 0.0
    %1610 = vmatprep.subr.mxu0 0.0
    %1611 = vmatpush1.msra.mxu0 0.0
    %1612 = vmatprep.subr.mxu0 0.0
    %1613 = vmatpush1.msra.mxu0 0.0
    %1614 = vmatprep.subr.mxu0 0.0
    %1615 = vmatpush1.msra.mxu0 0.0
    %1616 = vmatprep.subr.mxu0 0.0
    %1617 = vmatpush1.msra.mxu0 0.0
    %1618 = vmatprep.subr.mxu0 0.0
    %1619 = vmatpush1.msra.mxu0 0.0
    %1620 = vmatprep.subr.mxu0 0.0
    %v1621 = vand.u32 %v613, 4294901760
    %1622 = vmatpush1.msra.mxu0 %v1621
    %1623 = vmatprep.subr.mxu0 0.0
    %v1624 = vand.u32 %v607, 4294901760
    %1625 = vmatpush1.msra.mxu0 %v1624
    %1626 = vmatprep.subr.mxu0 0.0
    %1627 = vmatpush2.msra.mxu0 0.0
    %1628 = vmatprep.subr.mxu0 0.0
    %1629 = vmatpush2.msra.mxu0 0.0
    %1630 = vmatprep.subr.mxu0 0.0
    %1631 = vmatpush2.msra.mxu0 0.0
    %1632 = vmatprep.subr.mxu0 0.0
    %1633 = vmatpush2.msra.mxu0 0.0
    %1634 = vmatprep.subr.mxu0 0.0
    %1635 = vmatpush2.msra.mxu0 0.0
    %1636 = vmatprep.subr.mxu0 0.0
    %1637 = vmatpush2.msra.mxu0 0.0
    %1638 = vmatprep.subr.mxu0 0.0
    %1639 = vmatpush2.msra.mxu0 0.0
    %1640 = vmatprep.subr.mxu0 0.0
    %1641 = vmatpush2.msra.mxu0 0.0
    %1642 = vmatprep.subr.mxu0 0.0
    %1643 = vmatpush2.msra.mxu0 0.0
    %1644 = vmatprep.subr.mxu0 0.0
    %1645 = vmatpush2.msra.mxu0 0.0
    %1646 = vmatprep.subr.mxu0 0.0
    %1647 = vmatpush2.msra.mxu0 0.0
    %1648 = vmatprep.subr.mxu0 0.0
    %1649 = vmatpush2.msra.mxu0 0.0
    %1650 = vmatprep.subr.mxu0 0.0
    %1651 = vmatpush2.msra.mxu0 0.0
    %1652 = vmatprep.subr.mxu0 0.0
    %1653 = vmatpush2.msra.mxu0 0.0
    %1654 = vmatprep.subr.mxu0 0.0
    %1655 = vmatpush2.msra.mxu0 0.0
    %1656 = vmatprep.subr.mxu0 0.0
    %1657 = vmatpush2.msra.mxu0 0.0
    %1658 = vmatprep.mubr.f32.mxu0 0.0
    %v1659 = vand.u32 %v1164, 4294901760
    %1660 = vmatmul.mubr.f32.gmra.mxu0 %v1659
    %v1661 = vpop.f32.mrf.mxu0
    %v1662 = vadd.f32 %v1583, %v1661
    %v1663 = vpop.f32.mrf.mxu0
    %1664 = vmatprep.mubr.f32.mxu0 0.0
    %v1665 = vand.u32 %v1167, 4294901760
    %1666 = vmatmul.mubr.f32.gmra.mxu0 %v1665
    %v1667 = vpop.f32.mrf.mxu0
    %v1668 = vadd.f32 %v1589, %v1667
    %v1669 = vpop.f32.mrf.mxu0
    %1670 = vdwg.mxu0
    %v1671 = vlaneseq
    %v1672 = vshrl.u32 %v1671, 7
    %v1673 = vsub.s32 1, %v1672
    %v1674 = vrot.slane %v616, %v1673
    %v1675 = vmul.f32 %v1662, %v1674
    %v1676 = vmul.f32 %v1668, %v1674
    %v1677 = vadd.f32 %v1153, %v1675
    %v1678 = vadd.f32 %v1154, %v1676
    %vm1679 = vcmp.eq.s32.totalorder %v628, 1
    %vm1680 = vcmp.eq.s32.totalorder %v629, 1
    %vm1681 = vcmp.ge.s32.totalorder %v622, 1
    %vm1682 = vcmp.ge.s32.totalorder %v623, 1
    %vm1683 = vmand %vm1679, %vm1681
    %vm1684 = vmand %vm1680, %vm1682
    %v1685 = vsel %vm1683, 1.0, 0.0
    %v1686 = vsel %vm1684, 1.0, 0.0
    %v1688 = vsel %vm638, %v1685, 0
    %v1691 = vsel %vm638, %v1686, 0
    %1693 = vmatprep.subr.mxu0 0.0
    %1694 = vmatpush1.msra.mxu0 0.0
    %1695 = vmatprep.subr.mxu0 0.0
    %1696 = vmatpush1.msra.mxu0 0.0
    %1697 = vmatprep.subr.mxu0 0.0
    %1698 = vmatpush1.msra.mxu0 0.0
    %1699 = vmatprep.subr.mxu0 0.0
    %1700 = vmatpush1.msra.mxu0 0.0
    %1701 = vmatprep.subr.mxu0 0.0
    %1702 = vmatpush1.msra.mxu0 0.0
    %1703 = vmatprep.subr.mxu0 0.0
    %1704 = vmatpush1.msra.mxu0 0.0
    %1705 = vmatprep.subr.mxu0 0.0
    %1706 = vmatpush1.msra.mxu0 0.0
    %1707 = vmatprep.subr.mxu0 0.0
    %1708 = vmatpush1.msra.mxu0 0.0
    %1709 = vmatprep.subr.mxu0 0.0
    %1710 = vmatpush1.msra.mxu0 0.0
    %1711 = vmatprep.subr.mxu0 0.0
    %1712 = vmatpush1.msra.mxu0 0.0
    %1713 = vmatprep.subr.mxu0 0.0
    %1714 = vmatpush1.msra.mxu0 0.0
    %1715 = vmatprep.subr.mxu0 0.0
    %1716 = vmatpush1.msra.mxu0 0.0
    %1717 = vmatprep.subr.mxu0 0.0
    %1718 = vmatpush1.msra.mxu0 0.0
    %1719 = vmatprep.subr.mxu0 0.0
    %1720 = vmatpush1.msra.mxu0 0.0
    %1721 = vmatprep.subr.mxu0 0.0
    %v1722 = vand.u32 %v613, 4294901760
    %1723 = vmatpush1.msra.mxu0 %v1722
    %1724 = vmatprep.subr.mxu0 0.0
    %v1725 = vand.u32 %v607, 4294901760
    %1726 = vmatpush1.msra.mxu0 %v1725
    %1727 = vmatprep.subr.mxu0 0.0
    %1728 = vmatpush2.msra.mxu0 0.0
    %1729 = vmatprep.subr.mxu0 0.0
    %1730 = vmatpush2.msra.mxu0 0.0
    %1731 = vmatprep.subr.mxu0 0.0
    %1732 = vmatpush2.msra.mxu0 0.0
    %1733 = vmatprep.subr.mxu0 0.0
    %1734 = vmatpush2.msra.mxu0 0.0
    %1735 = vmatprep.subr.mxu0 0.0
    %1736 = vmatpush2.msra.mxu0 0.0
    %1737 = vmatprep.subr.mxu0 0.0
    %1738 = vmatpush2.msra.mxu0 0.0
    %1739 = vmatprep.subr.mxu0 0.0
    %1740 = vmatpush2.msra.mxu0 0.0
    %1741 = vmatprep.subr.mxu0 0.0
    %1742 = vmatpush2.msra.mxu0 0.0
    %1743 = vmatprep.subr.mxu0 0.0
    %1744 = vmatpush2.msra.mxu0 0.0
    %1745 = vmatprep.subr.mxu0 0.0
    %1746 = vmatpush2.msra.mxu0 0.0
    %1747 = vmatprep.subr.mxu0 0.0
    %1748 = vmatpush2.msra.mxu0 0.0
    %1749 = vmatprep.subr.mxu0 0.0
    %1750 = vmatpush2.msra.mxu0 0.0
    %1751 = vmatprep.subr.mxu0 0.0
    %1752 = vmatpush2.msra.mxu0 0.0
    %1753 = vmatprep.subr.mxu0 0.0
    %1754 = vmatpush2.msra.mxu0 0.0
    %1755 = vmatprep.subr.mxu0 0.0
    %1756 = vmatpush2.msra.mxu0 0.0
    %1757 = vmatprep.subr.mxu0 0.0
    %1758 = vmatpush2.msra.mxu0 0.0
    %1759 = vmatprep.mubr.f32.mxu0 0.0
    %v1760 = vand.u32 %v1688, 4294901760
    %v1761 = vsub.f32 %v1688, %v1760
    %v1762 = vand.u32 %v1761, 4294901760
    %v1763 = vsub.f32 %v1761, %v1762
    %v1764 = vand.u32 %v1763, 4294901760
    %1765 = vmatmul.mubr.f32.gmra.mxu0 %v1764
    %v1766 = vpop.f32.mrf.mxu0
    %v1767 = vadd.f32 0.0, %v1766
    %v1768 = vpop.f32.mrf.mxu0
    %1769 = vmatprep.mubr.f32.mxu0 0.0
    %v1770 = vand.u32 %v1691, 4294901760
    %v1771 = vsub.f32 %v1691, %v1770
    %v1772 = vand.u32 %v1771, 4294901760
    %v1773 = vsub.f32 %v1771, %v1772
    %v1774 = vand.u32 %v1773, 4294901760
    %1775 = vmatmul.mubr.f32.gmra.mxu0 %v1774
    %v1776 = vpop.f32.mrf.mxu0
    %v1777 = vadd.f32 0.0, %v1776
    %v1778 = vpop.f32.mrf.mxu0
    %1779 = vdwg.mxu0
    %1780 = vmatprep.subr.mxu0 0.0
    %1781 = vmatpush1.msra.mxu0 0.0
    %1782 = vmatprep.subr.mxu0 0.0
    %1783 = vmatpush1.msra.mxu0 0.0
    %1784 = vmatprep.subr.mxu0 0.0
    %1785 = vmatpush1.msra.mxu0 0.0
    %1786 = vmatprep.subr.mxu0 0.0
    %1787 = vmatpush1.msra.mxu0 0.0
    %1788 = vmatprep.subr.mxu0 0.0
    %1789 = vmatpush1.msra.mxu0 0.0
    %1790 = vmatprep.subr.mxu0 0.0
    %1791 = vmatpush1.msra.mxu0 0.0
    %1792 = vmatprep.subr.mxu0 0.0
    %1793 = vmatpush1.msra.mxu0 0.0
    %1794 = vmatprep.subr.mxu0 0.0
    %1795 = vmatpush1.msra.mxu0 0.0
    %1796 = vmatprep.subr.mxu0 0.0
    %1797 = vmatpush1.msra.mxu0 0.0
    %1798 = vmatprep.subr.mxu0 0.0
    %1799 = vmatpush1.msra.mxu0 0.0
    %1800 = vmatprep.subr.mxu0 0.0
    %1801 = vmatpush1.msra.mxu0 0.0
    %1802 = vmatprep.subr.mxu0 0.0
    %1803 = vmatpush1.msra.mxu0 0.0
    %1804 = vmatprep.subr.mxu0 0.0
    %1805 = vmatpush1.msra.mxu0 0.0
    %1806 = vmatprep.subr.mxu0 0.0
    %1807 = vmatpush1.msra.mxu0 0.0
    %1808 = vmatprep.subr.mxu0 0.0
    %v1809 = vand.u32 %v613, 4294901760
    %v1810 = vsub.f32 %v613, %v1809
    %v1811 = vand.u32 %v1810, 4294901760
    %v1812 = vsub.f32 %v1810, %v1811
    %v1813 = vand.u32 %v1812, 4294901760
    %1814 = vmatpush1.msra.mxu0 %v1813
    %1815 = vmatprep.subr.mxu0 0.0
    %v1816 = vand.u32 %v607, 4294901760
    %v1817 = vsub.f32 %v607, %v1816
    %v1818 = vand.u32 %v1817, 4294901760
    %v1819 = vsub.f32 %v1817, %v1818
    %v1820 = vand.u32 %v1819, 4294901760
    %1821 = vmatpush1.msra.mxu0 %v1820
    %1822 = vmatprep.subr.mxu0 0.0
    %1823 = vmatpush2.msra.mxu0 0.0
    %1824 = vmatprep.subr.mxu0 0.0
    %1825 = vmatpush2.msra.mxu0 0.0
    %1826 = vmatprep.subr.mxu0 0.0
    %1827 = vmatpush2.msra.mxu0 0.0
    %1828 = vmatprep.subr.mxu0 0.0
    %1829 = vmatpush2.msra.mxu0 0.0
    %1830 = vmatprep.subr.mxu0 0.0
    %1831 = vmatpush2.msra.mxu0 0.0
    %1832 = vmatprep.subr.mxu0 0.0
    %1833 = vmatpush2.msra.mxu0 0.0
    %1834 = vmatprep.subr.mxu0 0.0
    %1835 = vmatpush2.msra.mxu0 0.0
    %1836 = vmatprep.subr.mxu0 0.0
    %1837 = vmatpush2.msra.mxu0 0.0
    %1838 = vmatprep.subr.mxu0 0.0
    %1839 = vmatpush2.msra.mxu0 0.0
    %1840 = vmatprep.subr.mxu0 0.0
    %1841 = vmatpush2.msra.mxu0 0.0
    %1842 = vmatprep.subr.mxu0 0.0
    %1843 = vmatpush2.msra.mxu0 0.0
    %1844 = vmatprep.subr.mxu0 0.0
    %1845 = vmatpush2.msra.mxu0 0.0
    %1846 = vmatprep.subr.mxu0 0.0
    %1847 = vmatpush2.msra.mxu0 0.0
    %1848 = vmatprep.subr.mxu0 0.0
    %1849 = vmatpush2.msra.mxu0 0.0
    %1850 = vmatprep.subr.mxu0 0.0
    %1851 = vmatpush2.msra.mxu0 0.0
    %1852 = vmatprep.subr.mxu0 0.0
    %1853 = vmatpush2.msra.mxu0 0.0
    %1854 = vmatprep.mubr.f32.mxu0 0.0
    %v1855 = vand.u32 %v1688, 4294901760
    %1856 = vmatmul.mubr.f32.gmra.mxu0 %v1855
    %v1857 = vpop.f32.mrf.mxu0
    %v1858 = vadd.f32 %v1767, %v1857
    %v1859 = vpop.f32.mrf.mxu0
    %1860 = vmatprep.mubr.f32.mxu0 0.0
    %v1861 = vand.u32 %v1691, 4294901760
    %1862 = vmatmul.mubr.f32.gmra.mxu0 %v1861
    %v1863 = vpop.f32.mrf.mxu0
    %v1864 = vadd.f32 %v1777, %v1863
    %v1865 = vpop.f32.mrf.mxu0
    %1866 = vdwg.mxu0
    %1867 = vmatprep.subr.mxu0 0.0
    %1868 = vmatpush1.msra.mxu0 0.0
    %1869 = vmatprep.subr.mxu0 0.0
    %1870 = vmatpush1.msra.mxu0 0.0
    %1871 = vmatprep.subr.mxu0 0.0
    %1872 = vmatpush1.msra.mxu0 0.0
    %1873 = vmatprep.subr.mxu0 0.0
    %1874 = vmatpush1.msra.mxu0 0.0
    %1875 = vmatprep.subr.mxu0 0.0
    %1876 = vmatpush1.msra.mxu0 0.0
    %1877 = vmatprep.subr.mxu0 0.0
    %1878 = vmatpush1.msra.mxu0 0.0
    %1879 = vmatprep.subr.mxu0 0.0
    %1880 = vmatpush1.msra.mxu0 0.0
    %1881 = vmatprep.subr.mxu0 0.0
    %1882 = vmatpush1.msra.mxu0 0.0
    %1883 = vmatprep.subr.mxu0 0.0
    %1884 = vmatpush1.msra.mxu0 0.0
    %1885 = vmatprep.subr.mxu0 0.0
    %1886 = vmatpush1.msra.mxu0 0.0
    %1887 = vmatprep.subr.mxu0 0.0
    %1888 = vmatpush1.msra.mxu0 0.0
    %1889 = vmatprep.subr.mxu0 0.0
    %1890 = vmatpush1.msra.mxu0 0.0
    %1891 = vmatprep.subr.mxu0 0.0
    %1892 = vmatpush1.msra.mxu0 0.0
    %1893 = vmatprep.subr.mxu0 0.0
    %1894 = vmatpush1.msra.mxu0 0.0
    %1895 = vmatprep.subr.mxu0 0.0
    %v1896 = vand.u32 %v613, 4294901760
    %v1897 = vsub.f32 %v613, %v1896
    %1898 = vmatpush1.msra.mxu0 %v1897
    %1899 = vmatprep.subr.mxu0 0.0
    %v1900 = vand.u32 %v607, 4294901760
    %v1901 = vsub.f32 %v607, %v1900
    %1902 = vmatpush1.msra.mxu0 %v1901
    %1903 = vmatprep.subr.mxu0 0.0
    %1904 = vmatpush2.msra.mxu0 0.0
    %1905 = vmatprep.subr.mxu0 0.0
    %1906 = vmatpush2.msra.mxu0 0.0
    %1907 = vmatprep.subr.mxu0 0.0
    %1908 = vmatpush2.msra.mxu0 0.0
    %1909 = vmatprep.subr.mxu0 0.0
    %1910 = vmatpush2.msra.mxu0 0.0
    %1911 = vmatprep.subr.mxu0 0.0
    %1912 = vmatpush2.msra.mxu0 0.0
    %1913 = vmatprep.subr.mxu0 0.0
    %1914 = vmatpush2.msra.mxu0 0.0
    %1915 = vmatprep.subr.mxu0 0.0
    %1916 = vmatpush2.msra.mxu0 0.0
    %1917 = vmatprep.subr.mxu0 0.0
    %1918 = vmatpush2.msra.mxu0 0.0
    %1919 = vmatprep.subr.mxu0 0.0
    %1920 = vmatpush2.msra.mxu0 0.0
    %1921 = vmatprep.subr.mxu0 0.0
    %1922 = vmatpush2.msra.mxu0 0.0
    %1923 = vmatprep.subr.mxu0 0.0
    %1924 = vmatpush2.msra.mxu0 0.0
    %1925 = vmatprep.subr.mxu0 0.0
    %1926 = vmatpush2.msra.mxu0 0.0
    %1927 = vmatprep.subr.mxu0 0.0
    %1928 = vmatpush2.msra.mxu0 0.0
    %1929 = vmatprep.subr.mxu0 0.0
    %1930 = vmatpush2.msra.mxu0 0.0
    %1931 = vmatprep.subr.mxu0 0.0
    %1932 = vmatpush2.msra.mxu0 0.0
    %1933 = vmatprep.subr.mxu0 0.0
    %1934 = vmatpush2.msra.mxu0 0.0
    %1935 = vmatprep.mubr.f32.mxu0 0.0
    %v1936 = vand.u32 %v1688, 4294901760
    %v1937 = vsub.f32 %v1688, %v1936
    %1938 = vmatmul.mubr.f32.gmra.mxu0 %v1937
    %v1939 = vpop.f32.mrf.mxu0
    %v1940 = vadd.f32 %v1858, %v1939
    %v1941 = vpop.f32.mrf.mxu0
    %1942 = vmatprep.mubr.f32.mxu0 0.0
    %v1943 = vand.u32 %v1691, 4294901760
    %v1944 = vsub.f32 %v1691, %v1943
    %1945 = vmatmul.mubr.f32.gmra.mxu0 %v1944
    %v1946 = vpop.f32.mrf.mxu0
    %v1947 = vadd.f32 %v1864, %v1946
    %v1948 = vpop.f32.mrf.mxu0
    %1949 = vdwg.mxu0
    %1950 = vmatprep.subr.mxu0 0.0
    %1951 = vmatpush1.msra.mxu0 0.0
    %1952 = vmatprep.subr.mxu0 0.0
    %1953 = vmatpush1.msra.mxu0 0.0
    %1954 = vmatprep.subr.mxu0 0.0
    %1955 = vmatpush1.msra.mxu0 0.0
    %1956 = vmatprep.subr.mxu0 0.0
    %1957 = vmatpush1.msra.mxu0 0.0
    %1958 = vmatprep.subr.mxu0 0.0
    %1959 = vmatpush1.msra.mxu0 0.0
    %1960 = vmatprep.subr.mxu0 0.0
    %1961 = vmatpush1.msra.mxu0 0.0
    %1962 = vmatprep.subr.mxu0 0.0
    %1963 = vmatpush1.msra.mxu0 0.0
    %1964 = vmatprep.subr.mxu0 0.0
    %1965 = vmatpush1.msra.mxu0 0.0
    %1966 = vmatprep.subr.mxu0 0.0
    %1967 = vmatpush1.msra.mxu0 0.0
    %1968 = vmatprep.subr.mxu0 0.0
    %1969 = vmatpush1.msra.mxu0 0.0
    %1970 = vmatprep.subr.mxu0 0.0
    %1971 = vmatpush1.msra.mxu0 0.0
    %1972 = vmatprep.subr.mxu0 0.0
    %1973 = vmatpush1.msra.mxu0 0.0
    %1974 = vmatprep.subr.mxu0 0.0
    %1975 = vmatpush1.msra.mxu0 0.0
    %1976 = vmatprep.subr.mxu0 0.0
    %1977 = vmatpush1.msra.mxu0 0.0
    %1978 = vmatprep.subr.mxu0 0.0
    %v1979 = vand.u32 %v613, 4294901760
    %1980 = vmatpush1.msra.mxu0 %v1979
    %1981 = vmatprep.subr.mxu0 0.0
    %v1982 = vand.u32 %v607, 4294901760
    %1983 = vmatpush1.msra.mxu0 %v1982
    %1984 = vmatprep.subr.mxu0 0.0
    %1985 = vmatpush2.msra.mxu0 0.0
    %1986 = vmatprep.subr.mxu0 0.0
    %1987 = vmatpush2.msra.mxu0 0.0
    %1988 = vmatprep.subr.mxu0 0.0
    %1989 = vmatpush2.msra.mxu0 0.0
    %1990 = vmatprep.subr.mxu0 0.0
    %1991 = vmatpush2.msra.mxu0 0.0
    %1992 = vmatprep.subr.mxu0 0.0
    %1993 = vmatpush2.msra.mxu0 0.0
    %1994 = vmatprep.subr.mxu0 0.0
    %1995 = vmatpush2.msra.mxu0 0.0
    %1996 = vmatprep.subr.mxu0 0.0
    %1997 = vmatpush2.msra.mxu0 0.0
    %1998 = vmatprep.subr.mxu0 0.0
    %1999 = vmatpush2.msra.mxu0 0.0
    %2000 = vmatprep.subr.mxu0 0.0
    %2001 = vmatpush2.msra.mxu0 0.0
    %2002 = vmatprep.subr.mxu0 0.0
    %2003 = vmatpush2.msra.mxu0 0.0
    %2004 = vmatprep.subr.mxu0 0.0
    %2005 = vmatpush2.msra.mxu0 0.0
    %2006 = vmatprep.subr.mxu0 0.0
    %2007 = vmatpush2.msra.mxu0 0.0
    %2008 = vmatprep.subr.mxu0 0.0
    %2009 = vmatpush2.msra.mxu0 0.0
    %2010 = vmatprep.subr.mxu0 0.0
    %2011 = vmatpush2.msra.mxu0 0.0
    %2012 = vmatprep.subr.mxu0 0.0
    %2013 = vmatpush2.msra.mxu0 0.0
    %2014 = vmatprep.subr.mxu0 0.0
    %2015 = vmatpush2.msra.mxu0 0.0
    %2016 = vmatprep.mubr.f32.mxu0 0.0
    %v2017 = vand.u32 %v1688, 4294901760
    %v2018 = vsub.f32 %v1688, %v2017
    %v2019 = vand.u32 %v2018, 4294901760
    %2020 = vmatmul.mubr.f32.gmra.mxu0 %v2019
    %v2021 = vpop.f32.mrf.mxu0
    %v2022 = vadd.f32 %v1940, %v2021
    %v2023 = vpop.f32.mrf.mxu0
    %2024 = vmatprep.mubr.f32.mxu0 0.0
    %v2025 = vand.u32 %v1691, 4294901760
    %v2026 = vsub.f32 %v1691, %v2025
    %v2027 = vand.u32 %v2026, 4294901760
    %2028 = vmatmul.mubr.f32.gmra.mxu0 %v2027
    %v2029 = vpop.f32.mrf.mxu0
    %v2030 = vadd.f32 %v1947, %v2029
    %v2031 = vpop.f32.mrf.mxu0
    %2032 = vdwg.mxu0
    %2033 = vmatprep.subr.mxu0 0.0
    %2034 = vmatpush1.msra.mxu0 0.0
    %2035 = vmatprep.subr.mxu0 0.0
    %2036 = vmatpush1.msra.mxu0 0.0
    %2037 = vmatprep.subr.mxu0 0.0
    %2038 = vmatpush1.msra.mxu0 0.0
    %2039 = vmatprep.subr.mxu0 0.0
    %2040 = vmatpush1.msra.mxu0 0.0
    %2041 = vmatprep.subr.mxu0 0.0
    %2042 = vmatpush1.msra.mxu0 0.0
    %2043 = vmatprep.subr.mxu0 0.0
    %2044 = vmatpush1.msra.mxu0 0.0
    %2045 = vmatprep.subr.mxu0 0.0
    %2046 = vmatpush1.msra.mxu0 0.0
    %2047 = vmatprep.subr.mxu0 0.0
    %2048 = vmatpush1.msra.mxu0 0.0
    %2049 = vmatprep.subr.mxu0 0.0
    %2050 = vmatpush1.msra.mxu0 0.0
    %2051 = vmatprep.subr.mxu0 0.0
    %2052 = vmatpush1.msra.mxu0 0.0
    %2053 = vmatprep.subr.mxu0 0.0
    %2054 = vmatpush1.msra.mxu0 0.0
    %2055 = vmatprep.subr.mxu0 0.0
    %2056 = vmatpush1.msra.mxu0 0.0
    %2057 = vmatprep.subr.mxu0 0.0
    %2058 = vmatpush1.msra.mxu0 0.0
    %2059 = vmatprep.subr.mxu0 0.0
    %2060 = vmatpush1.msra.mxu0 0.0
    %2061 = vmatprep.subr.mxu0 0.0
    %v2062 = vand.u32 %v613, 4294901760
    %v2063 = vsub.f32 %v613, %v2062
    %v2064 = vand.u32 %v2063, 4294901760
    %2065 = vmatpush1.msra.mxu0 %v2064
    %2066 = vmatprep.subr.mxu0 0.0
    %v2067 = vand.u32 %v607, 4294901760
    %v2068 = vsub.f32 %v607, %v2067
    %v2069 = vand.u32 %v2068, 4294901760
    %2070 = vmatpush1.msra.mxu0 %v2069
    %2071 = vmatprep.subr.mxu0 0.0
    %2072 = vmatpush2.msra.mxu0 0.0
    %2073 = vmatprep.subr.mxu0 0.0
    %2074 = vmatpush2.msra.mxu0 0.0
    %2075 = vmatprep.subr.mxu0 0.0
    %2076 = vmatpush2.msra.mxu0 0.0
    %2077 = vmatprep.subr.mxu0 0.0
    %2078 = vmatpush2.msra.mxu0 0.0
    %2079 = vmatprep.subr.mxu0 0.0
    %2080 = vmatpush2.msra.mxu0 0.0
    %2081 = vmatprep.subr.mxu0 0.0
    %2082 = vmatpush2.msra.mxu0 0.0
    %2083 = vmatprep.subr.mxu0 0.0
    %2084 = vmatpush2.msra.mxu0 0.0
    %2085 = vmatprep.subr.mxu0 0.0
    %2086 = vmatpush2.msra.mxu0 0.0
    %2087 = vmatprep.subr.mxu0 0.0
    %2088 = vmatpush2.msra.mxu0 0.0
    %2089 = vmatprep.subr.mxu0 0.0
    %2090 = vmatpush2.msra.mxu0 0.0
    %2091 = vmatprep.subr.mxu0 0.0
    %2092 = vmatpush2.msra.mxu0 0.0
    %2093 = vmatprep.subr.mxu0 0.0
    %2094 = vmatpush2.msra.mxu0 0.0
    %2095 = vmatprep.subr.mxu0 0.0
    %2096 = vmatpush2.msra.mxu0 0.0
    %2097 = vmatprep.subr.mxu0 0.0
    %2098 = vmatpush2.msra.mxu0 0.0
    %2099 = vmatprep.subr.mxu0 0.0
    %2100 = vmatpush2.msra.mxu0 0.0
    %2101 = vmatprep.subr.mxu0 0.0
    %2102 = vmatpush2.msra.mxu0 0.0
    %2103 = vmatprep.mubr.f32.mxu0 0.0
    %v2104 = vand.u32 %v1688, 4294901760
    %2105 = vmatmul.mubr.f32.gmra.mxu0 %v2104
    %v2106 = vpop.f32.mrf.mxu0
    %v2107 = vadd.f32 %v2022, %v2106
    %v2108 = vpop.f32.mrf.mxu0
    %2109 = vmatprep.mubr.f32.mxu0 0.0
    %v2110 = vand.u32 %v1691, 4294901760
    %2111 = vmatmul.mubr.f32.gmra.mxu0 %v2110
    %v2112 = vpop.f32.mrf.mxu0
    %v2113 = vadd.f32 %v2030, %v2112
    %v2114 = vpop.f32.mrf.mxu0
    %2115 = vdwg.mxu0
    %2116 = vmatprep.subr.mxu0 0.0
    %2117 = vmatpush1.msra.mxu0 0.0
    %2118 = vmatprep.subr.mxu0 0.0
    %2119 = vmatpush1.msra.mxu0 0.0
    %2120 = vmatprep.subr.mxu0 0.0
    %2121 = vmatpush1.msra.mxu0 0.0
    %2122 = vmatprep.subr.mxu0 0.0
    %2123 = vmatpush1.msra.mxu0 0.0
    %2124 = vmatprep.subr.mxu0 0.0
    %2125 = vmatpush1.msra.mxu0 0.0
    %2126 = vmatprep.subr.mxu0 0.0
    %2127 = vmatpush1.msra.mxu0 0.0
    %2128 = vmatprep.subr.mxu0 0.0
    %2129 = vmatpush1.msra.mxu0 0.0
    %2130 = vmatprep.subr.mxu0 0.0
    %2131 = vmatpush1.msra.mxu0 0.0
    %2132 = vmatprep.subr.mxu0 0.0
    %2133 = vmatpush1.msra.mxu0 0.0
    %2134 = vmatprep.subr.mxu0 0.0
    %2135 = vmatpush1.msra.mxu0 0.0
    %2136 = vmatprep.subr.mxu0 0.0
    %2137 = vmatpush1.msra.mxu0 0.0
    %2138 = vmatprep.subr.mxu0 0.0
    %2139 = vmatpush1.msra.mxu0 0.0
    %2140 = vmatprep.subr.mxu0 0.0
    %2141 = vmatpush1.msra.mxu0 0.0
    %2142 = vmatprep.subr.mxu0 0.0
    %2143 = vmatpush1.msra.mxu0 0.0
    %2144 = vmatprep.subr.mxu0 0.0
    %v2145 = vand.u32 %v613, 4294901760
    %2146 = vmatpush1.msra.mxu0 %v2145
    %2147 = vmatprep.subr.mxu0 0.0
    %v2148 = vand.u32 %v607, 4294901760
    %2149 = vmatpush1.msra.mxu0 %v2148
    %2150 = vmatprep.subr.mxu0 0.0
    %2151 = vmatpush2.msra.mxu0 0.0
    %2152 = vmatprep.subr.mxu0 0.0
    %2153 = vmatpush2.msra.mxu0 0.0
    %2154 = vmatprep.subr.mxu0 0.0
    %2155 = vmatpush2.msra.mxu0 0.0
    %2156 = vmatprep.subr.mxu0 0.0
    %2157 = vmatpush2.msra.mxu0 0.0
    %2158 = vmatprep.subr.mxu0 0.0
    %2159 = vmatpush2.msra.mxu0 0.0
    %2160 = vmatprep.subr.mxu0 0.0
    %2161 = vmatpush2.msra.mxu0 0.0
    %2162 = vmatprep.subr.mxu0 0.0
    %2163 = vmatpush2.msra.mxu0 0.0
    %2164 = vmatprep.subr.mxu0 0.0
    %2165 = vmatpush2.msra.mxu0 0.0
    %2166 = vmatprep.subr.mxu0 0.0
    %2167 = vmatpush2.msra.mxu0 0.0
    %2168 = vmatprep.subr.mxu0 0.0
    %2169 = vmatpush2.msra.mxu0 0.0
    %2170 = vmatprep.subr.mxu0 0.0
    %2171 = vmatpush2.msra.mxu0 0.0
    %2172 = vmatprep.subr.mxu0 0.0
    %2173 = vmatpush2.msra.mxu0 0.0
    %2174 = vmatprep.subr.mxu0 0.0
    %2175 = vmatpush2.msra.mxu0 0.0
    %2176 = vmatprep.subr.mxu0 0.0
    %2177 = vmatpush2.msra.mxu0 0.0
    %2178 = vmatprep.subr.mxu0 0.0
    %2179 = vmatpush2.msra.mxu0 0.0
    %2180 = vmatprep.subr.mxu0 0.0
    %2181 = vmatpush2.msra.mxu0 0.0
    %2182 = vmatprep.mubr.f32.mxu0 0.0
    %v2183 = vand.u32 %v1688, 4294901760
    %2184 = vmatmul.mubr.f32.gmra.mxu0 %v2183
    %v2185 = vpop.f32.mrf.mxu0
    %v2186 = vadd.f32 %v2107, %v2185
    %v2187 = vpop.f32.mrf.mxu0
    %2188 = vmatprep.mubr.f32.mxu0 0.0
    %v2189 = vand.u32 %v1691, 4294901760
    %2190 = vmatmul.mubr.f32.gmra.mxu0 %v2189
    %v2191 = vpop.f32.mrf.mxu0
    %v2192 = vadd.f32 %v2113, %v2191
    %v2193 = vpop.f32.mrf.mxu0
    %2194 = vdwg.mxu0
    %v2195 = vlaneseq
    %v2196 = vshrl.u32 %v2195, 7
    %v2197 = vsub.s32 2, %v2196
    %v2198 = vrot.slane %v616, %v2197
    %v2199 = vmul.f32 %v2186, %v2198
    %v2200 = vmul.f32 %v2192, %v2198
    %v2201 = vadd.f32 %v1677, %v2199
    %v2202 = vadd.f32 %v1678, %v2200
    %v2203 = vlaneseq
    %v2204 = vshrl.u32 %v2203, 7
    %v2205 = vsub.s32 3, %v2204
    %v2206 = vrot.slane %v616, %v2205
    %v2207 = vmul.f32 %v607, %v2206
    %v2208 = vmul.f32 %v613, %v2206
    %v2209 = vadd.f32 %v2201, %v2207
    %v2210 = vadd.f32 %v2202, %v2208
    %v2211 = vxor.u32 %v2209, 2147483648
    %v2212 = vxor.u32 %v2210, 2147483648
    %v2213 = vmul.f32 %v2211, 1.442695
    %v2214 = vpow.pop %v2213
    %v2215 = vmul.f32 %v2212, 1.442695
    %v2216 = vpow.pop %v2215
    %v2217 = vadd.f32 %v2214, 1.0
    %v2218 = vadd.f32 %v2216, 1.0
    %v2219 = vrcp.pop %v2217
    %v2220 = vmul.f32 1.0, %v2219
    %v2221 = vrcp.pop %v2218
    %v2222 = vmul.f32 1.0, %v2221
    %v2223 = vmul.f32 %v2209, %v2220
    %v2224 = vmul.f32 %v2210, %v2222
    %v2225 = vld [vmem:[%s3] sm:$0xff]
    %v2226 = vld [vmem:[%s3 + $0x8] sm:$0xff]
    %v2227 = vld [vmem:[%s3 + $0x10] sm:$0xff]
    %v2228 = vld [vmem:[%s3 + $0x18] sm:$0xff]
    %v2229 = vld [vmem:[%s3 + $0x20] sm:$0xff]
    %v2230 = vld [vmem:[%s3 + $0x28] sm:$0xff]
    %v2231 = vld [vmem:[%s3 + $0x30] sm:$0xff]
    %v2232 = vld [vmem:[%s3 + $0x38] sm:$0xff]
    %vm2233 = vcmask 523264
    %v2235 = vsel %vm2233, %v2223, 0
    %v2238 = vsel %vm2233, %v2224, 0
    %2240 = vmatprep.subr.mxu0 0.0
    %2241 = vmatpush1.msra.mxu0 0.0
    %2242 = vmatprep.subr.mxu0 0.0
    %2243 = vmatpush1.msra.mxu0 0.0
    %2244 = vmatprep.subr.mxu0 0.0
    %2245 = vmatpush1.msra.mxu0 0.0
    %2246 = vmatprep.subr.mxu0 0.0
    %2247 = vmatpush1.msra.mxu0 0.0
    %2248 = vmatprep.subr.mxu0 0.0
    %2249 = vmatpush1.msra.mxu0 0.0
    %2250 = vmatprep.subr.mxu0 0.0
    %2251 = vmatpush1.msra.mxu0 0.0
    %2252 = vmatprep.subr.mxu0 0.0
    %2253 = vmatpush1.msra.mxu0 0.0
    %2254 = vmatprep.subr.mxu0 0.0
    %2255 = vmatpush1.msra.mxu0 0.0
    %2256 = vmatprep.subr.mxu0 0.0
    %v2257 = vand.u32 %v2232, 4294901760
    %2258 = vmatpush1.msra.mxu0 %v2257
    %2259 = vmatprep.subr.mxu0 0.0
    %v2260 = vand.u32 %v2231, 4294901760
    %2261 = vmatpush1.msra.mxu0 %v2260
    %2262 = vmatprep.subr.mxu0 0.0
    %v2263 = vand.u32 %v2230, 4294901760
    %2264 = vmatpush1.msra.mxu0 %v2263
    %2265 = vmatprep.subr.mxu0 0.0
    %v2266 = vand.u32 %v2229, 4294901760
    %2267 = vmatpush1.msra.mxu0 %v2266
    %2268 = vmatprep.subr.mxu0 0.0
    %v2269 = vand.u32 %v2228, 4294901760
    %2270 = vmatpush1.msra.mxu0 %v2269
    %2271 = vmatprep.subr.mxu0 0.0
    %v2272 = vand.u32 %v2227, 4294901760
    %2273 = vmatpush1.msra.mxu0 %v2272
    %2274 = vmatprep.subr.mxu0 0.0
    %v2275 = vand.u32 %v2226, 4294901760
    %2276 = vmatpush1.msra.mxu0 %v2275
    %2277 = vmatprep.subr.mxu0 0.0
    %v2278 = vand.u32 %v2225, 4294901760
    %2279 = vmatpush1.msra.mxu0 %v2278
    %2280 = vmatprep.subr.mxu0 0.0
    %2281 = vmatpush2.msra.mxu0 0.0
    %2282 = vmatprep.subr.mxu0 0.0
    %2283 = vmatpush2.msra.mxu0 0.0
    %2284 = vmatprep.subr.mxu0 0.0
    %2285 = vmatpush2.msra.mxu0 0.0
    %2286 = vmatprep.subr.mxu0 0.0
    %2287 = vmatpush2.msra.mxu0 0.0
    %2288 = vmatprep.subr.mxu0 0.0
    %2289 = vmatpush2.msra.mxu0 0.0
    %2290 = vmatprep.subr.mxu0 0.0
    %2291 = vmatpush2.msra.mxu0 0.0
    %2292 = vmatprep.subr.mxu0 0.0
    %2293 = vmatpush2.msra.mxu0 0.0
    %2294 = vmatprep.subr.mxu0 0.0
    %2295 = vmatpush2.msra.mxu0 0.0
    %2296 = vmatprep.subr.mxu0 0.0
    %2297 = vmatpush2.msra.mxu0 0.0
    %2298 = vmatprep.subr.mxu0 0.0
    %2299 = vmatpush2.msra.mxu0 0.0
    %2300 = vmatprep.subr.mxu0 0.0
    %2301 = vmatpush2.msra.mxu0 0.0
    %2302 = vmatprep.subr.mxu0 0.0
    %2303 = vmatpush2.msra.mxu0 0.0
    %2304 = vmatprep.subr.mxu0 0.0
    %2305 = vmatpush2.msra.mxu0 0.0
    %2306 = vmatprep.subr.mxu0 0.0
    %2307 = vmatpush2.msra.mxu0 0.0
    %2308 = vmatprep.subr.mxu0 0.0
    %2309 = vmatpush2.msra.mxu0 0.0
    %2310 = vmatprep.subr.mxu0 0.0
    %2311 = vmatpush2.msra.mxu0 0.0
    %2312 = vmatprep.mubr.f32.mxu0 0.0
    %v2313 = vand.u32 %v2235, 4294901760
    %v2314 = vsub.f32 %v2235, %v2313
    %v2315 = vand.u32 %v2314, 4294901760
    %v2316 = vsub.f32 %v2314, %v2315
    %v2317 = vand.u32 %v2316, 4294901760
    %2318 = vmatmul.mubr.f32.gmra.mxu0 %v2317
    %v2319 = vpop.f32.mrf.mxu0
    %v2320 = vadd.f32 0.0, %v2319
    %v2321 = vpop.f32.mrf.mxu0
    %2322 = vmatprep.mubr.f32.mxu0 0.0
    %v2323 = vand.u32 %v2238, 4294901760
    %v2324 = vsub.f32 %v2238, %v2323
    %v2325 = vand.u32 %v2324, 4294901760
    %v2326 = vsub.f32 %v2324, %v2325
    %v2327 = vand.u32 %v2326, 4294901760
    %2328 = vmatmul.mubr.f32.gmra.mxu0 %v2327
    %v2329 = vpop.f32.mrf.mxu0
    %v2330 = vadd.f32 0.0, %v2329
    %v2331 = vpop.f32.mrf.mxu0
    %2332 = vdwg.mxu0
    %2333 = vmatprep.subr.mxu0 0.0
    %2334 = vmatpush1.msra.mxu0 0.0
    %2335 = vmatprep.subr.mxu0 0.0
    %2336 = vmatpush1.msra.mxu0 0.0
    %2337 = vmatprep.subr.mxu0 0.0
    %2338 = vmatpush1.msra.mxu0 0.0
    %2339 = vmatprep.subr.mxu0 0.0
    %2340 = vmatpush1.msra.mxu0 0.0
    %2341 = vmatprep.subr.mxu0 0.0
    %2342 = vmatpush1.msra.mxu0 0.0
    %2343 = vmatprep.subr.mxu0 0.0
    %2344 = vmatpush1.msra.mxu0 0.0
    %2345 = vmatprep.subr.mxu0 0.0
    %2346 = vmatpush1.msra.mxu0 0.0
    %2347 = vmatprep.subr.mxu0 0.0
    %2348 = vmatpush1.msra.mxu0 0.0
    %2349 = vmatprep.subr.mxu0 0.0
    %v2350 = vand.u32 %v2232, 4294901760
    %v2351 = vsub.f32 %v2232, %v2350
    %v2352 = vand.u32 %v2351, 4294901760
    %v2353 = vsub.f32 %v2351, %v2352
    %v2354 = vand.u32 %v2353, 4294901760
    %2355 = vmatpush1.msra.mxu0 %v2354
    %2356 = vmatprep.subr.mxu0 0.0
    %v2357 = vand.u32 %v2231, 4294901760
    %v2358 = vsub.f32 %v2231, %v2357
    %v2359 = vand.u32 %v2358, 4294901760
    %v2360 = vsub.f32 %v2358, %v2359
    %v2361 = vand.u32 %v2360, 4294901760
    %2362 = vmatpush1.msra.mxu0 %v2361
    %2363 = vmatprep.subr.mxu0 0.0
    %v2364 = vand.u32 %v2230, 4294901760
    %v2365 = vsub.f32 %v2230, %v2364
    %v2366 = vand.u32 %v2365, 4294901760
    %v2367 = vsub.f32 %v2365, %v2366
    %v2368 = vand.u32 %v2367, 4294901760
    %2369 = vmatpush1.msra.mxu0 %v2368
    %2370 = vmatprep.subr.mxu0 0.0
    %v2371 = vand.u32 %v2229, 4294901760
    %v2372 = vsub.f32 %v2229, %v2371
    %v2373 = vand.u32 %v2372, 4294901760
    %v2374 = vsub.f32 %v2372, %v2373
    %v2375 = vand.u32 %v2374, 4294901760
    %2376 = vmatpush1.msra.mxu0 %v2375
    %2377 = vmatprep.subr.mxu0 0.0
    %v2378 = vand.u32 %v2228, 4294901760
    %v2379 = vsub.f32 %v2228, %v2378
    %v2380 = vand.u32 %v2379, 4294901760
    %v2381 = vsub.f32 %v2379, %v2380
    %v2382 = vand.u32 %v2381, 4294901760
    %2383 = vmatpush1.msra.mxu0 %v2382
    %2384 = vmatprep.subr.mxu0 0.0
    %v2385 = vand.u32 %v2227, 4294901760
    %v2386 = vsub.f32 %v2227, %v2385
    %v2387 = vand.u32 %v2386, 4294901760
    %v2388 = vsub.f32 %v2386, %v2387
    %v2389 = vand.u32 %v2388, 4294901760
    %2390 = vmatpush1.msra.mxu0 %v2389
    %2391 = vmatprep.subr.mxu0 0.0
    %v2392 = vand.u32 %v2226, 4294901760
    %v2393 = vsub.f32 %v2226, %v2392
    %v2394 = vand.u32 %v2393, 4294901760
    %v2395 = vsub.f32 %v2393, %v2394
    %v2396 = vand.u32 %v2395, 4294901760
    %2397 = vmatpush1.msra.mxu0 %v2396
    %2398 = vmatprep.subr.mxu0 0.0
    %v2399 = vand.u32 %v2225, 4294901760
    %v2400 = vsub.f32 %v2225, %v2399
    %v2401 = vand.u32 %v2400, 4294901760
    %v2402 = vsub.f32 %v2400, %v2401
    %v2403 = vand.u32 %v2402, 4294901760
    %2404 = vmatpush1.msra.mxu0 %v2403
    %2405 = vmatprep.subr.mxu0 0.0
    %2406 = vmatpush2.msra.mxu0 0.0
    %2407 = vmatprep.subr.mxu0 0.0
    %2408 = vmatpush2.msra.mxu0 0.0
    %2409 = vmatprep.subr.mxu0 0.0
    %2410 = vmatpush2.msra.mxu0 0.0
    %2411 = vmatprep.subr.mxu0 0.0
    %2412 = vmatpush2.msra.mxu0 0.0
    %2413 = vmatprep.subr.mxu0 0.0
    %2414 = vmatpush2.msra.mxu0 0.0
    %2415 = vmatprep.subr.mxu0 0.0
    %2416 = vmatpush2.msra.mxu0 0.0
    %2417 = vmatprep.subr.mxu0 0.0
    %2418 = vmatpush2.msra.mxu0 0.0
    %2419 = vmatprep.subr.mxu0 0.0
    %2420 = vmatpush2.msra.mxu0 0.0
    %2421 = vmatprep.subr.mxu0 0.0
    %2422 = vmatpush2.msra.mxu0 0.0
    %2423 = vmatprep.subr.mxu0 0.0
    %2424 = vmatpush2.msra.mxu0 0.0
    %2425 = vmatprep.subr.mxu0 0.0
    %2426 = vmatpush2.msra.mxu0 0.0
    %2427 = vmatprep.subr.mxu0 0.0
    %2428 = vmatpush2.msra.mxu0 0.0
    %2429 = vmatprep.subr.mxu0 0.0
    %2430 = vmatpush2.msra.mxu0 0.0
    %2431 = vmatprep.subr.mxu0 0.0
    %2432 = vmatpush2.msra.mxu0 0.0
    %2433 = vmatprep.subr.mxu0 0.0
    %2434 = vmatpush2.msra.mxu0 0.0
    %2435 = vmatprep.subr.mxu0 0.0
    %2436 = vmatpush2.msra.mxu0 0.0
    %2437 = vmatprep.mubr.f32.mxu0 0.0
    %v2438 = vand.u32 %v2235, 4294901760
    %2439 = vmatmul.mubr.f32.gmra.mxu0 %v2438
    %v2440 = vpop.f32.mrf.mxu0
    %v2441 = vadd.f32 %v2320, %v2440
    %v2442 = vpop.f32.mrf.mxu0
    %2443 = vmatprep.mubr.f32.mxu0 0.0
    %v2444 = vand.u32 %v2238, 4294901760
    %2445 = vmatmul.mubr.f32.gmra.mxu0 %v2444
    %v2446 = vpop.f32.mrf.mxu0
    %v2447 = vadd.f32 %v2330, %v2446
    %v2448 = vpop.f32.mrf.mxu0
    %2449 = vdwg.mxu0
    %2450 = vmatprep.subr.mxu0 0.0
    %2451 = vmatpush1.msra.mxu0 0.0
    %2452 = vmatprep.subr.mxu0 0.0
    %2453 = vmatpush1.msra.mxu0 0.0
    %2454 = vmatprep.subr.mxu0 0.0
    %2455 = vmatpush1.msra.mxu0 0.0
    %2456 = vmatprep.subr.mxu0 0.0
    %2457 = vmatpush1.msra.mxu0 0.0
    %2458 = vmatprep.subr.mxu0 0.0
    %2459 = vmatpush1.msra.mxu0 0.0
    %2460 = vmatprep.subr.mxu0 0.0
    %2461 = vmatpush1.msra.mxu0 0.0
    %2462 = vmatprep.subr.mxu0 0.0
    %2463 = vmatpush1.msra.mxu0 0.0
    %2464 = vmatprep.subr.mxu0 0.0
    %2465 = vmatpush1.msra.mxu0 0.0
    %2466 = vmatprep.subr.mxu0 0.0
    %v2467 = vand.u32 %v2232, 4294901760
    %v2468 = vsub.f32 %v2232, %v2467
    %2469 = vmatpush1.msra.mxu0 %v2468
    %2470 = vmatprep.subr.mxu0 0.0
    %v2471 = vand.u32 %v2231, 4294901760
    %v2472 = vsub.f32 %v2231, %v2471
    %2473 = vmatpush1.msra.mxu0 %v2472
    %2474 = vmatprep.subr.mxu0 0.0
    %v2475 = vand.u32 %v2230, 4294901760
    %v2476 = vsub.f32 %v2230, %v2475
    %2477 = vmatpush1.msra.mxu0 %v2476
    %2478 = vmatprep.subr.mxu0 0.0
    %v2479 = vand.u32 %v2229, 4294901760
    %v2480 = vsub.f32 %v2229, %v2479
    %2481 = vmatpush1.msra.mxu0 %v2480
    %2482 = vmatprep.subr.mxu0 0.0
    %v2483 = vand.u32 %v2228, 4294901760
    %v2484 = vsub.f32 %v2228, %v2483
    %2485 = vmatpush1.msra.mxu0 %v2484
    %2486 = vmatprep.subr.mxu0 0.0
    %v2487 = vand.u32 %v2227, 4294901760
    %v2488 = vsub.f32 %v2227, %v2487
    %2489 = vmatpush1.msra.mxu0 %v2488
    %2490 = vmatprep.subr.mxu0 0.0
    %v2491 = vand.u32 %v2226, 4294901760
    %v2492 = vsub.f32 %v2226, %v2491
    %2493 = vmatpush1.msra.mxu0 %v2492
    %2494 = vmatprep.subr.mxu0 0.0
    %v2495 = vand.u32 %v2225, 4294901760
    %v2496 = vsub.f32 %v2225, %v2495
    %2497 = vmatpush1.msra.mxu0 %v2496
    %2498 = vmatprep.subr.mxu0 0.0
    %2499 = vmatpush2.msra.mxu0 0.0
    %2500 = vmatprep.subr.mxu0 0.0
    %2501 = vmatpush2.msra.mxu0 0.0
    %2502 = vmatprep.subr.mxu0 0.0
    %2503 = vmatpush2.msra.mxu0 0.0
    %2504 = vmatprep.subr.mxu0 0.0
    %2505 = vmatpush2.msra.mxu0 0.0
    %2506 = vmatprep.subr.mxu0 0.0
    %2507 = vmatpush2.msra.mxu0 0.0
    %2508 = vmatprep.subr.mxu0 0.0
    %2509 = vmatpush2.msra.mxu0 0.0
    %2510 = vmatprep.subr.mxu0 0.0
    %2511 = vmatpush2.msra.mxu0 0.0
    %2512 = vmatprep.subr.mxu0 0.0
    %2513 = vmatpush2.msra.mxu0 0.0
    %2514 = vmatprep.subr.mxu0 0.0
    %2515 = vmatpush2.msra.mxu0 0.0
    %2516 = vmatprep.subr.mxu0 0.0
    %2517 = vmatpush2.msra.mxu0 0.0
    %2518 = vmatprep.subr.mxu0 0.0
    %2519 = vmatpush2.msra.mxu0 0.0
    %2520 = vmatprep.subr.mxu0 0.0
    %2521 = vmatpush2.msra.mxu0 0.0
    %2522 = vmatprep.subr.mxu0 0.0
    %2523 = vmatpush2.msra.mxu0 0.0
    %2524 = vmatprep.subr.mxu0 0.0
    %2525 = vmatpush2.msra.mxu0 0.0
    %2526 = vmatprep.subr.mxu0 0.0
    %2527 = vmatpush2.msra.mxu0 0.0
    %2528 = vmatprep.subr.mxu0 0.0
    %2529 = vmatpush2.msra.mxu0 0.0
    %2530 = vmatprep.mubr.f32.mxu0 0.0
    %v2531 = vand.u32 %v2235, 4294901760
    %v2532 = vsub.f32 %v2235, %v2531
    %2533 = vmatmul.mubr.f32.gmra.mxu0 %v2532
    %v2534 = vpop.f32.mrf.mxu0
    %v2535 = vadd.f32 %v2441, %v2534
    %v2536 = vpop.f32.mrf.mxu0
    %2537 = vmatprep.mubr.f32.mxu0 0.0
    %v2538 = vand.u32 %v2238, 4294901760
    %v2539 = vsub.f32 %v2238, %v2538
    %2540 = vmatmul.mubr.f32.gmra.mxu0 %v2539
    %v2541 = vpop.f32.mrf.mxu0
    %v2542 = vadd.f32 %v2447, %v2541
    %v2543 = vpop.f32.mrf.mxu0
    %2544 = vdwg.mxu0
    %2545 = vmatprep.subr.mxu0 0.0
    %2546 = vmatpush1.msra.mxu0 0.0
    %2547 = vmatprep.subr.mxu0 0.0
    %2548 = vmatpush1.msra.mxu0 0.0
    %2549 = vmatprep.subr.mxu0 0.0
    %2550 = vmatpush1.msra.mxu0 0.0
    %2551 = vmatprep.subr.mxu0 0.0
    %2552 = vmatpush1.msra.mxu0 0.0
    %2553 = vmatprep.subr.mxu0 0.0
    %2554 = vmatpush1.msra.mxu0 0.0
    %2555 = vmatprep.subr.mxu0 0.0
    %2556 = vmatpush1.msra.mxu0 0.0
    %2557 = vmatprep.subr.mxu0 0.0
    %2558 = vmatpush1.msra.mxu0 0.0
    %2559 = vmatprep.subr.mxu0 0.0
    %2560 = vmatpush1.msra.mxu0 0.0
    %2561 = vmatprep.subr.mxu0 0.0
    %v2562 = vand.u32 %v2232, 4294901760
    %2563 = vmatpush1.msra.mxu0 %v2562
    %2564 = vmatprep.subr.mxu0 0.0
    %v2565 = vand.u32 %v2231, 4294901760
    %2566 = vmatpush1.msra.mxu0 %v2565
    %2567 = vmatprep.subr.mxu0 0.0
    %v2568 = vand.u32 %v2230, 4294901760
    %2569 = vmatpush1.msra.mxu0 %v2568
    %2570 = vmatprep.subr.mxu0 0.0
    %v2571 = vand.u32 %v2229, 4294901760
    %2572 = vmatpush1.msra.mxu0 %v2571
    %2573 = vmatprep.subr.mxu0 0.0
    %v2574 = vand.u32 %v2228, 4294901760
    %2575 = vmatpush1.msra.mxu0 %v2574
    %2576 = vmatprep.subr.mxu0 0.0
    %v2577 = vand.u32 %v2227, 4294901760
    %2578 = vmatpush1.msra.mxu0 %v2577
    %2579 = vmatprep.subr.mxu0 0.0
    %v2580 = vand.u32 %v2226, 4294901760
    %2581 = vmatpush1.msra.mxu0 %v2580
    %2582 = vmatprep.subr.mxu0 0.0
    %v2583 = vand.u32 %v2225, 4294901760
    %2584 = vmatpush1.msra.mxu0 %v2583
    %2585 = vmatprep.subr.mxu0 0.0
    %2586 = vmatpush2.msra.mxu0 0.0
    %2587 = vmatprep.subr.mxu0 0.0
    %2588 = vmatpush2.msra.mxu0 0.0
    %2589 = vmatprep.subr.mxu0 0.0
    %2590 = vmatpush2.msra.mxu0 0.0
    %2591 = vmatprep.subr.mxu0 0.0
    %2592 = vmatpush2.msra.mxu0 0.0
    %2593 = vmatprep.subr.mxu0 0.0
    %2594 = vmatpush2.msra.mxu0 0.0
    %2595 = vmatprep.subr.mxu0 0.0
    %2596 = vmatpush2.msra.mxu0 0.0
    %2597 = vmatprep.subr.mxu0 0.0
    %2598 = vmatpush2.msra.mxu0 0.0
    %2599 = vmatprep.subr.mxu0 0.0
    %2600 = vmatpush2.msra.mxu0 0.0
    %2601 = vmatprep.subr.mxu0 0.0
    %2602 = vmatpush2.msra.mxu0 0.0
    %2603 = vmatprep.subr.mxu0 0.0
    %2604 = vmatpush2.msra.mxu0 0.0
    %2605 = vmatprep.subr.mxu0 0.0
    %2606 = vmatpush2.msra.mxu0 0.0
    %2607 = vmatprep.subr.mxu0 0.0
    %2608 = vmatpush2.msra.mxu0 0.0
    %2609 = vmatprep.subr.mxu0 0.0
    %2610 = vmatpush2.msra.mxu0 0.0
    %2611 = vmatprep.subr.mxu0 0.0
    %2612 = vmatpush2.msra.mxu0 0.0
    %2613 = vmatprep.subr.mxu0 0.0
    %2614 = vmatpush2.msra.mxu0 0.0
    %2615 = vmatprep.subr.mxu0 0.0
    %2616 = vmatpush2.msra.mxu0 0.0
    %2617 = vmatprep.mubr.f32.mxu0 0.0
    %v2618 = vand.u32 %v2235, 4294901760
    %v2619 = vsub.f32 %v2235, %v2618
    %v2620 = vand.u32 %v2619, 4294901760
    %2621 = vmatmul.mubr.f32.gmra.mxu0 %v2620
    %v2622 = vpop.f32.mrf.mxu0
    %v2623 = vadd.f32 %v2535, %v2622
    %v2624 = vpop.f32.mrf.mxu0
    %2625 = vmatprep.mubr.f32.mxu0 0.0
    %v2626 = vand.u32 %v2238, 4294901760
    %v2627 = vsub.f32 %v2238, %v2626
    %v2628 = vand.u32 %v2627, 4294901760
    %2629 = vmatmul.mubr.f32.gmra.mxu0 %v2628
    %v2630 = vpop.f32.mrf.mxu0
    %v2631 = vadd.f32 %v2542, %v2630
    %v2632 = vpop.f32.mrf.mxu0
    %2633 = vdwg.mxu0
    %2634 = vmatprep.subr.mxu0 0.0
    %2635 = vmatpush1.msra.mxu0 0.0
    %2636 = vmatprep.subr.mxu0 0.0
    %2637 = vmatpush1.msra.mxu0 0.0
    %2638 = vmatprep.subr.mxu0 0.0
    %2639 = vmatpush1.msra.mxu0 0.0
    %2640 = vmatprep.subr.mxu0 0.0
    %2641 = vmatpush1.msra.mxu0 0.0
    %2642 = vmatprep.subr.mxu0 0.0
    %2643 = vmatpush1.msra.mxu0 0.0
    %2644 = vmatprep.subr.mxu0 0.0
    %2645 = vmatpush1.msra.mxu0 0.0
    %2646 = vmatprep.subr.mxu0 0.0
    %2647 = vmatpush1.msra.mxu0 0.0
    %2648 = vmatprep.subr.mxu0 0.0
    %2649 = vmatpush1.msra.mxu0 0.0
    %2650 = vmatprep.subr.mxu0 0.0
    %v2651 = vand.u32 %v2232, 4294901760
    %v2652 = vsub.f32 %v2232, %v2651
    %v2653 = vand.u32 %v2652, 4294901760
    %2654 = vmatpush1.msra.mxu0 %v2653
    %2655 = vmatprep.subr.mxu0 0.0
    %v2656 = vand.u32 %v2231, 4294901760
    %v2657 = vsub.f32 %v2231, %v2656
    %v2658 = vand.u32 %v2657, 4294901760
    %2659 = vmatpush1.msra.mxu0 %v2658
    %2660 = vmatprep.subr.mxu0 0.0
    %v2661 = vand.u32 %v2230, 4294901760
    %v2662 = vsub.f32 %v2230, %v2661
    %v2663 = vand.u32 %v2662, 4294901760
    %2664 = vmatpush1.msra.mxu0 %v2663
    %2665 = vmatprep.subr.mxu0 0.0
    %v2666 = vand.u32 %v2229, 4294901760
    %v2667 = vsub.f32 %v2229, %v2666
    %v2668 = vand.u32 %v2667, 4294901760
    %2669 = vmatpush1.msra.mxu0 %v2668
    %2670 = vmatprep.subr.mxu0 0.0
    %v2671 = vand.u32 %v2228, 4294901760
    %v2672 = vsub.f32 %v2228, %v2671
    %v2673 = vand.u32 %v2672, 4294901760
    %2674 = vmatpush1.msra.mxu0 %v2673
    %2675 = vmatprep.subr.mxu0 0.0
    %v2676 = vand.u32 %v2227, 4294901760
    %v2677 = vsub.f32 %v2227, %v2676
    %v2678 = vand.u32 %v2677, 4294901760
    %2679 = vmatpush1.msra.mxu0 %v2678
    %2680 = vmatprep.subr.mxu0 0.0
    %v2681 = vand.u32 %v2226, 4294901760
    %v2682 = vsub.f32 %v2226, %v2681
    %v2683 = vand.u32 %v2682, 4294901760
    %2684 = vmatpush1.msra.mxu0 %v2683
    %2685 = vmatprep.subr.mxu0 0.0
    %v2686 = vand.u32 %v2225, 4294901760
    %v2687 = vsub.f32 %v2225, %v2686
    %v2688 = vand.u32 %v2687, 4294901760
    %2689 = vmatpush1.msra.mxu0 %v2688
    %2690 = vmatprep.subr.mxu0 0.0
    %2691 = vmatpush2.msra.mxu0 0.0
    %2692 = vmatprep.subr.mxu0 0.0
    %2693 = vmatpush2.msra.mxu0 0.0
    %2694 = vmatprep.subr.mxu0 0.0
    %2695 = vmatpush2.msra.mxu0 0.0
    %2696 = vmatprep.subr.mxu0 0.0
    %2697 = vmatpush2.msra.mxu0 0.0
    %2698 = vmatprep.subr.mxu0 0.0
    %2699 = vmatpush2.msra.mxu0 0.0
    %2700 = vmatprep.subr.mxu0 0.0
    %2701 = vmatpush2.msra.mxu0 0.0
    %2702 = vmatprep.subr.mxu0 0.0
    %2703 = vmatpush2.msra.mxu0 0.0
    %2704 = vmatprep.subr.mxu0 0.0
    %2705 = vmatpush2.msra.mxu0 0.0
    %2706 = vmatprep.subr.mxu0 0.0
    %2707 = vmatpush2.msra.mxu0 0.0
    %2708 = vmatprep.subr.mxu0 0.0
    %2709 = vmatpush2.msra.mxu0 0.0
    %2710 = vmatprep.subr.mxu0 0.0
    %2711 = vmatpush2.msra.mxu0 0.0
    %2712 = vmatprep.subr.mxu0 0.0
    %2713 = vmatpush2.msra.mxu0 0.0
    %2714 = vmatprep.subr.mxu0 0.0
    %2715 = vmatpush2.msra.mxu0 0.0
    %2716 = vmatprep.subr.mxu0 0.0
    %2717 = vmatpush2.msra.mxu0 0.0
    %2718 = vmatprep.subr.mxu0 0.0
    %2719 = vmatpush2.msra.mxu0 0.0
    %2720 = vmatprep.subr.mxu0 0.0
    %2721 = vmatpush2.msra.mxu0 0.0
    %2722 = vmatprep.mubr.f32.mxu0 0.0
    %v2723 = vand.u32 %v2235, 4294901760
    %2724 = vmatmul.mubr.f32.gmra.mxu0 %v2723
    %v2725 = vpop.f32.mrf.mxu0
    %v2726 = vadd.f32 %v2623, %v2725
    %v2727 = vpop.f32.mrf.mxu0
    %2728 = vmatprep.mubr.f32.mxu0 0.0
    %v2729 = vand.u32 %v2238, 4294901760
    %2730 = vmatmul.mubr.f32.gmra.mxu0 %v2729
    %v2731 = vpop.f32.mrf.mxu0
    %v2732 = vadd.f32 %v2631, %v2731
    %v2733 = vpop.f32.mrf.mxu0
    %2734 = vdwg.mxu0
    %2735 = vmatprep.subr.mxu0 0.0
    %2736 = vmatpush1.msra.mxu0 0.0
    %2737 = vmatprep.subr.mxu0 0.0
    %2738 = vmatpush1.msra.mxu0 0.0
    %2739 = vmatprep.subr.mxu0 0.0
    %2740 = vmatpush1.msra.mxu0 0.0
    %2741 = vmatprep.subr.mxu0 0.0
    %2742 = vmatpush1.msra.mxu0 0.0
    %2743 = vmatprep.subr.mxu0 0.0
    %2744 = vmatpush1.msra.mxu0 0.0
    %2745 = vmatprep.subr.mxu0 0.0
    %2746 = vmatpush1.msra.mxu0 0.0
    %2747 = vmatprep.subr.mxu0 0.0
    %2748 = vmatpush1.msra.mxu0 0.0
    %2749 = vmatprep.subr.mxu0 0.0
    %2750 = vmatpush1.msra.mxu0 0.0
    %2751 = vmatprep.subr.mxu0 0.0
    %v2752 = vand.u32 %v2232, 4294901760
    %2753 = vmatpush1.msra.mxu0 %v2752
    %2754 = vmatprep.subr.mxu0 0.0
    %v2755 = vand.u32 %v2231, 4294901760
    %2756 = vmatpush1.msra.mxu0 %v2755
    %2757 = vmatprep.subr.mxu0 0.0
    %v2758 = vand.u32 %v2230, 4294901760
    %2759 = vmatpush1.msra.mxu0 %v2758
    %2760 = vmatprep.subr.mxu0 0.0
    %v2761 = vand.u32 %v2229, 4294901760
    %2762 = vmatpush1.msra.mxu0 %v2761
    %2763 = vmatprep.subr.mxu0 0.0
    %v2764 = vand.u32 %v2228, 4294901760
    %2765 = vmatpush1.msra.mxu0 %v2764
    %2766 = vmatprep.subr.mxu0 0.0
    %v2767 = vand.u32 %v2227, 4294901760
    %2768 = vmatpush1.msra.mxu0 %v2767
    %2769 = vmatprep.subr.mxu0 0.0
    %v2770 = vand.u32 %v2226, 4294901760
    %2771 = vmatpush1.msra.mxu0 %v2770
    %2772 = vmatprep.subr.mxu0 0.0
    %v2773 = vand.u32 %v2225, 4294901760
    %2774 = vmatpush1.msra.mxu0 %v2773
    %2775 = vmatprep.subr.mxu0 0.0
    %2776 = vmatpush2.msra.mxu0 0.0
    %2777 = vmatprep.subr.mxu0 0.0
    %2778 = vmatpush2.msra.mxu0 0.0
    %2779 = vmatprep.subr.mxu0 0.0
    %2780 = vmatpush2.msra.mxu0 0.0
    %2781 = vmatprep.subr.mxu0 0.0
    %2782 = vmatpush2.msra.mxu0 0.0
    %2783 = vmatprep.subr.mxu0 0.0
    %2784 = vmatpush2.msra.mxu0 0.0
    %2785 = vmatprep.subr.mxu0 0.0
    %2786 = vmatpush2.msra.mxu0 0.0
    %2787 = vmatprep.subr.mxu0 0.0
    %2788 = vmatpush2.msra.mxu0 0.0
    %2789 = vmatprep.subr.mxu0 0.0
    %2790 = vmatpush2.msra.mxu0 0.0
    %2791 = vmatprep.subr.mxu0 0.0
    %2792 = vmatpush2.msra.mxu0 0.0
    %2793 = vmatprep.subr.mxu0 0.0
    %2794 = vmatpush2.msra.mxu0 0.0
    %2795 = vmatprep.subr.mxu0 0.0
    %2796 = vmatpush2.msra.mxu0 0.0
    %2797 = vmatprep.subr.mxu0 0.0
    %2798 = vmatpush2.msra.mxu0 0.0
    %2799 = vmatprep.subr.mxu0 0.0
    %2800 = vmatpush2.msra.mxu0 0.0
    %2801 = vmatprep.subr.mxu0 0.0
    %2802 = vmatpush2.msra.mxu0 0.0
    %2803 = vmatprep.subr.mxu0 0.0
    %2804 = vmatpush2.msra.mxu0 0.0
    %2805 = vmatprep.subr.mxu0 0.0
    %2806 = vmatpush2.msra.mxu0 0.0
    %2807 = vmatprep.mubr.f32.mxu0 0.0
    %v2808 = vand.u32 %v2235, 4294901760
    %2809 = vmatmul.mubr.f32.gmra.mxu0 %v2808
    %v2810 = vpop.f32.mrf.mxu0
    %v2811 = vadd.f32 %v2726, %v2810
    %v2812 = vpop.f32.mrf.mxu0
    %2813 = vmatprep.mubr.f32.mxu0 0.0
    %v2814 = vand.u32 %v2238, 4294901760
    %2815 = vmatmul.mubr.f32.gmra.mxu0 %v2814
    %v2816 = vpop.f32.mrf.mxu0
    %v2817 = vadd.f32 %v2732, %v2816
    %v2818 = vpop.f32.mrf.mxu0
    %2819 = vdwg.mxu0
    %v2820 = vlaneseq
    %v2821 = vshrl.u32 %v2820, 7
    %v2822 = vsub.s32 0, %v2821
    %v2823 = vrot.slane %v36, %v2822
    %v2824 = vadd.f32 %v2811, %v2823
    %v2825 = vadd.f32 %v2817, %v2823
    %v2826 = vmax.f32 %v2824, 0.0
    %v2827 = vmax.f32 %v2825, 0.0
    %v2828 = vand.u32 2147483647, %v2824
    %v2829 = vand.u32 2147483647, %v2825
    %v2830 = vsub.f32 0.0, %v2828
    %v2831 = vsub.f32 0.0, %v2829
    %v2832 = vmul.f32 %v2830, 1.442695
    %v2833 = vpow.pop %v2832
    %v2834 = vmul.f32 %v2831, 1.442695
    %v2835 = vpow.pop %v2834
    %v2836 = vadd.f32 %v2833, 1.0
    %v2837 = vadd.f32 %v2835, 1.0
    %v2838 = vlog2.pop %v2836
    %v2839 = vmul.f32 %v2838, 0.6931472
    %v2840 = vlog2.pop %v2837
    %v2841 = vmul.f32 %v2840, 0.6931472
    %v2842 = vadd.f32 %v2826, %v2839
    %v2843 = vadd.f32 %v2827, %v2841
    %2846 = vrot.lane.b32.xlu0 %v2811, 64
    %v2847 = vpop.permute.xlu0 %2846
    %2848 = vrot.lane.b32.xlu0 %v2817, 64
    %v2849 = vpop.permute.xlu0 %2848
    %2852 = vxpose.xlu0.b32.start [1/16] %v2847, 128
    %2853 = vxpose.xlu0.b32.cont [2/16] %v2849, 128
    %2854 = vxpose.xlu0.b32.cont [3/16] 0.0, 128
    %2855 = vxpose.xlu0.b32.cont [4/16] 0.0, 128
    %2856 = vxpose.xlu0.b32.cont [5/16] 0.0, 128
    %2857 = vxpose.xlu0.b32.cont [6/16] 0.0, 128
    %2858 = vxpose.xlu0.b32.cont [7/16] 0.0, 128
    %2859 = vxpose.xlu0.b32.cont [8/16] 0.0, 128
    %2860 = vxpose.xlu0.b32.cont [9/16] 0.0, 128
    %2861 = vxpose.xlu0.b32.cont [10/16] 0.0, 128
    %2862 = vxpose.xlu0.b32.cont [11/16] 0.0, 128
    %2863 = vxpose.xlu0.b32.cont [12/16] 0.0, 128
    %2864 = vxpose.xlu0.b32.cont [13/16] 0.0, 128
    %2865 = vxpose.xlu0.b32.cont [14/16] 0.0, 128
    %2866 = vxpose.xlu0.b32.cont [15/16] 0.0, 128
    %2867 = vxpose.xlu0.b32.end [16/16] 0.0, 128
    %v2868 = vpop.trf.xlu0
    %v2869 = vpop.trf.xlu0
    %v2870 = vpop.trf.xlu0
    %v2871 = vpop.trf.xlu0
    %v2872 = vpop.trf.xlu0
    %v2873 = vpop.trf.xlu0
    %v2874 = vpop.trf.xlu0
    %v2875 = vpop.trf.xlu0
    %v2876 = vpop.trf.xlu0
    %v2877 = vpop.trf.xlu0
    %v2878 = vpop.trf.xlu0
    %v2879 = vpop.trf.xlu0
    %v2880 = vpop.trf.xlu0
    %v2881 = vpop.trf.xlu0
    %v2882 = vpop.trf.xlu0
    %v2883 = vpop.trf.xlu0
    %v2884 = vld [vmem:[%s4] sm:$0xff]
    %v2885 = vld [vmem:[%s4 + $0x8] sm:$0xff]
    %v2886 = vmul.f32 %v2842, %v2223
    %v2887 = vmul.f32 %v2843, %v2224
    %v2888 = vlaneseq
    %v2889 = vshrl.u32 %v2888, 7
    %v2890 = vsub.s32 0, %v2889
    %v2891 = vrot.slane %v2842, %v2890
    %v2892 = vmul.f32 %v2891, %v2884
    %v2893 = vmul.f32 %v2891, %v2885
    %v2894 = vmul.f32 %v2892, 1.442695
    %v2895 = vpow.pop %v2894
    %v2896 = vmul.f32 %v2893, 1.442695
    %v2897 = vpow.pop %v2896
    %v2898 = vmul.f32 %v2895, 0.0
    %v2899 = vmul.f32 %v2897, 0.0
    %2901 = vset.pattern.permute.xlu0 0
    %2902 = vperm.xlu0 %2901, %v2868
    %v2903 = vpop.permute.xlu0 %2902
    %2906 = vset.pattern.permute.xlu0 0
    %2907 = vperm.xlu0 %2906, %v2869
    %v2908 = vpop.permute.xlu0 %2907
    %v2910 = vlaneseq
    %v2911 = vshrl.u32 %v2910, 7
    %v2912 = vsub.s32 0, %v2911
    %v2913 = vrot.slane %v2886, %v2912
    %v2914 = vmul.f32 %v2903, %v2913
    %v2915 = vmul.f32 %v2908, %v2913
    %v2916 = vadd.f32 %v2898, %v2914
    %v2917 = vadd.f32 %v2899, %v2915
    %2919 = vset.pattern.permute.xlu0 0
    %2920 = vperm.xlu0 %2919, %v2870
    %v2921 = vpop.permute.xlu0 %2920
    %2924 = vset.pattern.permute.xlu0 0
    %2925 = vperm.xlu0 %2924, %v2871
    %v2926 = vpop.permute.xlu0 %2925
    %v2928 = vmul.f32 %v2916, %v2921
    %v2929 = vmul.f32 %v2917, %v2926
    %v2930 = vsel %vm2233, %v2928, 0.0
    %v2931 = vsel %vm2233, %v2929, 0.0
    %v2932 = vadd.f32 %v2930, %v2931
    %v2933 = vrot.slane %v2932, 4
    %v2934 = vadd.f32 %v2932, %v2933
    %v2935 = vrot.slane %v2934, 2
    %v2936 = vadd.f32 %v2934, %v2935
    %v2937 = vrot.slane %v2936, 1
    %v2938 = vadd.f32 %v2936, %v2937
    %vm2939 = vcmp.eq.s32.totalorder %v618, 0
    %vm2940 = vcmp.eq.s32.totalorder %v619, 0
    %v2941 = vsel %vm2939, 1.0, 0.0
    %v2942 = vsel %vm2940, 1.0, 0.0
    %v2943 = vmul.f32 %v2941, %v2938
    %v2944 = vmul.f32 %v2942, %v2938
    %v2945 = vadd.f32 %v2943, 0.0
    %v2946 = vadd.f32 %v2944, 0.0
    %v2947 = vlaneseq
    %v2948 = vshrl.u32 %v2947, 7
    %v2949 = vsub.s32 1, %v2948
    %v2950 = vrot.slane %v2842, %v2949
    %v2951 = vmul.f32 %v2950, %v2884
    %v2952 = vmul.f32 %v2950, %v2885
    %v2953 = vmul.f32 %v2951, 1.442695
    %v2954 = vpow.pop %v2953
    %v2955 = vmul.f32 %v2952, 1.442695
    %v2956 = vpow.pop %v2955
    %v2957 = vmul.f32 %v2954, %v2916
    %v2958 = vmul.f32 %v2956, %v2917
    %2959 = vset.pattern.permute.xlu0 1
    %2960 = vperm.xlu0 %2959, %v2868
    %v2961 = vpop.permute.xlu0 %2960
    %2963 = vset.pattern.permute.xlu0 1
    %2964 = vperm.xlu0 %2963, %v2869
    %v2965 = vpop.permute.xlu0 %2964
    %v2967 = vlaneseq
    %v2968 = vshrl.u32 %v2967, 7
    %v2969 = vsub.s32 1, %v2968
    %v2970 = vrot.slane %v2886, %v2969
    %v2971 = vmul.f32 %v2961, %v2970
    %v2972 = vmul.f32 %v2965, %v2970
    %v2973 = vadd.f32 %v2957, %v2971
    %v2974 = vadd.f32 %v2958, %v2972
    %2975 = vset.pattern.permute.xlu0 1
    %2976 = vperm.xlu0 %2975, %v2870
    %v2977 = vpop.permute.xlu0 %2976
    %2979 = vset.pattern.permute.xlu0 1
    %2980 = vperm.xlu0 %2979, %v2871
    %v2981 = vpop.permute.xlu0 %2980
    %v2983 = vmul.f32 %v2973, %v2977
    %v2984 = vmul.f32 %v2974, %v2981
    %v2985 = vsel %vm2233, %v2983, 0.0
    %v2986 = vsel %vm2233, %v2984, 0.0
    %v2987 = vadd.f32 %v2985, %v2986
    %v2988 = vrot.slane %v2987, 4
    %v2989 = vadd.f32 %v2987, %v2988
    %v2990 = vrot.slane %v2989, 2
    %v2991 = vadd.f32 %v2989, %v2990
    %v2992 = vrot.slane %v2991, 1
    %v2993 = vadd.f32 %v2991, %v2992
    %vm2994 = vcmp.eq.s32.totalorder %v618, 1
    %vm2995 = vcmp.eq.s32.totalorder %v619, 1
    %v2996 = vsel %vm2994, 1.0, 0.0
    %v2997 = vsel %vm2995, 1.0, 0.0
    %v2998 = vmul.f32 %v2996, %v2993
    %v2999 = vmul.f32 %v2997, %v2993
    %v3000 = vadd.f32 %v2945, %v2998
    %v3001 = vadd.f32 %v2946, %v2999
    %v3002 = vlaneseq
    %v3003 = vshrl.u32 %v3002, 7
    %v3004 = vsub.s32 2, %v3003
    %v3005 = vrot.slane %v2842, %v3004
    %v3006 = vmul.f32 %v3005, %v2884
    %v3007 = vmul.f32 %v3005, %v2885
    %v3008 = vmul.f32 %v3006, 1.442695
    %v3009 = vpow.pop %v3008
    %v3010 = vmul.f32 %v3007, 1.442695
    %v3011 = vpow.pop %v3010
    %v3012 = vmul.f32 %v3009, %v2973
    %v3013 = vmul.f32 %v3011, %v2974
    %3014 = vset.pattern.permute.xlu0 2
    %3015 = vperm.xlu0 %3014, %v2868
    %v3016 = vpop.permute.xlu0 %3015
    %3018 = vset.pattern.permute.xlu0 2
    %3019 = vperm.xlu0 %3018, %v2869
    %v3020 = vpop.permute.xlu0 %3019
    %v3022 = vlaneseq
    %v3023 = vshrl.u32 %v3022, 7
    %v3024 = vsub.s32 2, %v3023
    %v3025 = vrot.slane %v2886, %v3024
    %v3026 = vmul.f32 %v3016, %v3025
    %v3027 = vmul.f32 %v3020, %v3025
    %v3028 = vadd.f32 %v3012, %v3026
    %v3029 = vadd.f32 %v3013, %v3027
    %3030 = vset.pattern.permute.xlu0 2
    %3031 = vperm.xlu0 %3030, %v2870
    %v3032 = vpop.permute.xlu0 %3031
    %3034 = vset.pattern.permute.xlu0 2
    %3035 = vperm.xlu0 %3034, %v2871
    %v3036 = vpop.permute.xlu0 %3035
    %v3038 = vmul.f32 %v3028, %v3032
    %v3039 = vmul.f32 %v3029, %v3036
    %v3040 = vsel %vm2233, %v3038, 0.0
    %v3041 = vsel %vm2233, %v3039, 0.0
    %v3042 = vadd.f32 %v3040, %v3041
    %v3043 = vrot.slane %v3042, 4
    %v3044 = vadd.f32 %v3042, %v3043
    %v3045 = vrot.slane %v3044, 2
    %v3046 = vadd.f32 %v3044, %v3045
    %v3047 = vrot.slane %v3046, 1
    %v3048 = vadd.f32 %v3046, %v3047
    %vm3049 = vcmp.eq.s32.totalorder %v618, 2
    %vm3050 = vcmp.eq.s32.totalorder %v619, 2
    %v3051 = vsel %vm3049, 1.0, 0.0
    %v3052 = vsel %vm3050, 1.0, 0.0
    %v3053 = vmul.f32 %v3051, %v3048
    %v3054 = vmul.f32 %v3052, %v3048
    %v3055 = vadd.f32 %v3000, %v3053
    %v3056 = vadd.f32 %v3001, %v3054
    %v3057 = vlaneseq
    %v3058 = vshrl.u32 %v3057, 7
    %v3059 = vsub.s32 3, %v3058
    %v3060 = vrot.slane %v2842, %v3059
    %v3061 = vmul.f32 %v3060, %v2884
    %v3062 = vmul.f32 %v3060, %v2885
    %v3063 = vmul.f32 %v3061, 1.442695
    %v3064 = vpow.pop %v3063
    %v3065 = vmul.f32 %v3062, 1.442695
    %v3066 = vpow.pop %v3065
    %v3067 = vmul.f32 %v3064, %v3028
    %v3068 = vmul.f32 %v3066, %v3029
    %3069 = vset.pattern.permute.xlu0 3
    %3070 = vperm.xlu0 %3069, %v2868
    %v3071 = vpop.permute.xlu0 %3070
    %3073 = vset.pattern.permute.xlu0 3
    %3074 = vperm.xlu0 %3073, %v2869
    %v3075 = vpop.permute.xlu0 %3074
    %v3077 = vlaneseq
    %v3078 = vshrl.u32 %v3077, 7
    %v3079 = vsub.s32 3, %v3078
    %v3080 = vrot.slane %v2886, %v3079
    %v3081 = vmul.f32 %v3071, %v3080
    %v3082 = vmul.f32 %v3075, %v3080
    %v3083 = vadd.f32 %v3067, %v3081
    %v3084 = vadd.f32 %v3068, %v3082
    %3085 = vset.pattern.permute.xlu0 3
    %3086 = vperm.xlu0 %3085, %v2870
    %v3087 = vpop.permute.xlu0 %3086
    %3089 = vset.pattern.permute.xlu0 3
    %3090 = vperm.xlu0 %3089, %v2871
    %v3091 = vpop.permute.xlu0 %3090
    %v3093 = vmul.f32 %v3083, %v3087
    %v3094 = vmul.f32 %v3084, %v3091
    %v3095 = vsel %vm2233, %v3093, 0.0
    %v3096 = vsel %vm2233, %v3094, 0.0
    %v3097 = vadd.f32 %v3095, %v3096
    %v3098 = vrot.slane %v3097, 4
    %v3099 = vadd.f32 %v3097, %v3098
    %v3100 = vrot.slane %v3099, 2
    %v3101 = vadd.f32 %v3099, %v3100
    %v3102 = vrot.slane %v3101, 1
    %v3103 = vadd.f32 %v3101, %v3102
    %vm3104 = vcmp.eq.s32.totalorder %v618, 3
    %vm3105 = vcmp.eq.s32.totalorder %v619, 3
    %v3106 = vsel %vm3104, 1.0, 0.0
    %v3107 = vsel %vm3105, 1.0, 0.0
    %v3108 = vmul.f32 %v3106, %v3103
    %v3109 = vmul.f32 %v3107, %v3103
    %v3110 = vadd.f32 %v3055, %v3108
    %v3111 = vadd.f32 %v3056, %v3109
    %v3112 = vlaneseq
    %v3113 = vshrl.u32 %v3112, 7
    %v3114 = vsub.s32 4, %v3113
    %v3115 = vrot.slane %v2842, %v3114
    %v3116 = vmul.f32 %v3115, %v2884
    %v3117 = vmul.f32 %v3115, %v2885
    %v3118 = vmul.f32 %v3116, 1.442695
    %v3119 = vpow.pop %v3118
    %v3120 = vmul.f32 %v3117, 1.442695
    %v3121 = vpow.pop %v3120
    %v3122 = vmul.f32 %v3119, %v3083
    %v3123 = vmul.f32 %v3121, %v3084
    %3124 = vset.pattern.permute.xlu0 4
    %3125 = vperm.xlu0 %3124, %v2868
    %v3126 = vpop.permute.xlu0 %3125
    %3128 = vset.pattern.permute.xlu0 4
    %3129 = vperm.xlu0 %3128, %v2869
    %v3130 = vpop.permute.xlu0 %3129
    %v3132 = vlaneseq
    %v3133 = vshrl.u32 %v3132, 7
    %v3134 = vsub.s32 4, %v3133
    %v3135 = vrot.slane %v2886, %v3134
    %v3136 = vmul.f32 %v3126, %v3135
    %v3137 = vmul.f32 %v3130, %v3135
    %v3138 = vadd.f32 %v3122, %v3136
    %v3139 = vadd.f32 %v3123, %v3137
    %3140 = vset.pattern.permute.xlu0 4
    %3141 = vperm.xlu0 %3140, %v2870
    %v3142 = vpop.permute.xlu0 %3141
    %3144 = vset.pattern.permute.xlu0 4
    %3145 = vperm.xlu0 %3144, %v2871
    %v3146 = vpop.permute.xlu0 %3145
    %v3148 = vmul.f32 %v3138, %v3142
    %v3149 = vmul.f32 %v3139, %v3146
    %v3150 = vsel %vm2233, %v3148, 0.0
    %v3151 = vsel %vm2233, %v3149, 0.0
    %v3152 = vadd.f32 %v3150, %v3151
    %v3153 = vrot.slane %v3152, 4
    %v3154 = vadd.f32 %v3152, %v3153
    %v3155 = vrot.slane %v3154, 2
    %v3156 = vadd.f32 %v3154, %v3155
    %v3157 = vrot.slane %v3156, 1
    %v3158 = vadd.f32 %v3156, %v3157
    %vm3159 = vcmp.eq.s32.totalorder %v618, 4
    %vm3160 = vcmp.eq.s32.totalorder %v619, 4
    %v3161 = vsel %vm3159, 1.0, 0.0
    %v3162 = vsel %vm3160, 1.0, 0.0
    %v3163 = vmul.f32 %v3161, %v3158
    %v3164 = vmul.f32 %v3162, %v3158
    %v3165 = vadd.f32 %v3110, %v3163
    %v3166 = vadd.f32 %v3111, %v3164
    %v3167 = vlaneseq
    %v3168 = vshrl.u32 %v3167, 7
    %v3169 = vsub.s32 5, %v3168
    %v3170 = vrot.slane %v2842, %v3169
    %v3171 = vmul.f32 %v3170, %v2884
    %v3172 = vmul.f32 %v3170, %v2885
    %v3173 = vmul.f32 %v3171, 1.442695
    %v3174 = vpow.pop %v3173
    %v3175 = vmul.f32 %v3172, 1.442695
    %v3176 = vpow.pop %v3175
    %v3177 = vmul.f32 %v3174, %v3138
    %v3178 = vmul.f32 %v3176, %v3139
    %3179 = vset.pattern.permute.xlu0 5
    %3180 = vperm.xlu0 %3179, %v2868
    %v3181 = vpop.permute.xlu0 %3180
    %3183 = vset.pattern.permute.xlu0 5
    %3184 = vperm.xlu0 %3183, %v2869
    %v3185 = vpop.permute.xlu0 %3184
    %v3187 = vlaneseq
    %v3188 = vshrl.u32 %v3187, 7
    %v3189 = vsub.s32 5, %v3188
    %v3190 = vrot.slane %v2886, %v3189
    %v3191 = vmul.f32 %v3181, %v3190
    %v3192 = vmul.f32 %v3185, %v3190
    %v3193 = vadd.f32 %v3177, %v3191
    %v3194 = vadd.f32 %v3178, %v3192
    %3195 = vset.pattern.permute.xlu0 5
    %3196 = vperm.xlu0 %3195, %v2870
    %v3197 = vpop.permute.xlu0 %3196
    %3199 = vset.pattern.permute.xlu0 5
    %3200 = vperm.xlu0 %3199, %v2871
    %v3201 = vpop.permute.xlu0 %3200
    %v3203 = vmul.f32 %v3193, %v3197
    %v3204 = vmul.f32 %v3194, %v3201
    %v3205 = vsel %vm2233, %v3203, 0.0
    %v3206 = vsel %vm2233, %v3204, 0.0
    %v3207 = vadd.f32 %v3205, %v3206
    %v3208 = vrot.slane %v3207, 4
    %v3209 = vadd.f32 %v3207, %v3208
    %v3210 = vrot.slane %v3209, 2
    %v3211 = vadd.f32 %v3209, %v3210
    %v3212 = vrot.slane %v3211, 1
    %v3213 = vadd.f32 %v3211, %v3212
    %vm3214 = vcmp.eq.s32.totalorder %v618, 5
    %vm3215 = vcmp.eq.s32.totalorder %v619, 5
    %v3216 = vsel %vm3214, 1.0, 0.0
    %v3217 = vsel %vm3215, 1.0, 0.0
    %v3218 = vmul.f32 %v3216, %v3213
    %v3219 = vmul.f32 %v3217, %v3213
    %v3220 = vadd.f32 %v3165, %v3218
    %v3221 = vadd.f32 %v3166, %v3219
    %v3222 = vlaneseq
    %v3223 = vshrl.u32 %v3222, 7
    %v3224 = vsub.s32 6, %v3223
    %v3225 = vrot.slane %v2842, %v3224
    %v3226 = vmul.f32 %v3225, %v2884
    %v3227 = vmul.f32 %v3225, %v2885
    %v3228 = vmul.f32 %v3226, 1.442695
    %v3229 = vpow.pop %v3228
    %v3230 = vmul.f32 %v3227, 1.442695
    %v3231 = vpow.pop %v3230
    %v3232 = vmul.f32 %v3229, %v3193
    %v3233 = vmul.f32 %v3231, %v3194
    %3234 = vset.pattern.permute.xlu0 6
    %3235 = vperm.xlu0 %3234, %v2868
    %v3236 = vpop.permute.xlu0 %3235
    %3238 = vset.pattern.permute.xlu0 6
    %3239 = vperm.xlu0 %3238, %v2869
    %v3240 = vpop.permute.xlu0 %3239
    %v3242 = vlaneseq
    %v3243 = vshrl.u32 %v3242, 7
    %v3244 = vsub.s32 6, %v3243
    %v3245 = vrot.slane %v2886, %v3244
    %v3246 = vmul.f32 %v3236, %v3245
    %v3247 = vmul.f32 %v3240, %v3245
    %v3248 = vadd.f32 %v3232, %v3246
    %v3249 = vadd.f32 %v3233, %v3247
    %3250 = vset.pattern.permute.xlu0 6
    %3251 = vperm.xlu0 %3250, %v2870
    %v3252 = vpop.permute.xlu0 %3251
    %3254 = vset.pattern.permute.xlu0 6
    %3255 = vperm.xlu0 %3254, %v2871
    %v3256 = vpop.permute.xlu0 %3255
    %v3258 = vmul.f32 %v3248, %v3252
    %v3259 = vmul.f32 %v3249, %v3256
    %v3260 = vsel %vm2233, %v3258, 0.0
    %v3261 = vsel %vm2233, %v3259, 0.0
    %v3262 = vadd.f32 %v3260, %v3261
    %v3263 = vrot.slane %v3262, 4
    %v3264 = vadd.f32 %v3262, %v3263
    %v3265 = vrot.slane %v3264, 2
    %v3266 = vadd.f32 %v3264, %v3265
    %v3267 = vrot.slane %v3266, 1
    %v3268 = vadd.f32 %v3266, %v3267
    %vm3269 = vcmp.eq.s32.totalorder %v618, 6
    %vm3270 = vcmp.eq.s32.totalorder %v619, 6
    %v3271 = vsel %vm3269, 1.0, 0.0
    %v3272 = vsel %vm3270, 1.0, 0.0
    %v3273 = vmul.f32 %v3271, %v3268
    %v3274 = vmul.f32 %v3272, %v3268
    %v3275 = vadd.f32 %v3220, %v3273
    %v3276 = vadd.f32 %v3221, %v3274
    %v3277 = vlaneseq
    %v3278 = vshrl.u32 %v3277, 7
    %v3279 = vsub.s32 7, %v3278
    %v3280 = vrot.slane %v2842, %v3279
    %v3281 = vmul.f32 %v3280, %v2884
    %v3282 = vmul.f32 %v3280, %v2885
    %v3283 = vmul.f32 %v3281, 1.442695
    %v3284 = vpow.pop %v3283
    %v3285 = vmul.f32 %v3282, 1.442695
    %v3286 = vpow.pop %v3285
    %v3287 = vmul.f32 %v3284, %v3248
    %v3288 = vmul.f32 %v3286, %v3249
    %3289 = vset.pattern.permute.xlu0 7
    %3290 = vperm.xlu0 %3289, %v2868
    %v3291 = vpop.permute.xlu0 %3290
    %3293 = vset.pattern.permute.xlu0 7
    %3294 = vperm.xlu0 %3293, %v2869
    %v3295 = vpop.permute.xlu0 %3294
    %v3297 = vlaneseq
    %v3298 = vshrl.u32 %v3297, 7
    %v3299 = vsub.s32 7, %v3298
    %v3300 = vrot.slane %v2886, %v3299
    %v3301 = vmul.f32 %v3291, %v3300
    %v3302 = vmul.f32 %v3295, %v3300
    %v3303 = vadd.f32 %v3287, %v3301
    %v3304 = vadd.f32 %v3288, %v3302
    %3305 = vset.pattern.permute.xlu0 7
    %3306 = vperm.xlu0 %3305, %v2870
    %v3307 = vpop.permute.xlu0 %3306
    %3309 = vset.pattern.permute.xlu0 7
    %3310 = vperm.xlu0 %3309, %v2871
    %v3311 = vpop.permute.xlu0 %3310
    %v3313 = vmul.f32 %v3303, %v3307
    %v3314 = vmul.f32 %v3304, %v3311
    %v3315 = vsel %vm2233, %v3313, 0.0
    %v3316 = vsel %vm2233, %v3314, 0.0
    %v3317 = vadd.f32 %v3315, %v3316
    %v3318 = vrot.slane %v3317, 4
    %v3319 = vadd.f32 %v3317, %v3318
    %v3320 = vrot.slane %v3319, 2
    %v3321 = vadd.f32 %v3319, %v3320
    %v3322 = vrot.slane %v3321, 1
    %v3323 = vadd.f32 %v3321, %v3322
    %vm3324 = vcmp.eq.s32.totalorder %v618, 7
    %vm3325 = vcmp.eq.s32.totalorder %v619, 7
    %v3326 = vsel %vm3324, 1.0, 0.0
    %v3327 = vsel %vm3325, 1.0, 0.0
    %v3328 = vmul.f32 %v3326, %v3323
    %v3329 = vmul.f32 %v3327, %v3323
    %v3330 = vadd.f32 %v3275, %v3328
    %v3331 = vadd.f32 %v3276, %v3329
    %v3332 = vlaneseq
    %v3333 = vshrl.u32 %v3332, 7
    %v3334 = vsub.s32 0, %v3333
    %v3335 = vrot.slane %v2843, %v3334
    %v3336 = vmul.f32 %v3335, %v2884
    %v3337 = vmul.f32 %v3335, %v2885
    %v3338 = vmul.f32 %v3336, 1.442695
    %v3339 = vpow.pop %v3338
    %v3340 = vmul.f32 %v3337, 1.442695
    %v3341 = vpow.pop %v3340
    %v3342 = vmul.f32 %v3339, 0.0
    %v3343 = vmul.f32 %v3341, 0.0
    %3344 = vset.pattern.permute.xlu0 8
    %3345 = vperm.xlu0 %3344, %v2868
    %v3346 = vpop.permute.xlu0 %3345
    %3348 = vset.pattern.permute.xlu0 8
    %3349 = vperm.xlu0 %3348, %v2869
    %v3350 = vpop.permute.xlu0 %3349
    %v3352 = vlaneseq
    %v3353 = vshrl.u32 %v3352, 7
    %v3354 = vsub.s32 0, %v3353
    %v3355 = vrot.slane %v2887, %v3354
    %v3356 = vmul.f32 %v3346, %v3355
    %v3357 = vmul.f32 %v3350, %v3355
    %v3358 = vadd.f32 %v3342, %v3356
    %v3359 = vadd.f32 %v3343, %v3357
    %3360 = vset.pattern.permute.xlu0 8
    %3361 = vperm.xlu0 %3360, %v2870
    %v3362 = vpop.permute.xlu0 %3361
    %3364 = vset.pattern.permute.xlu0 8
    %3365 = vperm.xlu0 %3364, %v2871
    %v3366 = vpop.permute.xlu0 %3365
    %v3368 = vmul.f32 %v3358, %v3362
    %v3369 = vmul.f32 %v3359, %v3366
    %v3370 = vsel %vm2233, %v3368, 0.0
    %v3371 = vsel %vm2233, %v3369, 0.0
    %v3372 = vadd.f32 %v3370, %v3371
    %v3373 = vrot.slane %v3372, 4
    %v3374 = vadd.f32 %v3372, %v3373
    %v3375 = vrot.slane %v3374, 2
    %v3376 = vadd.f32 %v3374, %v3375
    %v3377 = vrot.slane %v3376, 1
    %v3378 = vadd.f32 %v3376, %v3377
    %vm3379 = vcmp.eq.s32.totalorder %v618, 8
    %vm3380 = vcmp.eq.s32.totalorder %v619, 8
    %v3381 = vsel %vm3379, 1.0, 0.0
    %v3382 = vsel %vm3380, 1.0, 0.0
    %v3383 = vmul.f32 %v3381, %v3378
    %v3384 = vmul.f32 %v3382, %v3378
    %v3385 = vadd.f32 %v3330, %v3383
    %v3386 = vadd.f32 %v3331, %v3384
    %v3387 = vlaneseq
    %v3388 = vshrl.u32 %v3387, 7
    %v3389 = vsub.s32 1, %v3388
    %v3390 = vrot.slane %v2843, %v3389
    %v3391 = vmul.f32 %v3390, %v2884
    %v3392 = vmul.f32 %v3390, %v2885
    %v3393 = vmul.f32 %v3391, 1.442695
    %v3394 = vpow.pop %v3393
    %v3395 = vmul.f32 %v3392, 1.442695
    %v3396 = vpow.pop %v3395
    %v3397 = vmul.f32 %v3394, %v3358
    %v3398 = vmul.f32 %v3396, %v3359
    %3399 = vset.pattern.permute.xlu0 9
    %3400 = vperm.xlu0 %3399, %v2868
    %v3401 = vpop.permute.xlu0 %3400
    %3403 = vset.pattern.permute.xlu0 9
    %3404 = vperm.xlu0 %3403, %v2869
    %v3405 = vpop.permute.xlu0 %3404
    %v3407 = vlaneseq
    %v3408 = vshrl.u32 %v3407, 7
    %v3409 = vsub.s32 1, %v3408
    %v3410 = vrot.slane %v2887, %v3409
    %v3411 = vmul.f32 %v3401, %v3410
    %v3412 = vmul.f32 %v3405, %v3410
    %v3413 = vadd.f32 %v3397, %v3411
    %v3414 = vadd.f32 %v3398, %v3412
    %3415 = vset.pattern.permute.xlu0 9
    %3416 = vperm.xlu0 %3415, %v2870
    %v3417 = vpop.permute.xlu0 %3416
    %3419 = vset.pattern.permute.xlu0 9
    %3420 = vperm.xlu0 %3419, %v2871
    %v3421 = vpop.permute.xlu0 %3420
    %v3423 = vmul.f32 %v3413, %v3417
    %v3424 = vmul.f32 %v3414, %v3421
    %v3425 = vsel %vm2233, %v3423, 0.0
    %v3426 = vsel %vm2233, %v3424, 0.0
    %v3427 = vadd.f32 %v3425, %v3426
    %v3428 = vrot.slane %v3427, 4
    %v3429 = vadd.f32 %v3427, %v3428
    %v3430 = vrot.slane %v3429, 2
    %v3431 = vadd.f32 %v3429, %v3430
    %v3432 = vrot.slane %v3431, 1
    %v3433 = vadd.f32 %v3431, %v3432
    %vm3434 = vcmp.eq.s32.totalorder %v618, 9
    %vm3435 = vcmp.eq.s32.totalorder %v619, 9
    %v3436 = vsel %vm3434, 1.0, 0.0
    %v3437 = vsel %vm3435, 1.0, 0.0
    %v3438 = vmul.f32 %v3436, %v3433
    %v3439 = vmul.f32 %v3437, %v3433
    %v3440 = vadd.f32 %v3385, %v3438
    %v3441 = vadd.f32 %v3386, %v3439
    %v3442 = vlaneseq
    %v3443 = vshrl.u32 %v3442, 7
    %v3444 = vsub.s32 2, %v3443
    %v3445 = vrot.slane %v2843, %v3444
    %v3446 = vmul.f32 %v3445, %v2884
    %v3447 = vmul.f32 %v3445, %v2885
    %v3448 = vmul.f32 %v3446, 1.442695
    %v3449 = vpow.pop %v3448
    %v3450 = vmul.f32 %v3447, 1.442695
    %v3451 = vpow.pop %v3450
    %v3452 = vmul.f32 %v3449, %v3413
    %v3453 = vmul.f32 %v3451, %v3414
    %3454 = vset.pattern.permute.xlu0 10
    %3455 = vperm.xlu0 %3454, %v2868
    %v3456 = vpop.permute.xlu0 %3455
    %3458 = vset.pattern.permute.xlu0 10
    %3459 = vperm.xlu0 %3458, %v2869
    %v3460 = vpop.permute.xlu0 %3459
    %v3462 = vlaneseq
    %v3463 = vshrl.u32 %v3462, 7
    %v3464 = vsub.s32 2, %v3463
    %v3465 = vrot.slane %v2887, %v3464
    %v3466 = vmul.f32 %v3456, %v3465
    %v3467 = vmul.f32 %v3460, %v3465
    %v3468 = vadd.f32 %v3452, %v3466
    %v3469 = vadd.f32 %v3453, %v3467
    %3470 = vset.pattern.permute.xlu0 10
    %3471 = vperm.xlu0 %3470, %v2870
    %v3472 = vpop.permute.xlu0 %3471
    %3474 = vset.pattern.permute.xlu0 10
    %3475 = vperm.xlu0 %3474, %v2871
    %v3476 = vpop.permute.xlu0 %3475
    %v3478 = vmul.f32 %v3468, %v3472
    %v3479 = vmul.f32 %v3469, %v3476
    %v3480 = vsel %vm2233, %v3478, 0.0
    %v3481 = vsel %vm2233, %v3479, 0.0
    %v3482 = vadd.f32 %v3480, %v3481
    %v3483 = vrot.slane %v3482, 4
    %v3484 = vadd.f32 %v3482, %v3483
    %v3485 = vrot.slane %v3484, 2
    %v3486 = vadd.f32 %v3484, %v3485
    %v3487 = vrot.slane %v3486, 1
    %v3488 = vadd.f32 %v3486, %v3487
    %vm3489 = vcmp.eq.s32.totalorder %v618, 10
    %vm3490 = vcmp.eq.s32.totalorder %v619, 10
    %v3491 = vsel %vm3489, 1.0, 0.0
    %v3492 = vsel %vm3490, 1.0, 0.0
    %v3493 = vmul.f32 %v3491, %v3488
    %v3494 = vmul.f32 %v3492, %v3488
    %v3495 = vadd.f32 %v3440, %v3493
    %v3496 = vadd.f32 %v3441, %v3494
    %v3497 = vlaneseq
    %v3498 = vshrl.u32 %v3497, 7
    %v3499 = vsub.s32 3, %v3498
    %v3500 = vrot.slane %v2843, %v3499
    %v3501 = vmul.f32 %v3500, %v2884
    %v3502 = vmul.f32 %v3500, %v2885
    %v3503 = vmul.f32 %v3501, 1.442695
    %v3504 = vpow.pop %v3503
    %v3505 = vmul.f32 %v3502, 1.442695
    %v3506 = vpow.pop %v3505
    %v3507 = vmul.f32 %v3504, %v3468
    %v3508 = vmul.f32 %v3506, %v3469
    %3509 = vset.pattern.permute.xlu0 11
    %3510 = vperm.xlu0 %3509, %v2868
    %v3511 = vpop.permute.xlu0 %3510
    %3513 = vset.pattern.permute.xlu0 11
    %3514 = vperm.xlu0 %3513, %v2869
    %v3515 = vpop.permute.xlu0 %3514
    %v3517 = vlaneseq
    %v3518 = vshrl.u32 %v3517, 7
    %v3519 = vsub.s32 3, %v3518
    %v3520 = vrot.slane %v2887, %v3519
    %v3521 = vmul.f32 %v3511, %v3520
    %v3522 = vmul.f32 %v3515, %v3520
    %v3523 = vadd.f32 %v3507, %v3521
    %v3524 = vadd.f32 %v3508, %v3522
    %3525 = vset.pattern.permute.xlu0 11
    %3526 = vperm.xlu0 %3525, %v2870
    %v3527 = vpop.permute.xlu0 %3526
    %3529 = vset.pattern.permute.xlu0 11
    %3530 = vperm.xlu0 %3529, %v2871
    %v3531 = vpop.permute.xlu0 %3530
    %v3533 = vmul.f32 %v3523, %v3527
    %v3534 = vmul.f32 %v3524, %v3531
    %v3535 = vsel %vm2233, %v3533, 0.0
    %v3536 = vsel %vm2233, %v3534, 0.0
    %v3537 = vadd.f32 %v3535, %v3536
    %v3538 = vrot.slane %v3537, 4
    %v3539 = vadd.f32 %v3537, %v3538
    %v3540 = vrot.slane %v3539, 2
    %v3541 = vadd.f32 %v3539, %v3540
    %v3542 = vrot.slane %v3541, 1
    %v3543 = vadd.f32 %v3541, %v3542
    %vm3544 = vcmp.eq.s32.totalorder %v618, 11
    %vm3545 = vcmp.eq.s32.totalorder %v619, 11
    %v3546 = vsel %vm3544, 1.0, 0.0
    %v3547 = vsel %vm3545, 1.0, 0.0
    %v3548 = vmul.f32 %v3546, %v3543
    %v3549 = vmul.f32 %v3547, %v3543
    %v3550 = vadd.f32 %v3495, %v3548
    %v3551 = vadd.f32 %v3496, %v3549
    %v3552 = vlaneseq
    %v3553 = vshrl.u32 %v3552, 7
    %v3554 = vsub.s32 4, %v3553
    %v3555 = vrot.slane %v2843, %v3554
    %v3556 = vmul.f32 %v3555, %v2884
    %v3557 = vmul.f32 %v3555, %v2885
    %v3558 = vmul.f32 %v3556, 1.442695
    %v3559 = vpow.pop %v3558
    %v3560 = vmul.f32 %v3557, 1.442695
    %v3561 = vpow.pop %v3560
    %v3562 = vmul.f32 %v3559, %v3523
    %v3563 = vmul.f32 %v3561, %v3524
    %3564 = vset.pattern.permute.xlu0 12
    %3565 = vperm.xlu0 %3564, %v2868
    %v3566 = vpop.permute.xlu0 %3565
    %3568 = vset.pattern.permute.xlu0 12
    %3569 = vperm.xlu0 %3568, %v2869
    %v3570 = vpop.permute.xlu0 %3569
    %v3572 = vlaneseq
    %v3573 = vshrl.u32 %v3572, 7
    %v3574 = vsub.s32 4, %v3573
    %v3575 = vrot.slane %v2887, %v3574
    %v3576 = vmul.f32 %v3566, %v3575
    %v3577 = vmul.f32 %v3570, %v3575
    %v3578 = vadd.f32 %v3562, %v3576
    %v3579 = vadd.f32 %v3563, %v3577
    %3580 = vset.pattern.permute.xlu0 12
    %3581 = vperm.xlu0 %3580, %v2870
    %v3582 = vpop.permute.xlu0 %3581
    %3584 = vset.pattern.permute.xlu0 12
    %3585 = vperm.xlu0 %3584, %v2871
    %v3586 = vpop.permute.xlu0 %3585
    %v3588 = vmul.f32 %v3578, %v3582
    %v3589 = vmul.f32 %v3579, %v3586
    %v3590 = vsel %vm2233, %v3588, 0.0
    %v3591 = vsel %vm2233, %v3589, 0.0
    %v3592 = vadd.f32 %v3590, %v3591
    %v3593 = vrot.slane %v3592, 4
    %v3594 = vadd.f32 %v3592, %v3593
    %v3595 = vrot.slane %v3594, 2
    %v3596 = vadd.f32 %v3594, %v3595
    %v3597 = vrot.slane %v3596, 1
    %v3598 = vadd.f32 %v3596, %v3597
    %vm3599 = vcmp.eq.s32.totalorder %v618, 12
    %vm3600 = vcmp.eq.s32.totalorder %v619, 12
    %v3601 = vsel %vm3599, 1.0, 0.0
    %v3602 = vsel %vm3600, 1.0, 0.0
    %v3603 = vmul.f32 %v3601, %v3598
    %v3604 = vmul.f32 %v3602, %v3598
    %v3605 = vadd.f32 %v3550, %v3603
    %v3606 = vadd.f32 %v3551, %v3604
    %v3607 = vlaneseq
    %v3608 = vshrl.u32 %v3607, 7
    %v3609 = vsub.s32 5, %v3608
    %v3610 = vrot.slane %v2843, %v3609
    %v3611 = vmul.f32 %v3610, %v2884
    %v3612 = vmul.f32 %v3610, %v2885
    %v3613 = vmul.f32 %v3611, 1.442695
    %v3614 = vpow.pop %v3613
    %v3615 = vmul.f32 %v3612, 1.442695
    %v3616 = vpow.pop %v3615
    %v3617 = vmul.f32 %v3614, %v3578
    %v3618 = vmul.f32 %v3616, %v3579
    %3619 = vset.pattern.permute.xlu0 13
    %3620 = vperm.xlu0 %3619, %v2868
    %v3621 = vpop.permute.xlu0 %3620
    %3623 = vset.pattern.permute.xlu0 13
    %3624 = vperm.xlu0 %3623, %v2869
    %v3625 = vpop.permute.xlu0 %3624
    %v3627 = vlaneseq
    %v3628 = vshrl.u32 %v3627, 7
    %v3629 = vsub.s32 5, %v3628
    %v3630 = vrot.slane %v2887, %v3629
    %v3631 = vmul.f32 %v3621, %v3630
    %v3632 = vmul.f32 %v3625, %v3630
    %v3633 = vadd.f32 %v3617, %v3631
    %v3634 = vadd.f32 %v3618, %v3632
    %3635 = vset.pattern.permute.xlu0 13
    %3636 = vperm.xlu0 %3635, %v2870
    %v3637 = vpop.permute.xlu0 %3636
    %3639 = vset.pattern.permute.xlu0 13
    %3640 = vperm.xlu0 %3639, %v2871
    %v3641 = vpop.permute.xlu0 %3640
    %v3643 = vmul.f32 %v3633, %v3637
    %v3644 = vmul.f32 %v3634, %v3641
    %v3645 = vsel %vm2233, %v3643, 0.0
    %v3646 = vsel %vm2233, %v3644, 0.0
    %v3647 = vadd.f32 %v3645, %v3646
    %v3648 = vrot.slane %v3647, 4
    %v3649 = vadd.f32 %v3647, %v3648
    %v3650 = vrot.slane %v3649, 2
    %v3651 = vadd.f32 %v3649, %v3650
    %v3652 = vrot.slane %v3651, 1
    %v3653 = vadd.f32 %v3651, %v3652
    %vm3654 = vcmp.eq.s32.totalorder %v618, 13
    %vm3655 = vcmp.eq.s32.totalorder %v619, 13
    %v3656 = vsel %vm3654, 1.0, 0.0
    %v3657 = vsel %vm3655, 1.0, 0.0
    %v3658 = vmul.f32 %v3656, %v3653
    %v3659 = vmul.f32 %v3657, %v3653
    %v3660 = vadd.f32 %v3605, %v3658
    %v3661 = vadd.f32 %v3606, %v3659
    %v3662 = vlaneseq
    %v3663 = vshrl.u32 %v3662, 7
    %v3664 = vsub.s32 6, %v3663
    %v3665 = vrot.slane %v2843, %v3664
    %v3666 = vmul.f32 %v3665, %v2884
    %v3667 = vmul.f32 %v3665, %v2885
    %v3668 = vmul.f32 %v3666, 1.442695
    %v3669 = vpow.pop %v3668
    %v3670 = vmul.f32 %v3667, 1.442695
    %v3671 = vpow.pop %v3670
    %v3672 = vmul.f32 %v3669, %v3633
    %v3673 = vmul.f32 %v3671, %v3634
    %3674 = vset.pattern.permute.xlu0 14
    %3675 = vperm.xlu0 %3674, %v2868
    %v3676 = vpop.permute.xlu0 %3675
    %3678 = vset.pattern.permute.xlu0 14
    %3679 = vperm.xlu0 %3678, %v2869
    %v3680 = vpop.permute.xlu0 %3679
    %v3682 = vlaneseq
    %v3683 = vshrl.u32 %v3682, 7
    %v3684 = vsub.s32 6, %v3683
    %v3685 = vrot.slane %v2887, %v3684
    %v3686 = vmul.f32 %v3676, %v3685
    %v3687 = vmul.f32 %v3680, %v3685
    %v3688 = vadd.f32 %v3672, %v3686
    %v3689 = vadd.f32 %v3673, %v3687
    %3690 = vset.pattern.permute.xlu0 14
    %3691 = vperm.xlu0 %3690, %v2870
    %v3692 = vpop.permute.xlu0 %3691
    %3694 = vset.pattern.permute.xlu0 14
    %3695 = vperm.xlu0 %3694, %v2871
    %v3696 = vpop.permute.xlu0 %3695
    %v3698 = vmul.f32 %v3688, %v3692
    %v3699 = vmul.f32 %v3689, %v3696
    %v3700 = vsel %vm2233, %v3698, 0.0
    %v3701 = vsel %vm2233, %v3699, 0.0
    %v3702 = vadd.f32 %v3700, %v3701
    %v3703 = vrot.slane %v3702, 4
    %v3704 = vadd.f32 %v3702, %v3703
    %v3705 = vrot.slane %v3704, 2
    %v3706 = vadd.f32 %v3704, %v3705
    %v3707 = vrot.slane %v3706, 1
    %v3708 = vadd.f32 %v3706, %v3707
    %vm3709 = vcmp.eq.s32.totalorder %v618, 14
    %vm3710 = vcmp.eq.s32.totalorder %v619, 14
    %v3711 = vsel %vm3709, 1.0, 0.0
    %v3712 = vsel %vm3710, 1.0, 0.0
    %v3713 = vmul.f32 %v3711, %v3708
    %v3714 = vmul.f32 %v3712, %v3708
    %v3715 = vadd.f32 %v3660, %v3713
    %v3716 = vadd.f32 %v3661, %v3714
    %v3717 = vlaneseq
    %v3718 = vshrl.u32 %v3717, 7
    %v3719 = vsub.s32 7, %v3718
    %v3720 = vrot.slane %v2843, %v3719
    %v3721 = vmul.f32 %v3720, %v2884
    %v3722 = vmul.f32 %v3720, %v2885
    %v3723 = vmul.f32 %v3721, 1.442695
    %v3724 = vpow.pop %v3723
    %v3725 = vmul.f32 %v3722, 1.442695
    %v3726 = vpow.pop %v3725
    %v3727 = vmul.f32 %v3724, %v3688
    %v3728 = vmul.f32 %v3726, %v3689
    %3729 = vset.pattern.permute.xlu0 15
    %3730 = vperm.xlu0 %3729, %v2868
    %v3731 = vpop.permute.xlu0 %3730
    %3733 = vset.pattern.permute.xlu0 15
    %3734 = vperm.xlu0 %3733, %v2869
    %v3735 = vpop.permute.xlu0 %3734
    %v3737 = vlaneseq
    %v3738 = vshrl.u32 %v3737, 7
    %v3739 = vsub.s32 7, %v3738
    %v3740 = vrot.slane %v2887, %v3739
    %v3741 = vmul.f32 %v3731, %v3740
    %v3742 = vmul.f32 %v3735, %v3740
    %v3743 = vadd.f32 %v3727, %v3741
    %v3744 = vadd.f32 %v3728, %v3742
    %3745 = vset.pattern.permute.xlu0 15
    %3746 = vperm.xlu0 %3745, %v2870
    %v3747 = vpop.permute.xlu0 %3746
    %3749 = vset.pattern.permute.xlu0 15
    %3750 = vperm.xlu0 %3749, %v2871
    %v3751 = vpop.permute.xlu0 %3750
    %v3753 = vmul.f32 %v3743, %v3747
    %v3754 = vmul.f32 %v3744, %v3751
    %v3755 = vsel %vm2233, %v3753, 0.0
    %v3756 = vsel %vm2233, %v3754, 0.0
    %v3757 = vadd.f32 %v3755, %v3756
    %v3758 = vrot.slane %v3757, 4
    %v3759 = vadd.f32 %v3757, %v3758
    %v3760 = vrot.slane %v3759, 2
    %v3761 = vadd.f32 %v3759, %v3760
    %v3762 = vrot.slane %v3761, 1
    %v3763 = vadd.f32 %v3761, %v3762
    %vm3764 = vcmp.eq.s32.totalorder %v618, 15
    %vm3765 = vcmp.eq.s32.totalorder %v619, 15
    %v3766 = vsel %vm3764, 1.0, 0.0
    %v3767 = vsel %vm3765, 1.0, 0.0
    %v3768 = vmul.f32 %v3766, %v3763
    %v3769 = vmul.f32 %v3767, %v3763
    %v3770 = vadd.f32 %v3715, %v3768
    %v3771 = vadd.f32 %v3716, %v3769
    %v3772 = vlaneseq
    %v3773 = vshrl.u32 %v3772, 7
    %v3774 = vsub.s32 0, %v3773
    %v3775 = vrot.slane %v37, %v3774
    %v3776 = vmul.f32 %v2223, %v3775
    %v3777 = vmul.f32 %v2224, %v3775
    %v3778 = vadd.f32 %v3770, %v3776
    %v3779 = vadd.f32 %v3771, %v3777
    %v3780 = vxor.u32 %v607, 2147483648
    %v3781 = vxor.u32 %v613, 2147483648
    %v3782 = vmul.f32 %v3780, 1.442695
    %v3783 = vpow.pop %v3782
    %v3784 = vmul.f32 %v3781, 1.442695
    %v3785 = vpow.pop %v3784
    %v3786 = vadd.f32 %v3783, 1.0
    %v3787 = vadd.f32 %v3785, 1.0
    %v3788 = vrcp.pop %v3786
    %v3789 = vmul.f32 1.0, %v3788
    %v3790 = vrcp.pop %v3787
    %v3791 = vmul.f32 1.0, %v3790
    %v3792 = vmul.f32 %v607, %v3789
    %v3793 = vmul.f32 %v613, %v3791
    %3796 = vrot.lane.b32.xlu0 %v3792, 64
    %v3797 = vpop.permute.xlu0 %3796
    %3798 = vrot.lane.b32.xlu0 %v3793, 64
    %v3799 = vpop.permute.xlu0 %3798
    %v3802 = vmul.f32 %v3778, %v3797
    %v3803 = vmul.f32 %v3779, %v3799
    %v3804 = vld [vmem:[%s5] sm:$0xff]
    %v3805 = vld [vmem:[%s5 + $0x8] sm:$0xff]
    %v3806 = vld [vmem:[%s5 + $0x10] sm:$0xff]
    %v3807 = vld [vmem:[%s5 + $0x18] sm:$0xff]
    %v3808 = vld [vmem:[%s5 + $0x20] sm:$0xff]
    %v3809 = vld [vmem:[%s5 + $0x28] sm:$0xff]
    %v3810 = vld [vmem:[%s5 + $0x30] sm:$0xff]
    %v3811 = vld [vmem:[%s5 + $0x38] sm:$0xff]
    %v3812 = vlaneseq
    %v3813 = vshrl.u32 %v3812, 7
    %v3814 = vsub.s32 0, %v3813
    %v3815 = vrot.slane %v34, %v3814
    %v3817 = vsel %vm2233, %v3802, 0
    %v3820 = vsel %vm2233, %v3803, 0
    %3822 = vmatprep.subr.mxu0 0.0
    %3823 = vmatpush1.msra.mxu0 0.0
    %3824 = vmatprep.subr.mxu0 0.0
    %3825 = vmatpush1.msra.mxu0 0.0
    %3826 = vmatprep.subr.mxu0 0.0
    %3827 = vmatpush1.msra.mxu0 0.0
    %3828 = vmatprep.subr.mxu0 0.0
    %3829 = vmatpush1.msra.mxu0 0.0
    %3830 = vmatprep.subr.mxu0 0.0
    %3831 = vmatpush1.msra.mxu0 0.0
    %3832 = vmatprep.subr.mxu0 0.0
    %3833 = vmatpush1.msra.mxu0 0.0
    %3834 = vmatprep.subr.mxu0 0.0
    %3835 = vmatpush1.msra.mxu0 0.0
    %3836 = vmatprep.subr.mxu0 0.0
    %3837 = vmatpush1.msra.mxu0 0.0
    %3838 = vmatprep.subr.mxu0 0.0
    %v3839 = vand.u32 %v3811, 4294901760
    %3840 = vmatpush1.msra.mxu0 %v3839
    %3841 = vmatprep.subr.mxu0 0.0
    %v3842 = vand.u32 %v3810, 4294901760
    %3843 = vmatpush1.msra.mxu0 %v3842
    %3844 = vmatprep.subr.mxu0 0.0
    %v3845 = vand.u32 %v3809, 4294901760
    %3846 = vmatpush1.msra.mxu0 %v3845
    %3847 = vmatprep.subr.mxu0 0.0
    %v3848 = vand.u32 %v3808, 4294901760
    %3849 = vmatpush1.msra.mxu0 %v3848
    %3850 = vmatprep.subr.mxu0 0.0
    %v3851 = vand.u32 %v3807, 4294901760
    %3852 = vmatpush1.msra.mxu0 %v3851
    %3853 = vmatprep.subr.mxu0 0.0
    %v3854 = vand.u32 %v3806, 4294901760
    %3855 = vmatpush1.msra.mxu0 %v3854
    %3856 = vmatprep.subr.mxu0 0.0
    %v3857 = vand.u32 %v3805, 4294901760
    %3858 = vmatpush1.msra.mxu0 %v3857
    %3859 = vmatprep.subr.mxu0 0.0
    %v3860 = vand.u32 %v3804, 4294901760
    %3861 = vmatpush1.msra.mxu0 %v3860
    %3862 = vmatprep.subr.mxu0 0.0
    %3863 = vmatpush2.msra.mxu0 0.0
    %3864 = vmatprep.subr.mxu0 0.0
    %3865 = vmatpush2.msra.mxu0 0.0
    %3866 = vmatprep.subr.mxu0 0.0
    %3867 = vmatpush2.msra.mxu0 0.0
    %3868 = vmatprep.subr.mxu0 0.0
    %3869 = vmatpush2.msra.mxu0 0.0
    %3870 = vmatprep.subr.mxu0 0.0
    %3871 = vmatpush2.msra.mxu0 0.0
    %3872 = vmatprep.subr.mxu0 0.0
    %3873 = vmatpush2.msra.mxu0 0.0
    %3874 = vmatprep.subr.mxu0 0.0
    %3875 = vmatpush2.msra.mxu0 0.0
    %3876 = vmatprep.subr.mxu0 0.0
    %3877 = vmatpush2.msra.mxu0 0.0
    %3878 = vmatprep.subr.mxu0 0.0
    %3879 = vmatpush2.msra.mxu0 0.0
    %3880 = vmatprep.subr.mxu0 0.0
    %3881 = vmatpush2.msra.mxu0 0.0
    %3882 = vmatprep.subr.mxu0 0.0
    %3883 = vmatpush2.msra.mxu0 0.0
    %3884 = vmatprep.subr.mxu0 0.0
    %3885 = vmatpush2.msra.mxu0 0.0
    %3886 = vmatprep.subr.mxu0 0.0
    %3887 = vmatpush2.msra.mxu0 0.0
    %3888 = vmatprep.subr.mxu0 0.0
    %3889 = vmatpush2.msra.mxu0 0.0
    %3890 = vmatprep.subr.mxu0 0.0
    %3891 = vmatpush2.msra.mxu0 0.0
    %3892 = vmatprep.subr.mxu0 0.0
    %3893 = vmatpush2.msra.mxu0 0.0
    %3894 = vmatprep.mubr.f32.mxu0 0.0
    %v3895 = vand.u32 %v3817, 4294901760
    %v3896 = vsub.f32 %v3817, %v3895
    %v3897 = vand.u32 %v3896, 4294901760
    %v3898 = vsub.f32 %v3896, %v3897
    %v3899 = vand.u32 %v3898, 4294901760
    %3900 = vmatmul.mubr.f32.gmra.mxu0 %v3899
    %v3901 = vpop.f32.mrf.mxu0
    %v3902 = vadd.f32 %v3815, %v3901
    %v3903 = vpop.f32.mrf.mxu0
    %3904 = vmatprep.mubr.f32.mxu0 0.0
    %v3905 = vand.u32 %v3820, 4294901760
    %v3906 = vsub.f32 %v3820, %v3905
    %v3907 = vand.u32 %v3906, 4294901760
    %v3908 = vsub.f32 %v3906, %v3907
    %v3909 = vand.u32 %v3908, 4294901760
    %3910 = vmatmul.mubr.f32.gmra.mxu0 %v3909
    %v3911 = vpop.f32.mrf.mxu0
    %v3912 = vadd.f32 %v3815, %v3911
    %v3913 = vpop.f32.mrf.mxu0
    %3914 = vdwg.mxu0
    %3915 = vmatprep.subr.mxu0 0.0
    %3916 = vmatpush1.msra.mxu0 0.0
    %3917 = vmatprep.subr.mxu0 0.0
    %3918 = vmatpush1.msra.mxu0 0.0
    %3919 = vmatprep.subr.mxu0 0.0
    %3920 = vmatpush1.msra.mxu0 0.0
    %3921 = vmatprep.subr.mxu0 0.0
    %3922 = vmatpush1.msra.mxu0 0.0
    %3923 = vmatprep.subr.mxu0 0.0
    %3924 = vmatpush1.msra.mxu0 0.0
    %3925 = vmatprep.subr.mxu0 0.0
    %3926 = vmatpush1.msra.mxu0 0.0
    %3927 = vmatprep.subr.mxu0 0.0
    %3928 = vmatpush1.msra.mxu0 0.0
    %3929 = vmatprep.subr.mxu0 0.0
    %3930 = vmatpush1.msra.mxu0 0.0
    %3931 = vmatprep.subr.mxu0 0.0
    %v3932 = vand.u32 %v3811, 4294901760
    %v3933 = vsub.f32 %v3811, %v3932
    %v3934 = vand.u32 %v3933, 4294901760
    %v3935 = vsub.f32 %v3933, %v3934
    %v3936 = vand.u32 %v3935, 4294901760
    %3937 = vmatpush1.msra.mxu0 %v3936
    %3938 = vmatprep.subr.mxu0 0.0
    %v3939 = vand.u32 %v3810, 4294901760
    %v3940 = vsub.f32 %v3810, %v3939
    %v3941 = vand.u32 %v3940, 4294901760
    %v3942 = vsub.f32 %v3940, %v3941
    %v3943 = vand.u32 %v3942, 4294901760
    %3944 = vmatpush1.msra.mxu0 %v3943
    %3945 = vmatprep.subr.mxu0 0.0
    %v3946 = vand.u32 %v3809, 4294901760
    %v3947 = vsub.f32 %v3809, %v3946
    %v3948 = vand.u32 %v3947, 4294901760
    %v3949 = vsub.f32 %v3947, %v3948
    %v3950 = vand.u32 %v3949, 4294901760
    %3951 = vmatpush1.msra.mxu0 %v3950
    %3952 = vmatprep.subr.mxu0 0.0
    %v3953 = vand.u32 %v3808, 4294901760
    %v3954 = vsub.f32 %v3808, %v3953
    %v3955 = vand.u32 %v3954, 4294901760
    %v3956 = vsub.f32 %v3954, %v3955
    %v3957 = vand.u32 %v3956, 4294901760
    %3958 = vmatpush1.msra.mxu0 %v3957
    %3959 = vmatprep.subr.mxu0 0.0
    %v3960 = vand.u32 %v3807, 4294901760
    %v3961 = vsub.f32 %v3807, %v3960
    %v3962 = vand.u32 %v3961, 4294901760
    %v3963 = vsub.f32 %v3961, %v3962
    %v3964 = vand.u32 %v3963, 4294901760
    %3965 = vmatpush1.msra.mxu0 %v3964
    %3966 = vmatprep.subr.mxu0 0.0
    %v3967 = vand.u32 %v3806, 4294901760
    %v3968 = vsub.f32 %v3806, %v3967
    %v3969 = vand.u32 %v3968, 4294901760
    %v3970 = vsub.f32 %v3968, %v3969
    %v3971 = vand.u32 %v3970, 4294901760
    %3972 = vmatpush1.msra.mxu0 %v3971
    %3973 = vmatprep.subr.mxu0 0.0
    %v3974 = vand.u32 %v3805, 4294901760
    %v3975 = vsub.f32 %v3805, %v3974
    %v3976 = vand.u32 %v3975, 4294901760
    %v3977 = vsub.f32 %v3975, %v3976
    %v3978 = vand.u32 %v3977, 4294901760
    %3979 = vmatpush1.msra.mxu0 %v3978
    %3980 = vmatprep.subr.mxu0 0.0
    %v3981 = vand.u32 %v3804, 4294901760
    %v3982 = vsub.f32 %v3804, %v3981
    %v3983 = vand.u32 %v3982, 4294901760
    %v3984 = vsub.f32 %v3982, %v3983
    %v3985 = vand.u32 %v3984, 4294901760
    %3986 = vmatpush1.msra.mxu0 %v3985
    %3987 = vmatprep.subr.mxu0 0.0
    %3988 = vmatpush2.msra.mxu0 0.0
    %3989 = vmatprep.subr.mxu0 0.0
    %3990 = vmatpush2.msra.mxu0 0.0
    %3991 = vmatprep.subr.mxu0 0.0
    %3992 = vmatpush2.msra.mxu0 0.0
    %3993 = vmatprep.subr.mxu0 0.0
    %3994 = vmatpush2.msra.mxu0 0.0
    %3995 = vmatprep.subr.mxu0 0.0
    %3996 = vmatpush2.msra.mxu0 0.0
    %3997 = vmatprep.subr.mxu0 0.0
    %3998 = vmatpush2.msra.mxu0 0.0
    %3999 = vmatprep.subr.mxu0 0.0
    %4000 = vmatpush2.msra.mxu0 0.0
    %4001 = vmatprep.subr.mxu0 0.0
    %4002 = vmatpush2.msra.mxu0 0.0
    %4003 = vmatprep.subr.mxu0 0.0
    %4004 = vmatpush2.msra.mxu0 0.0
    %4005 = vmatprep.subr.mxu0 0.0
    %4006 = vmatpush2.msra.mxu0 0.0
    %4007 = vmatprep.subr.mxu0 0.0
    %4008 = vmatpush2.msra.mxu0 0.0
    %4009 = vmatprep.subr.mxu0 0.0
    %4010 = vmatpush2.msra.mxu0 0.0
    %4011 = vmatprep.subr.mxu0 0.0
    %4012 = vmatpush2.msra.mxu0 0.0
    %4013 = vmatprep.subr.mxu0 0.0
    %4014 = vmatpush2.msra.mxu0 0.0
    %4015 = vmatprep.subr.mxu0 0.0
    %4016 = vmatpush2.msra.mxu0 0.0
    %4017 = vmatprep.subr.mxu0 0.0
    %4018 = vmatpush2.msra.mxu0 0.0
    %4019 = vmatprep.mubr.f32.mxu0 0.0
    %v4020 = vand.u32 %v3817, 4294901760
    %4021 = vmatmul.mubr.f32.gmra.mxu0 %v4020
    %v4022 = vpop.f32.mrf.mxu0
    %v4023 = vadd.f32 %v3902, %v4022
    %v4024 = vpop.f32.mrf.mxu0
    %4025 = vmatprep.mubr.f32.mxu0 0.0
    %v4026 = vand.u32 %v3820, 4294901760
    %4027 = vmatmul.mubr.f32.gmra.mxu0 %v4026
    %v4028 = vpop.f32.mrf.mxu0
    %v4029 = vadd.f32 %v3912, %v4028
    %v4030 = vpop.f32.mrf.mxu0
    %4031 = vdwg.mxu0
    %4032 = vmatprep.subr.mxu0 0.0
    %4033 = vmatpush1.msra.mxu0 0.0
    %4034 = vmatprep.subr.mxu0 0.0
    %4035 = vmatpush1.msra.mxu0 0.0
    %4036 = vmatprep.subr.mxu0 0.0
    %4037 = vmatpush1.msra.mxu0 0.0
    %4038 = vmatprep.subr.mxu0 0.0
    %4039 = vmatpush1.msra.mxu0 0.0
    %4040 = vmatprep.subr.mxu0 0.0
    %4041 = vmatpush1.msra.mxu0 0.0
    %4042 = vmatprep.subr.mxu0 0.0
    %4043 = vmatpush1.msra.mxu0 0.0
    %4044 = vmatprep.subr.mxu0 0.0
    %4045 = vmatpush1.msra.mxu0 0.0
    %4046 = vmatprep.subr.mxu0 0.0
    %4047 = vmatpush1.msra.mxu0 0.0
    %4048 = vmatprep.subr.mxu0 0.0
    %v4049 = vand.u32 %v3811, 4294901760
    %v4050 = vsub.f32 %v3811, %v4049
    %4051 = vmatpush1.msra.mxu0 %v4050
    %4052 = vmatprep.subr.mxu0 0.0
    %v4053 = vand.u32 %v3810, 4294901760
    %v4054 = vsub.f32 %v3810, %v4053
    %4055 = vmatpush1.msra.mxu0 %v4054
    %4056 = vmatprep.subr.mxu0 0.0
    %v4057 = vand.u32 %v3809, 4294901760
    %v4058 = vsub.f32 %v3809, %v4057
    %4059 = vmatpush1.msra.mxu0 %v4058
    %4060 = vmatprep.subr.mxu0 0.0
    %v4061 = vand.u32 %v3808, 4294901760
    %v4062 = vsub.f32 %v3808, %v4061
    %4063 = vmatpush1.msra.mxu0 %v4062
    %4064 = vmatprep.subr.mxu0 0.0
    %v4065 = vand.u32 %v3807, 4294901760
    %v4066 = vsub.f32 %v3807, %v4065
    %4067 = vmatpush1.msra.mxu0 %v4066
    %4068 = vmatprep.subr.mxu0 0.0
    %v4069 = vand.u32 %v3806, 4294901760
    %v4070 = vsub.f32 %v3806, %v4069
    %4071 = vmatpush1.msra.mxu0 %v4070
    %4072 = vmatprep.subr.mxu0 0.0
    %v4073 = vand.u32 %v3805, 4294901760
    %v4074 = vsub.f32 %v3805, %v4073
    %4075 = vmatpush1.msra.mxu0 %v4074
    %4076 = vmatprep.subr.mxu0 0.0
    %v4077 = vand.u32 %v3804, 4294901760
    %v4078 = vsub.f32 %v3804, %v4077
    %4079 = vmatpush1.msra.mxu0 %v4078
    %4080 = vmatprep.subr.mxu0 0.0
    %4081 = vmatpush2.msra.mxu0 0.0
    %4082 = vmatprep.subr.mxu0 0.0
    %4083 = vmatpush2.msra.mxu0 0.0
    %4084 = vmatprep.subr.mxu0 0.0
    %4085 = vmatpush2.msra.mxu0 0.0
    %4086 = vmatprep.subr.mxu0 0.0
    %4087 = vmatpush2.msra.mxu0 0.0
    %4088 = vmatprep.subr.mxu0 0.0
    %4089 = vmatpush2.msra.mxu0 0.0
    %4090 = vmatprep.subr.mxu0 0.0
    %4091 = vmatpush2.msra.mxu0 0.0
    %4092 = vmatprep.subr.mxu0 0.0
    %4093 = vmatpush2.msra.mxu0 0.0
    %4094 = vmatprep.subr.mxu0 0.0
    %4095 = vmatpush2.msra.mxu0 0.0
    %4096 = vmatprep.subr.mxu0 0.0
    %4097 = vmatpush2.msra.mxu0 0.0
    %4098 = vmatprep.subr.mxu0 0.0
    %4099 = vmatpush2.msra.mxu0 0.0
    %4100 = vmatprep.subr.mxu0 0.0
    %4101 = vmatpush2.msra.mxu0 0.0
    %4102 = vmatprep.subr.mxu0 0.0
    %4103 = vmatpush2.msra.mxu0 0.0
    %4104 = vmatprep.subr.mxu0 0.0
    %4105 = vmatpush2.msra.mxu0 0.0
    %4106 = vmatprep.subr.mxu0 0.0
    %4107 = vmatpush2.msra.mxu0 0.0
    %4108 = vmatprep.subr.mxu0 0.0
    %4109 = vmatpush2.msra.mxu0 0.0
    %4110 = vmatprep.subr.mxu0 0.0
    %4111 = vmatpush2.msra.mxu0 0.0
    %4112 = vmatprep.mubr.f32.mxu0 0.0
    %v4113 = vand.u32 %v3817, 4294901760
    %v4114 = vsub.f32 %v3817, %v4113
    %4115 = vmatmul.mubr.f32.gmra.mxu0 %v4114
    %v4116 = vpop.f32.mrf.mxu0
    %v4117 = vadd.f32 %v4023, %v4116
    %v4118 = vpop.f32.mrf.mxu0
    %4119 = vmatprep.mubr.f32.mxu0 0.0
    %v4120 = vand.u32 %v3820, 4294901760
    %v4121 = vsub.f32 %v3820, %v4120
    %4122 = vmatmul.mubr.f32.gmra.mxu0 %v4121
    %v4123 = vpop.f32.mrf.mxu0
    %v4124 = vadd.f32 %v4029, %v4123
    %v4125 = vpop.f32.mrf.mxu0
    %4126 = vdwg.mxu0
    %4127 = vmatprep.subr.mxu0 0.0
    %4128 = vmatpush1.msra.mxu0 0.0
    %4129 = vmatprep.subr.mxu0 0.0
    %4130 = vmatpush1.msra.mxu0 0.0
    %4131 = vmatprep.subr.mxu0 0.0
    %4132 = vmatpush1.msra.mxu0 0.0
    %4133 = vmatprep.subr.mxu0 0.0
    %4134 = vmatpush1.msra.mxu0 0.0
    %4135 = vmatprep.subr.mxu0 0.0
    %4136 = vmatpush1.msra.mxu0 0.0
    %4137 = vmatprep.subr.mxu0 0.0
    %4138 = vmatpush1.msra.mxu0 0.0
    %4139 = vmatprep.subr.mxu0 0.0
    %4140 = vmatpush1.msra.mxu0 0.0
    %4141 = vmatprep.subr.mxu0 0.0
    %4142 = vmatpush1.msra.mxu0 0.0
    %4143 = vmatprep.subr.mxu0 0.0
    %v4144 = vand.u32 %v3811, 4294901760
    %4145 = vmatpush1.msra.mxu0 %v4144
    %4146 = vmatprep.subr.mxu0 0.0
    %v4147 = vand.u32 %v3810, 4294901760
    %4148 = vmatpush1.msra.mxu0 %v4147
    %4149 = vmatprep.subr.mxu0 0.0
    %v4150 = vand.u32 %v3809, 4294901760
    %4151 = vmatpush1.msra.mxu0 %v4150
    %4152 = vmatprep.subr.mxu0 0.0
    %v4153 = vand.u32 %v3808, 4294901760
    %4154 = vmatpush1.msra.mxu0 %v4153
    %4155 = vmatprep.subr.mxu0 0.0
    %v4156 = vand.u32 %v3807, 4294901760
    %4157 = vmatpush1.msra.mxu0 %v4156
    %4158 = vmatprep.subr.mxu0 0.0
    %v4159 = vand.u32 %v3806, 4294901760
    %4160 = vmatpush1.msra.mxu0 %v4159
    %4161 = vmatprep.subr.mxu0 0.0
    %v4162 = vand.u32 %v3805, 4294901760
    %4163 = vmatpush1.msra.mxu0 %v4162
    %4164 = vmatprep.subr.mxu0 0.0
    %v4165 = vand.u32 %v3804, 4294901760
    %4166 = vmatpush1.msra.mxu0 %v4165
    %4167 = vmatprep.subr.mxu0 0.0
    %4168 = vmatpush2.msra.mxu0 0.0
    %4169 = vmatprep.subr.mxu0 0.0
    %4170 = vmatpush2.msra.mxu0 0.0
    %4171 = vmatprep.subr.mxu0 0.0
    %4172 = vmatpush2.msra.mxu0 0.0
    %4173 = vmatprep.subr.mxu0 0.0
    %4174 = vmatpush2.msra.mxu0 0.0
    %4175 = vmatprep.subr.mxu0 0.0
    %4176 = vmatpush2.msra.mxu0 0.0
    %4177 = vmatprep.subr.mxu0 0.0
    %4178 = vmatpush2.msra.mxu0 0.0
    %4179 = vmatprep.subr.mxu0 0.0
    %4180 = vmatpush2.msra.mxu0 0.0
    %4181 = vmatprep.subr.mxu0 0.0
    %4182 = vmatpush2.msra.mxu0 0.0
    %4183 = vmatprep.subr.mxu0 0.0
    %4184 = vmatpush2.msra.mxu0 0.0
    %4185 = vmatprep.subr.mxu0 0.0
    %4186 = vmatpush2.msra.mxu0 0.0
    %4187 = vmatprep.subr.mxu0 0.0
    %4188 = vmatpush2.msra.mxu0 0.0
    %4189 = vmatprep.subr.mxu0 0.0
    %4190 = vmatpush2.msra.mxu0 0.0
    %4191 = vmatprep.subr.mxu0 0.0
    %4192 = vmatpush2.msra.mxu0 0.0
    %4193 = vmatprep.subr.mxu0 0.0
    %4194 = vmatpush2.msra.mxu0 0.0
    %4195 = vmatprep.subr.mxu0 0.0
    %4196 = vmatpush2.msra.mxu0 0.0
    %4197 = vmatprep.subr.mxu0 0.0
    %4198 = vmatpush2.msra.mxu0 0.0
    %4199 = vmatprep.mubr.f32.mxu0 0.0
    %v4200 = vand.u32 %v3817, 4294901760
    %v4201 = vsub.f32 %v3817, %v4200
    %v4202 = vand.u32 %v4201, 4294901760
    %4203 = vmatmul.mubr.f32.gmra.mxu0 %v4202
    %v4204 = vpop.f32.mrf.mxu0
    %v4205 = vadd.f32 %v4117, %v4204
    %v4206 = vpop.f32.mrf.mxu0
    %4207 = vmatprep.mubr.f32.mxu0 0.0
    %v4208 = vand.u32 %v3820, 4294901760
    %v4209 = vsub.f32 %v3820, %v4208
    %v4210 = vand.u32 %v4209, 4294901760
    %4211 = vmatmul.mubr.f32.gmra.mxu0 %v4210
    %v4212 = vpop.f32.mrf.mxu0
    %v4213 = vadd.f32 %v4124, %v4212
    %v4214 = vpop.f32.mrf.mxu0
    %4215 = vdwg.mxu0
    %4216 = vmatprep.subr.mxu0 0.0
    %4217 = vmatpush1.msra.mxu0 0.0
    %4218 = vmatprep.subr.mxu0 0.0
    %4219 = vmatpush1.msra.mxu0 0.0
    %4220 = vmatprep.subr.mxu0 0.0
    %4221 = vmatpush1.msra.mxu0 0.0
    %4222 = vmatprep.subr.mxu0 0.0
    %4223 = vmatpush1.msra.mxu0 0.0
    %4224 = vmatprep.subr.mxu0 0.0
    %4225 = vmatpush1.msra.mxu0 0.0
    %4226 = vmatprep.subr.mxu0 0.0
    %4227 = vmatpush1.msra.mxu0 0.0
    %4228 = vmatprep.subr.mxu0 0.0
    %4229 = vmatpush1.msra.mxu0 0.0
    %4230 = vmatprep.subr.mxu0 0.0
    %4231 = vmatpush1.msra.mxu0 0.0
    %4232 = vmatprep.subr.mxu0 0.0
    %v4233 = vand.u32 %v3811, 4294901760
    %v4234 = vsub.f32 %v3811, %v4233
    %v4235 = vand.u32 %v4234, 4294901760
    %4236 = vmatpush1.msra.mxu0 %v4235
    %4237 = vmatprep.subr.mxu0 0.0
    %v4238 = vand.u32 %v3810, 4294901760
    %v4239 = vsub.f32 %v3810, %v4238
    %v4240 = vand.u32 %v4239, 4294901760
    %4241 = vmatpush1.msra.mxu0 %v4240
    %4242 = vmatprep.subr.mxu0 0.0
    %v4243 = vand.u32 %v3809, 4294901760
    %v4244 = vsub.f32 %v3809, %v4243
    %v4245 = vand.u32 %v4244, 4294901760
    %4246 = vmatpush1.msra.mxu0 %v4245
    %4247 = vmatprep.subr.mxu0 0.0
    %v4248 = vand.u32 %v3808, 4294901760
    %v4249 = vsub.f32 %v3808, %v4248
    %v4250 = vand.u32 %v4249, 4294901760
    %4251 = vmatpush1.msra.mxu0 %v4250
    %4252 = vmatprep.subr.mxu0 0.0
    %v4253 = vand.u32 %v3807, 4294901760
    %v4254 = vsub.f32 %v3807, %v4253
    %v4255 = vand.u32 %v4254, 4294901760
    %4256 = vmatpush1.msra.mxu0 %v4255
    %4257 = vmatprep.subr.mxu0 0.0
    %v4258 = vand.u32 %v3806, 4294901760
    %v4259 = vsub.f32 %v3806, %v4258
    %v4260 = vand.u32 %v4259, 4294901760
    %4261 = vmatpush1.msra.mxu0 %v4260
    %4262 = vmatprep.subr.mxu0 0.0
    %v4263 = vand.u32 %v3805, 4294901760
    %v4264 = vsub.f32 %v3805, %v4263
    %v4265 = vand.u32 %v4264, 4294901760
    %4266 = vmatpush1.msra.mxu0 %v4265
    %4267 = vmatprep.subr.mxu0 0.0
    %v4268 = vand.u32 %v3804, 4294901760
    %v4269 = vsub.f32 %v3804, %v4268
    %v4270 = vand.u32 %v4269, 4294901760
    %4271 = vmatpush1.msra.mxu0 %v4270
    %4272 = vmatprep.subr.mxu0 0.0
    %4273 = vmatpush2.msra.mxu0 0.0
    %4274 = vmatprep.subr.mxu0 0.0
    %4275 = vmatpush2.msra.mxu0 0.0
    %4276 = vmatprep.subr.mxu0 0.0
    %4277 = vmatpush2.msra.mxu0 0.0
    %4278 = vmatprep.subr.mxu0 0.0
    %4279 = vmatpush2.msra.mxu0 0.0
    %4280 = vmatprep.subr.mxu0 0.0
    %4281 = vmatpush2.msra.mxu0 0.0
    %4282 = vmatprep.subr.mxu0 0.0
    %4283 = vmatpush2.msra.mxu0 0.0
    %4284 = vmatprep.subr.mxu0 0.0
    %4285 = vmatpush2.msra.mxu0 0.0
    %4286 = vmatprep.subr.mxu0 0.0
    %4287 = vmatpush2.msra.mxu0 0.0
    %4288 = vmatprep.subr.mxu0 0.0
    %4289 = vmatpush2.msra.mxu0 0.0
    %4290 = vmatprep.subr.mxu0 0.0
    %4291 = vmatpush2.msra.mxu0 0.0
    %4292 = vmatprep.subr.mxu0 0.0
    %4293 = vmatpush2.msra.mxu0 0.0
    %4294 = vmatprep.subr.mxu0 0.0
    %4295 = vmatpush2.msra.mxu0 0.0
    %4296 = vmatprep.subr.mxu0 0.0
    %4297 = vmatpush2.msra.mxu0 0.0
    %4298 = vmatprep.subr.mxu0 0.0
    %4299 = vmatpush2.msra.mxu0 0.0
    %4300 = vmatprep.subr.mxu0 0.0
    %4301 = vmatpush2.msra.mxu0 0.0
    %4302 = vmatprep.subr.mxu0 0.0
    %4303 = vmatpush2.msra.mxu0 0.0
    %4304 = vmatprep.mubr.f32.mxu0 0.0
    %v4305 = vand.u32 %v3817, 4294901760
    %4306 = vmatmul.mubr.f32.gmra.mxu0 %v4305
    %v4307 = vpop.f32.mrf.mxu0
    %v4308 = vadd.f32 %v4205, %v4307
    %v4309 = vpop.f32.mrf.mxu0
    %4310 = vmatprep.mubr.f32.mxu0 0.0
    %v4311 = vand.u32 %v3820, 4294901760
    %4312 = vmatmul.mubr.f32.gmra.mxu0 %v4311
    %v4313 = vpop.f32.mrf.mxu0
    %v4314 = vadd.f32 %v4213, %v4313
    %v4315 = vpop.f32.mrf.mxu0
    %4316 = vdwg.mxu0
    %4317 = vmatprep.subr.mxu0 0.0
    %4318 = vmatpush1.msra.mxu0 0.0
    %4319 = vmatprep.subr.mxu0 0.0
    %4320 = vmatpush1.msra.mxu0 0.0
    %4321 = vmatprep.subr.mxu0 0.0
    %4322 = vmatpush1.msra.mxu0 0.0
    %4323 = vmatprep.subr.mxu0 0.0
    %4324 = vmatpush1.msra.mxu0 0.0
    %4325 = vmatprep.subr.mxu0 0.0
    %4326 = vmatpush1.msra.mxu0 0.0
    %4327 = vmatprep.subr.mxu0 0.0
    %4328 = vmatpush1.msra.mxu0 0.0
    %4329 = vmatprep.subr.mxu0 0.0
    %4330 = vmatpush1.msra.mxu0 0.0
    %4331 = vmatprep.subr.mxu0 0.0
    %4332 = vmatpush1.msra.mxu0 0.0
    %4333 = vmatprep.subr.mxu0 0.0
    %v4334 = vand.u32 %v3811, 4294901760
    %4335 = vmatpush1.msra.mxu0 %v4334
    %4336 = vmatprep.subr.mxu0 0.0
    %v4337 = vand.u32 %v3810, 4294901760
    %4338 = vmatpush1.msra.mxu0 %v4337
    %4339 = vmatprep.subr.mxu0 0.0
    %v4340 = vand.u32 %v3809, 4294901760
    %4341 = vmatpush1.msra.mxu0 %v4340
    %4342 = vmatprep.subr.mxu0 0.0
    %v4343 = vand.u32 %v3808, 4294901760
    %4344 = vmatpush1.msra.mxu0 %v4343
    %4345 = vmatprep.subr.mxu0 0.0
    %v4346 = vand.u32 %v3807, 4294901760
    %4347 = vmatpush1.msra.mxu0 %v4346
    %4348 = vmatprep.subr.mxu0 0.0
    %v4349 = vand.u32 %v3806, 4294901760
    %4350 = vmatpush1.msra.mxu0 %v4349
    %4351 = vmatprep.subr.mxu0 0.0
    %v4352 = vand.u32 %v3805, 4294901760
    %4353 = vmatpush1.msra.mxu0 %v4352
    %4354 = vmatprep.subr.mxu0 0.0
    %v4355 = vand.u32 %v3804, 4294901760
    %4356 = vmatpush1.msra.mxu0 %v4355
    %4357 = vmatprep.subr.mxu0 0.0
    %4358 = vmatpush2.msra.mxu0 0.0
    %4359 = vmatprep.subr.mxu0 0.0
    %4360 = vmatpush2.msra.mxu0 0.0
    %4361 = vmatprep.subr.mxu0 0.0
    %4362 = vmatpush2.msra.mxu0 0.0
    %4363 = vmatprep.subr.mxu0 0.0
    %4364 = vmatpush2.msra.mxu0 0.0
    %4365 = vmatprep.subr.mxu0 0.0
    %4366 = vmatpush2.msra.mxu0 0.0
    %4367 = vmatprep.subr.mxu0 0.0
    %4368 = vmatpush2.msra.mxu0 0.0
    %4369 = vmatprep.subr.mxu0 0.0
    %4370 = vmatpush2.msra.mxu0 0.0
    %4371 = vmatprep.subr.mxu0 0.0
    %4372 = vmatpush2.msra.mxu0 0.0
    %4373 = vmatprep.subr.mxu0 0.0
    %4374 = vmatpush2.msra.mxu0 0.0
    %4375 = vmatprep.subr.mxu0 0.0
    %4376 = vmatpush2.msra.mxu0 0.0
    %4377 = vmatprep.subr.mxu0 0.0
    %4378 = vmatpush2.msra.mxu0 0.0
    %4379 = vmatprep.subr.mxu0 0.0
    %4380 = vmatpush2.msra.mxu0 0.0
    %4381 = vmatprep.subr.mxu0 0.0
    %4382 = vmatpush2.msra.mxu0 0.0
    %4383 = vmatprep.subr.mxu0 0.0
    %4384 = vmatpush2.msra.mxu0 0.0
    %4385 = vmatprep.subr.mxu0 0.0
    %4386 = vmatpush2.msra.mxu0 0.0
    %4387 = vmatprep.subr.mxu0 0.0
    %4388 = vmatpush2.msra.mxu0 0.0
    %4389 = vmatprep.mubr.f32.mxu0 0.0
    %v4390 = vand.u32 %v3817, 4294901760
    %4391 = vmatmul.mubr.f32.gmra.mxu0 %v4390
    %v4392 = vpop.f32.mrf.mxu0
    %v4393 = vadd.f32 %v4308, %v4392
    %v4394 = vpop.f32.mrf.mxu0
    %4395 = vmatprep.mubr.f32.mxu0 0.0
    %v4396 = vand.u32 %v3820, 4294901760
    %4397 = vmatmul.mubr.f32.gmra.mxu0 %v4396
    %v4398 = vpop.f32.mrf.mxu0
    %v4399 = vadd.f32 %v4314, %v4398
    %v4400 = vpop.f32.mrf.mxu0
    %4401 = vdwg.mxu0
    %v4402 = vadd.f32 %v4393, %v30
    %v4403 = vadd.f32 %v4399, %v31
    %4404 = vst.msk [vmem:[#allocation2] sm:$0xff] %vm38, %v4402
    %4405 = vst.msk [vmem:[#allocation2 + $0x8] sm:$0xff] %vm38, %v4403
    // Predicated region
    $region34: #{target_mamba_block.1} parent=1 // pred_check
      _
    $region35: #{target_mamba_block.1} parent=1 // pred_check_branch
      %4407 = sbr.rel (0) target = $region37
    $region36: #{target_mamba_block.1} parent=1 // pred_region
      %s4409 = ssub.s32 256, 256
      %4410 = vsyncadd [#allocation3], %s4409
      %s4411 = sshll.u32 [#allocation2], 4
      %s4412 = int_to_ptr.vmem [resolvable:$true] %s4411
      %4417 = dma.vmem_to_hbm [thread:$0]  %s4412, 256, %s8, [#allocation3], 128, 128, 8
    $region37: #{target_mamba_block.1} parent=1 // pred_fallthru
      _
    // Predicated region
    $region38: #{target_mamba_block.1} parent=1 // pred_check
      _
    $region39: #{target_mamba_block.1} parent=1 // pred_check_branch
      %4419 = sbr.rel (0) target = $region41
    $region40: #{target_mamba_block.1} parent=1 // pred_region
      %4420 = dma.done [#allocation3], 256
    $region41: #{target_mamba_block.1} parent=1 // pred_fallthru
      _
    %4421 = vsyncpa [#allocation3], 1

</llo_original>
